<compile_context>
chip_gen: v7x
topology: tpu7x:2x2x1
jax: 0.10.0
libtpu: 0.0.40
codegen_flags: <defaults>
</compile_context>

<pallas_src>
import functools

import jax
import jax.numpy as jnp
from jax.experimental import pallas as pl
from jax.experimental.pallas import tpu as pltpu

EPS = 1e-5


# ----------------------------- Pallas kernels --------------------------------
def _conv1_shortcut_kernel(patch_ref, wc_ref, y1_ref, st_ref):
    """Per batch element: fused conv1(3x3) + shortcut conv(1x1) as ONE matmul.

    patch_ref: (1, H*W, 9*Cin) bf16  im2col of the zero-padded input
    wc_ref   : (9*Cin, 2*F)    bf16  [conv1 weights | shortcut embedded at centre tap]
    y1_ref   : (1, H*W, F)     f32   conv1 output (pre-norm)
    st_ref   : (1, 2, 2*F)     f32   per-image [sum ; sum of squares] of [y1 | s]
    """
    F = y1_ref.shape[-1]
    patch = patch_ref[0]                                    # (M, 9*Cin) bf16
    yb = jnp.dot(patch, wc_ref[...],
                 preferred_element_type=jnp.float32)        # (M, 2F) f32, lane dense
    y1_ref[0] = yb[:, :F]
    # Fused BN statistics (sum + sum-of-squares) for BOTH conv1 and shortcut;
    # the shortcut value itself is never stored to HBM (recomputed in pass 3).
    st_ref[0] = jnp.concatenate(
        [jnp.sum(yb, axis=0, keepdims=True),
         jnp.sum(yb * yb, axis=0, keepdims=True)], axis=0)  # (2, 2F)


def _bn_relu_conv2_kernel(y1_ref, w2_ref, sc1_ref, sh1_ref, y2_ref, st_ref, *, H, W):
    """Per batch element: h1 = relu(y1*scale1 + shift1); y2 = conv2_3x3(h1).

    y1_ref : (1, H*W, F) f32
    w2_ref : (9*F, F)    bf16
    sc1/sh1: (1, F)      f32   folded BN1 scale / shift
    y2_ref : (1, H*W, F) f32
    st_ref : (1, 2, F)   f32   per-image [sum ; sum of squares] of y2
    """
    F = y1_ref.shape[-1]
    # BN1 (folded scale/shift) + ReLU, in f32.
    h1 = jnp.maximum(y1_ref[0] * sc1_ref[...] + sh1_ref[...], 0.0)   # (H*W, F)
    h1 = h1.reshape(H, W, F)
    # Zero-pad spatially (pad=1) as a value — no padded scratch, no double write.
    zc = jnp.zeros((H, 1, F), h1.dtype)
    h1p = jnp.concatenate([zc, h1, zc], axis=1)                      # (H, W+2, F)
    zr = jnp.zeros((1, W + 2, F), h1.dtype)
    h1p = jnp.concatenate([zr, h1p, zr], axis=0)                     # (H+2, W+2, F)
    # im2col: 9 shifted views concatenated on the channel (lane) axis -> K = 9*F.
    cols = [h1p[dy:dy + H, dx:dx + W, :] for dy in range(3) for dx in range(3)]
    patch = jnp.concatenate(cols, axis=-1).reshape(H * W, 9 * F)
    y2 = jnp.dot(patch.astype(jnp.bfloat16), w2_ref[...],
                 preferred_element_type=jnp.float32)                 # (H*W, F) f32
    y2_ref[0] = y2
    st_ref[0] = jnp.concatenate(
        [jnp.sum(y2, axis=0, keepdims=True),
         jnp.sum(y2 * y2, axis=0, keepdims=True)], axis=0)           # (2, F)


def _bn_add_kernel(y2_ref, patch_ref, ws_ref, sc2_ref, scs_ref, sh_ref, out_ref):
    """Per batch element: out = BN2(y2) + BN_s(shortcut(x)).

    The shortcut conv is recomputed here from the small bf16 im2col patches
    (its statistics were produced by pass 1), which avoids storing the
    (H*W, F) f32 shortcut activation to HBM at all.

    y2_ref   : (1, H*W, F)     f32
    patch_ref: (1, H*W, 9*Cin) bf16
    ws_ref   : (9*Cin, F)      bf16  (1x1 shortcut weight embedded at centre tap)
    sc2/scs  : (1, F)          f32   folded BN2 / BN_s scales
    sh_ref   : (1, F)          f32   folded (shift2 + shift_s)
    """
    s = jnp.dot(patch_ref[0], ws_ref[...],
                preferred_element_type=jnp.float32)                  # (H*W, F) f32
    out = y2_ref[0] * sc2_ref[...] + s * scs_ref[...] + sh_ref[...]
    out_ref[0] = out.astype(out_ref.dtype)


# ------------------------------ host wrappers ---------------------------------
def _fold_bn(stats, count, gamma, beta):
    """stats: (2, C) = [sum ; sum of squares] over `count` elements -> (scale, shift)."""
    mean = stats[0] / count
    var = stats[1] / count - mean * mean            # biased variance (BN training mode)
    scale = gamma * jax.lax.rsqrt(var + EPS)
    shift = beta - mean * scale
    return scale, shift


def pack_params(w1, w2, ws, g1, b1, g2, b2, gs, bs):
    """One-time repack of PyTorch OIHW weights into matmul layout (outside the
    per-call path)."""
    Fch, Cin = w1.shape[0], w1.shape[1]
    # im2col weight layout: row index = (dy*3 + dx)*C + c.
    w1k = jnp.transpose(w1, (2, 3, 1, 0)).reshape(9 * Cin, Fch)      # (9*Cin, F)
    w2k = jnp.transpose(w2, (2, 3, 1, 0)).reshape(9 * Fch, Fch)      # (9*F,   F)
    wsk = jnp.transpose(ws[:, :, 0, 0], (1, 0))                      # (Cin,   F)
    # Embed the 1x1 shortcut at the centre tap and fuse with conv1: one matmul
    # with a 2F = 128 wide (lane-dense) output.
    ws_embed = jnp.zeros((9 * Cin, Fch), w1k.dtype).at[4 * Cin:5 * Cin, :].set(wsk)
    wc = jnp.concatenate([w1k, ws_embed], axis=1)                    # (9*Cin, 2F)
    return {
        "wc": wc.astype(jnp.bfloat16),
        "w2k": w2k.astype(jnp.bfloat16),
        "ws_e": ws_embed.astype(jnp.bfloat16),
        "g1": g1, "b1": b1, "g2": g2, "b2": b2, "gs": gs, "bs": bs,
    }


@jax.jit
def residual_block(x_nchw, params):
    """x_nchw: (N, Cin, H, W) float32. Returns (N, F, H, W) float32."""
    N, Cin, H, W = x_nchw.shape
    Fch = params["w2k"].shape[-1]
    M = H * W

    # --- layout prep (NCHW -> NHWC, pad, im2col for conv1), outside the kernels.
    # TODO(synk): in a full model keep activations NHWC / pre-im2col'ed end-to-end
    #             to avoid these extra XLA passes per block.
    x = jnp.transpose(x_nchw, (0, 2, 3, 1))
    xpad = jnp.pad(x, ((0, 0), (1, 1), (1, 1), (0, 0)))
    cols = [xpad[:, dy:dy + H, dx:dx + W, :] for dy in range(3) for dx in range(3)]
    patches = jnp.concatenate(cols, axis=-1).reshape(N, M, 9 * Cin)
    patches = patches.astype(jnp.bfloat16)                           # MXU operand

    cparams = pltpu.CompilerParams(
        dimension_semantics=("parallel",),        # pipelined; both TCs on v7x
        vmem_limit_bytes=32 * 1024 * 1024)        # per-step residency << budget

    # ---- pass 1: conv1 + shortcut conv (single fused matmul) + their BN stats.
    y1, st1s = pl.pallas_call(
        _conv1_shortcut_kernel,
        grid=(N,),
        in_specs=[
            pl.BlockSpec((1, M, 9 * Cin), lambda n: (n, 0, 0)),
            pl.BlockSpec((9 * Cin, 2 * Fch), lambda n: (0, 0)),
        ],
        out_specs=[
            pl.BlockSpec((1, M, Fch), lambda n: (n, 0, 0)),
            pl.BlockSpec((1, 2, 2 * Fch), lambda n: (n, 0, 0)),
        ],
        out_shape=[
            jax.ShapeDtypeStruct((N, M, Fch), jnp.float32),
            jax.ShapeDtypeStruct((N, 2, 2 * Fch), jnp.float32),
        ],
        compiler_params=cparams,
    )(patches, params["wc"])

    st = jnp.sum(st1s, axis=0)                                       # (2, 2F)
    scale1, shift1 = _fold_bn(st[:, :Fch], N * M, params["g1"], params["b1"])
    scales, shifts = _fold_bn(st[:, Fch:], N * M, params["gs"], params["bs"])

    # ---- pass 2: BN1 + ReLU + conv2 (im2col matmul, K = 9*F) + BN2 stats.
    y2, st2s = pl.pallas_call(
        functools.partial(_bn_relu_conv2_kernel, H=H, W=W),
        grid=(N,),
        in_specs=[
            pl.BlockSpec((1, M, Fch), lambda n: (n, 0, 0)),
            pl.BlockSpec((9 * Fch, Fch), lambda n: (0, 0)),
            pl.BlockSpec((1, Fch), lambda n: (0, 0)),
            pl.BlockSpec((1, Fch), lambda n: (0, 0)),
        ],
        out_specs=[
            pl.BlockSpec((1, M, Fch), lambda n: (n, 0, 0)),
            pl.BlockSpec((1, 2, Fch), lambda n: (n, 0, 0)),
        ],
        out_shape=[
            jax.ShapeDtypeStruct((N, M, Fch), jnp.float32),
            jax.ShapeDtypeStruct((N, 2, Fch), jnp.float32),
        ],
        compiler_params=cparams,
    )(y1, params["w2k"], scale1.reshape(1, Fch), shift1.reshape(1, Fch))

    st2 = jnp.sum(st2s, axis=0)                                      # (2, F)
    scale2, shift2 = _fold_bn(st2, N * M, params["g2"], params["b2"])
    shift_sum = shift2 + shifts                                      # folded shifts

    # ---- pass 3: out = BN2(y2) + BN_s(shortcut(x)), shortcut recomputed from
    #      the small bf16 patches (no HBM round trip for the shortcut value).
    out = pl.pallas_call(
        _bn_add_kernel,
        grid=(N,),
        in_specs=[
            pl.BlockSpec((1, M, Fch), lambda n: (n, 0, 0)),
            pl.BlockSpec((1, M, 9 * Cin), lambda n: (n, 0, 0)),
            pl.BlockSpec((9 * Cin, Fch), lambda n: (0, 0)),
            pl.BlockSpec((1, Fch), lambda n: (0, 0)),
            pl.BlockSpec((1, Fch), lambda n: (0, 0)),
            pl.BlockSpec((1, Fch), lambda n: (0, 0)),
        ],
        out_specs=pl.BlockSpec((1, M, Fch), lambda n: (n, 0, 0)),
        out_shape=jax.ShapeDtypeStruct((N, M, Fch), x_nchw.dtype),
        compiler_params=cparams,
    )(y2, patches, params["ws_e"], scale2.reshape(1, Fch),
      scales.reshape(1, Fch), shift_sum.reshape(1, Fch))

    return jnp.transpose(out.reshape(N, H, W, Fch), (0, 3, 1, 2))    # back to NCHW


# ------------------------------ pure-JAX reference ----------------------------
def _bn_ref(x, gamma, beta):
    mean = jnp.mean(x, axis=(0, 2, 3), keepdims=True)
    var = jnp.mean((x - mean) ** 2, axis=(0, 2, 3), keepdims=True)
    return ((x - mean) * jax.lax.rsqrt(var + EPS) * gamma.reshape(1, -1, 1, 1)
            + beta.reshape(1, -1, 1, 1))


def residual_block_ref(x, p, conv_dtype=jnp.bfloat16):
    """Reference. conv_dtype=bf16 matches the kernel's MXU numerics
    (bf16 operands, f32 accumulation); conv_dtype=f32 is the pure-f32 module."""
    def conv(x_, w, pad):
        return jax.lax.conv_general_dilated(
            x_.astype(conv_dtype), w.astype(conv_dtype), (1, 1),
            ((pad, pad), (pad, pad)),
            dimension_numbers=("NCHW", "OIHW", "NCHW"),
            preferred_element_type=jnp.float32)
    h = jnp.maximum(_bn_ref(conv(x, p["w1"], 1), p["g1"], p["b1"]), 0.0)
    h = _bn_ref(conv(h, p["w2"], 1), p["g2"], p["b2"])
    s = _bn_ref(conv(x, p["ws"], 0), p["gs"], p["bs"])
    return h + s


# ------------------------------------------------------------------------------
if __name__ == "__main__":
    key = jax.random.PRNGKey(0)
    N, Cin, H, W = 2, 4, 16, 16
    Fch = 64

    ks = jax.random.split(key, 10)
    x = jax.random.normal(ks[0], (N, Cin, H, W), jnp.float32)

    # Deterministic synthetic parameters (PyTorch OIHW conv layout).
    w1 = jax.random.normal(ks[1], (Fch, Cin, 3, 3), jnp.float32) * (2.0 / (9 * Cin)) ** 0.5
    w2 = jax.random.normal(ks[2], (Fch, Fch, 3, 3), jnp.float32) * (2.0 / (9 * Fch)) ** 0.5
    ws = jax.random.normal(ks[3], (Fch, Cin, 1, 1), jnp.float32) * (2.0 / Cin) ** 0.5
    g1 = 1.0 + 0.1 * jax.random.normal(ks[4], (Fch,), jnp.float32)
    b1 = 0.1 * jax.random.normal(ks[5], (Fch,), jnp.float32)
    g2 = 1.0 + 0.1 * jax.random.normal(ks[6], (Fch,), jnp.float32)
    b2 = 0.1 * jax.random.normal(ks[7], (Fch,), jnp.float32)
    gs = 1.0 + 0.1 * jax.random.normal(ks[8], (Fch,), jnp.float32)
    bs = 0.1 * jax.random.normal(ks[9], (Fch,), jnp.float32)

    kparams = pack_params(w1, w2, ws, g1, b1, g2, b2, gs, bs)
    refparams = {"w1": w1, "w2": w2, "ws": ws,
                 "g1": g1, "b1": b1, "g2": g2, "b2": b2, "gs": gs, "bs": bs}

    out = jax.block_until_ready(residual_block(x, kparams))
    ref_bf16 = jax.block_until_ready(residual_block_ref(x, refparams))
    ref_f32 = jax.block_until_ready(
        residual_block_ref(x, refparams, conv_dtype=jnp.float32))

    assert out.shape == (N, Fch, H, W), out.shape
    # Tight check vs a reference using the same bf16-operand / f32-accumulate numerics.
    err = float(jnp.max(jnp.abs(out - ref_bf16)))
    assert jnp.allclose(out, ref_bf16, atol=5e-3, rtol=5e-3), err
    # Loose sanity check vs the pure-f32 module (bf16 MXU operands cost ~1e-2 abs).
    err32 = float(jnp.max(jnp.abs(out - ref_f32)))
    assert jnp.allclose(out, ref_f32, atol=1e-1, rtol=1e-1), err32
    print("KERNEL_OK")
</pallas_src>

<mosaic_0001>
module attributes {stable_mosaic.version = 11 : i64} {
  func.func @_conv1_shortcut_kernel(%arg0: i32, %arg1: memref<1x256x36xbf16, #tpu.memory_space<vmem>>, %arg2: memref<36x128xbf16, #tpu.memory_space<vmem>>, %arg3: memref<1x256x64xf32, #tpu.memory_space<vmem>>, %arg4: memref<1x2x128xf32, #tpu.memory_space<vmem>>) attributes {dimension_semantics = [#tpu.dimension_semantics<parallel>], iteration_bounds = array<i64: 2>, scalar_prefetch = 0 : i64, scratch_operands = 0 : i64, tpu.core_type = #tpu.core_type<tc>, window_params = [{transform_indices = @transform_0, window_bounds = array<i64: 1, 256, 36>}, {pipeline_mode = #tpu.pipeline_mode<synchronous>, transform_indices = @transform_1, window_bounds = array<i64: 36, 128>}, {transform_indices = @transform_2, window_bounds = array<i64: 1, 256, 64>}, {transform_indices = @transform_3, window_bounds = array<i64: 1, 2, 128>}]} {
    %c0 = arith.constant 0 : index
    %c0_0 = arith.constant 0 : index
    %c0_1 = arith.constant 0 : index
    %0 = vector.load %arg1[%c0, %c0_0, %c0_1] : memref<1x256x36xbf16, #tpu.memory_space<vmem>>, vector<1x256x36xbf16>
    %1 = vector.shape_cast %0 : vector<1x256x36xbf16> to vector<256x36xbf16>
    %c0_2 = arith.constant 0 : index
    %c0_3 = arith.constant 0 : index
    %2 = vector.load %arg2[%c0_2, %c0_3] : memref<36x128xbf16, #tpu.memory_space<vmem>>, vector<36x128xbf16>
    %cst = arith.constant dense<0.000000e+00> : vector<256x128xf32>
    %3 = tpu.matmul %1, %2, %cst {dimension_numbers = #tpu.dot_dimension_numbers<[1], [0], [0], [1], [0, 0, 1, 1], [], []>} : vector<256x36xbf16>, vector<36x128xbf16>, vector<256x128xf32> -> vector<256x128xf32>
    %4 = vector.extract_strided_slice %3 {offsets = [0, 0], sizes = [256, 64], strides = [1, 1]} : vector<256x128xf32> to vector<256x64xf32>
    %c0_4 = arith.constant 0 : index
    %c0_5 = arith.constant 0 : index
    %c0_6 = arith.constant 0 : index
    %5 = vector.load %arg3[%c0_4, %c0_5, %c0_6] : memref<1x256x64xf32, #tpu.memory_space<vmem>>, vector<1x256x64xf32>
    %6 = vector.shape_cast %5 : vector<1x256x64xf32> to vector<256x64xf32>
    %7 = vector.shape_cast %4 : vector<256x64xf32> to vector<1x256x64xf32>
    tpu.vector_store %arg3[%c0_4, %c0_5, %c0_6], %7 {strides = array<i32>} : memref<1x256x64xf32, #tpu.memory_space<vmem>>, vector<1x256x64xf32>,
    %cst_7 = arith.constant dense<0.000000e+00> : vector<128xf32>
    %8 = vector.multi_reduction <add>, %3, %cst_7 [0] : vector<256x128xf32> to vector<128xf32>
    %9 = vector.shape_cast %8 : vector<128xf32> to vector<1x128xf32>
    %10 = arith.mulf %3, %3 : vector<256x128xf32>
    %cst_8 = arith.constant dense<0.000000e+00> : vector<128xf32>
    %11 = vector.multi_reduction <add>, %10, %cst_8 [0] : vector<256x128xf32> to vector<128xf32>
    %12 = vector.shape_cast %11 : vector<128xf32> to vector<1x128xf32>
    %13 = tpu.concatenate %9, %12 in 0 : vector<1x128xf32>, vector<1x128xf32> -> vector<2x128xf32>
    %c0_9 = arith.constant 0 : index
    %c0_10 = arith.constant 0 : index
    %c0_11 = arith.constant 0 : index
    %14 = vector.load %arg4[%c0_9, %c0_10, %c0_11] : memref<1x2x128xf32, #tpu.memory_space<vmem>>, vector<1x2x128xf32>
    %15 = vector.shape_cast %14 : vector<1x2x128xf32> to vector<2x128xf32>
    %16 = vector.shape_cast %13 : vector<2x128xf32> to vector<1x2x128xf32>
    tpu.vector_store %arg4[%c0_9, %c0_10, %c0_11], %16 {strides = array<i32>} : memref<1x2x128xf32, #tpu.memory_space<vmem>>, vector<1x2x128xf32>,
    return
  }
  func.func @transform_0(%arg0: i32) -> (i32, i32, i32) {
    %c0_i32 = arith.constant 0 : i32
    %c0_i32_0 = arith.constant 0 : i32
    %c0_i32_1 = arith.constant 0 : i32
    return %arg0, %c0_i32, %c0_i32_0 : i32, i32, i32
  }
  func.func @transform_1(%arg0: i32) -> (i32, i32) {
    %c0_i32 = arith.constant 0 : i32
    %c0_i32_0 = arith.constant 0 : i32
    %c0_i32_1 = arith.constant 0 : i32
    return %c0_i32, %c0_i32_0 : i32, i32
  }
  func.func @transform_2(%arg0: i32) -> (i32, i32, i32) {
    %c0_i32 = arith.constant 0 : i32
    %c0_i32_0 = arith.constant 0 : i32
    %c0_i32_1 = arith.constant 0 : i32
    return %arg0, %c0_i32, %c0_i32_0 : i32, i32, i32
  }
  func.func @transform_3(%arg0: i32) -> (i32, i32, i32) {
    %c0_i32 = arith.constant 0 : i32
    %c0_i32_0 = arith.constant 0 : i32
    %c0_i32_1 = arith.constant 0 : i32
    return %arg0, %c0_i32, %c0_i32_0 : i32, i32, i32
  }
}

module attributes {stable_mosaic.version = 11 : i64} {
  func.func @_bn_relu_conv2_kernel(%arg0: i32, %arg1: memref<1x256x64xf32, #tpu.memory_space<vmem>>, %arg2: memref<576x64xbf16, #tpu.memory_space<vmem>>, %arg3: memref<1x64xf32, #tpu.memory_space<vmem>>, %arg4: memref<1x64xf32, #tpu.memory_space<vmem>>, %arg5: memref<1x256x64xf32, #tpu.memory_space<vmem>>, %arg6: memref<1x2x64xf32, #tpu.memory_space<vmem>>) attributes {dimension_semantics = [#tpu.dimension_semantics<parallel>], iteration_bounds = array<i64: 2>, scalar_prefetch = 0 : i64, scratch_operands = 0 : i64, tpu.core_type = #tpu.core_type<tc>, window_params = [{transform_indices = @transform_0, window_bounds = array<i64: 1, 256, 64>}, {pipeline_mode = #tpu.pipeline_mode<synchronous>, transform_indices = @transform_1, window_bounds = array<i64: 576, 64>}, {pipeline_mode = #tpu.pipeline_mode<synchronous>, transform_indices = @transform_2, window_bounds = array<i64: 1, 64>}, {pipeline_mode = #tpu.pipeline_mode<synchronous>, transform_indices = @transform_3, window_bounds = array<i64: 1, 64>}, {transform_indices = @transform_4, window_bounds = array<i64: 1, 256, 64>}, {transform_indices = @transform_5, window_bounds = array<i64: 1, 2, 64>}]} {
    %c0 = arith.constant 0 : index
    %c0_0 = arith.constant 0 : index
    %c0_1 = arith.constant 0 : index
    %0 = vector.load %arg1[%c0, %c0_0, %c0_1] : memref<1x256x64xf32, #tpu.memory_space<vmem>>, vector<1x256x64xf32>
    %1 = vector.shape_cast %0 : vector<1x256x64xf32> to vector<256x64xf32>
    %c0_2 = arith.constant 0 : index
    %c0_3 = arith.constant 0 : index
    %2 = vector.load %arg3[%c0_2, %c0_3] : memref<1x64xf32, #tpu.memory_space<vmem>>, vector<1x64xf32>
    %3 = vector.broadcast %2 : vector<1x64xf32> to vector<256x64xf32>
    %4 = arith.mulf %1, %3 : vector<256x64xf32>
    %c0_4 = arith.constant 0 : index
    %c0_5 = arith.constant 0 : index
    %5 = vector.load %arg4[%c0_4, %c0_5] : memref<1x64xf32, #tpu.memory_space<vmem>>, vector<1x64xf32>
    %6 = vector.broadcast %5 : vector<1x64xf32> to vector<256x64xf32>
    %7 = arith.addf %4, %6 : vector<256x64xf32>
    %cst = arith.constant 0.000000e+00 : f32
    %8 = vector.broadcast %cst : f32 to vector<256x64xf32>
    %9 = arith.maximumf %7, %8 : vector<256x64xf32>
    %10 = vector.shape_cast %9 : vector<256x64xf32> to vector<16x16x64xf32>
    %cst_6 = arith.constant 0.000000e+00 : f32
    %11 = vector.broadcast %cst_6 : f32 to vector<16x1x64xf32>
    %12 = tpu.concatenate %11, %10, %11 in 1 : vector<16x1x64xf32>, vector<16x16x64xf32>, vector<16x1x64xf32> -> vector<16x18x64xf32>
    %cst_7 = arith.constant 0.000000e+00 : f32
    %13 = vector.broadcast %cst_7 : f32 to vector<1x18x64xf32>
    %14 = tpu.concatenate %13, %12, %13 in 0 : vector<1x18x64xf32>, vector<16x18x64xf32>, vector<1x18x64xf32> -> vector<18x18x64xf32>
    %15 = vector.extract_strided_slice %14 {offsets = [0, 0, 0], sizes = [16, 16, 64], strides = [1, 1, 1]} : vector<18x18x64xf32> to vector<16x16x64xf32>
    %16 = vector.extract_strided_slice %14 {offsets = [0, 1, 0], sizes = [16, 16, 64], strides = [1, 1, 1]} : vector<18x18x64xf32> to vector<16x16x64xf32>
    %17 = vector.extract_strided_slice %14 {offsets = [0, 2, 0], sizes = [16, 16, 64], strides = [1, 1, 1]} : vector<18x18x64xf32> to vector<16x16x64xf32>
    %18 = vector.extract_strided_slice %14 {offsets = [1, 0, 0], sizes = [16, 16, 64], strides = [1, 1, 1]} : vector<18x18x64xf32> to vector<16x16x64xf32>
    %19 = vector.extract_strided_slice %14 {offsets = [1, 1, 0], sizes = [16, 16, 64], strides = [1, 1, 1]} : vector<18x18x64xf32> to vector<16x16x64xf32>
    %20 = vector.extract_strided_slice %14 {offsets = [1, 2, 0], sizes = [16, 16, 64], strides = [1, 1, 1]} : vector<18x18x64xf32> to vector<16x16x64xf32>
    %21 = vector.extract_strided_slice %14 {offsets = [2, 0, 0], sizes = [16, 16, 64], strides = [1, 1, 1]} : vector<18x18x64xf32> to vector<16x16x64xf32>
    %22 = vector.extract_strided_slice %14 {offsets = [2, 1, 0], sizes = [16, 16, 64], strides = [1, 1, 1]} : vector<18x18x64xf32> to vector<16x16x64xf32>
    %23 = vector.extract_strided_slice %14 {offsets = [2, 2, 0], sizes = [16, 16, 64], strides = [1, 1, 1]} : vector<18x18x64xf32> to vector<16x16x64xf32>
    %24 = tpu.concatenate %15, %16, %17, %18, %19, %20, %21, %22, %23 in 2 : vector<16x16x64xf32>, vector<16x16x64xf32>, vector<16x16x64xf32>, vector<16x16x64xf32>, vector<16x16x64xf32>, vector<16x16x64xf32>, vector<16x16x64xf32>, vector<16x16x64xf32>, vector<16x16x64xf32> -> vector<16x16x576xf32>
    %25 = vector.shape_cast %24 : vector<16x16x576xf32> to vector<256x576xf32>
    %26 = arith.truncf %25 : vector<256x576xf32> to vector<256x576xbf16>
    %c0_8 = arith.constant 0 : index
    %c0_9 = arith.constant 0 : index
    %27 = vector.load %arg2[%c0_8, %c0_9] : memref<576x64xbf16, #tpu.memory_space<vmem>>, vector<576x64xbf16>
    %cst_10 = arith.constant dense<0.000000e+00> : vector<256x64xf32>
    %28 = tpu.matmul %26, %27, %cst_10 {dimension_numbers = #tpu.dot_dimension_numbers<[1], [0], [0], [1], [0, 0, 1, 1], [], []>} : vector<256x576xbf16>, vector<576x64xbf16>, vector<256x64xf32> -> vector<256x64xf32>
    %c0_11 = arith.constant 0 : index
    %c0_12 = arith.constant 0 : index
    %c0_13 = arith.constant 0 : index
    %29 = vector.load %arg5[%c0_11, %c0_12, %c0_13] : memref<1x256x64xf32, #tpu.memory_space<vmem>>, vector<1x256x64xf32>
    %30 = vector.shape_cast %29 : vector<1x256x64xf32> to vector<256x64xf32>
    %31 = vector.shape_cast %28 : vector<256x64xf32> to vector<1x256x64xf32>
    tpu.vector_store %arg5[%c0_11, %c0_12, %c0_13], %31 {strides = array<i32>} : memref<1x256x64xf32, #tpu.memory_space<vmem>>, vector<1x256x64xf32>,
    %cst_14 = arith.constant dense<0.000000e+00> : vector<64xf32>
    %32 = vector.multi_reduction <add>, %28, %cst_14 [0] : vector<256x64xf32> to vector<64xf32>
    %33 = vector.shape_cast %32 : vector<64xf32> to vector<1x64xf32>
    %34 = arith.mulf %28, %28 : vector<256x64xf32>
    %cst_15 = arith.constant dense<0.000000e+00> : vector<64xf32>
    %35 = vector.multi_reduction <add>, %34, %cst_15 [0] : vector<256x64xf32> to vector<64xf32>
    %36 = vector.shape_cast %35 : vector<64xf32> to vector<1x64xf32>
    %37 = tpu.concatenate %33, %36 in 0 : vector<1x64xf32>, vector<1x64xf32> -> vector<2x64xf32>
    %c0_16 = arith.constant 0 : index
    %c0_17 = arith.constant 0 : index
    %c0_18 = arith.constant 0 : index
    %38 = vector.load %arg6[%c0_16, %c0_17, %c0_18] : memref<1x2x64xf32, #tpu.memory_space<vmem>>, vector<1x2x64xf32>
    %39 = vector.shape_cast %38 : vector<1x2x64xf32> to vector<2x64xf32>
    %40 = vector.shape_cast %37 : vector<2x64xf32> to vector<1x2x64xf32>
    tpu.vector_store %arg6[%c0_16, %c0_17, %c0_18], %40 {strides = array<i32>} : memref<1x2x64xf32, #tpu.memory_space<vmem>>, vector<1x2x64xf32>,
    return
  }
  func.func @transform_0(%arg0: i32) -> (i32, i32, i32) {
    %c0_i32 = arith.constant 0 : i32
    %c0_i32_0 = arith.constant 0 : i32
    %c0_i32_1 = arith.constant 0 : i32
    return %arg0, %c0_i32, %c0_i32_0 : i32, i32, i32
  }
  func.func @transform_1(%arg0: i32) -> (i32, i32) {
    %c0_i32 = arith.constant 0 : i32
    %c0_i32_0 = arith.constant 0 : i32
    %c0_i32_1 = arith.constant 0 : i32
    return %c0_i32, %c0_i32_0 : i32, i32
  }
  func.func @transform_2(%arg0: i32) -> (i32, i32) {
    %c0_i32 = arith.constant 0 : i32
    %c0_i32_0 = arith.constant 0 : i32
    %c0_i32_1 = arith.constant 0 : i32
    return %c0_i32, %c0_i32_0 : i32, i32
  }
  func.func @transform_3(%arg0: i32) -> (i32, i32) {
    %c0_i32 = arith.constant 0 : i32
    %c0_i32_0 = arith.constant 0 : i32
    %c0_i32_1 = arith.constant 0 : i32
    return %c0_i32, %c0_i32_0 : i32, i32
  }
  func.func @transform_4(%arg0: i32) -> (i32, i32, i32) {
    %c0_i32 = arith.constant 0 : i32
    %c0_i32_0 = arith.constant 0 : i32
    %c0_i32_1 = arith.constant 0 : i32
    return %arg0, %c0_i32, %c0_i32_0 : i32, i32, i32
  }
  func.func @transform_5(%arg0: i32) -> (i32, i32, i32) {
    %c0_i32 = arith.constant 0 : i32
    %c0_i32_0 = arith.constant 0 : i32
    %c0_i32_1 = arith.constant 0 : i32
    return %arg0, %c0_i32, %c0_i32_0 : i32, i32, i32
  }
}

module attributes {stable_mosaic.version = 11 : i64} {
  func.func @_bn_add_kernel(%arg0: i32, %arg1: memref<1x256x64xf32, #tpu.memory_space<vmem>>, %arg2: memref<1x256x36xbf16, #tpu.memory_space<vmem>>, %arg3: memref<36x64xbf16, #tpu.memory_space<vmem>>, %arg4: memref<1x64xf32, #tpu.memory_space<vmem>>, %arg5: memref<1x64xf32, #tpu.memory_space<vmem>>, %arg6: memref<1x64xf32, #tpu.memory_space<vmem>>, %arg7: memref<1x256x64xf32, #tpu.memory_space<vmem>>) attributes {dimension_semantics = [#tpu.dimension_semantics<parallel>], iteration_bounds = array<i64: 2>, scalar_prefetch = 0 : i64, scratch_operands = 0 : i64, tpu.core_type = #tpu.core_type<tc>, window_params = [{transform_indices = @transform_0, window_bounds = array<i64: 1, 256, 64>}, {transform_indices = @transform_1, window_bounds = array<i64: 1, 256, 36>}, {pipeline_mode = #tpu.pipeline_mode<synchronous>, transform_indices = @transform_2, window_bounds = array<i64: 36, 64>}, {pipeline_mode = #tpu.pipeline_mode<synchronous>, transform_indices = @transform_3, window_bounds = array<i64: 1, 64>}, {pipeline_mode = #tpu.pipeline_mode<synchronous>, transform_indices = @transform_4, window_bounds = array<i64: 1, 64>}, {pipeline_mode = #tpu.pipeline_mode<synchronous>, transform_indices = @transform_5, window_bounds = array<i64: 1, 64>}, {transform_indices = @transform_6, window_bounds = array<i64: 1, 256, 64>}]} {
    %c0 = arith.constant 0 : index
    %c0_0 = arith.constant 0 : index
    %c0_1 = arith.constant 0 : index
    %0 = vector.load %arg2[%c0, %c0_0, %c0_1] : memref<1x256x36xbf16, #tpu.memory_space<vmem>>, vector<1x256x36xbf16>
    %1 = vector.shape_cast %0 : vector<1x256x36xbf16> to vector<256x36xbf16>
    %c0_2 = arith.constant 0 : index
    %c0_3 = arith.constant 0 : index
    %2 = vector.load %arg3[%c0_2, %c0_3] : memref<36x64xbf16, #tpu.memory_space<vmem>>, vector<36x64xbf16>
    %cst = arith.constant dense<0.000000e+00> : vector<256x64xf32>
    %3 = tpu.matmul %1, %2, %cst {dimension_numbers = #tpu.dot_dimension_numbers<[1], [0], [0], [1], [0, 0, 1, 1], [], []>} : vector<256x36xbf16>, vector<36x64xbf16>, vector<256x64xf32> -> vector<256x64xf32>
    %c0_4 = arith.constant 0 : index
    %c0_5 = arith.constant 0 : index
    %c0_6 = arith.constant 0 : index
    %4 = vector.load %arg1[%c0_4, %c0_5, %c0_6] : memref<1x256x64xf32, #tpu.memory_space<vmem>>, vector<1x256x64xf32>
    %5 = vector.shape_cast %4 : vector<1x256x64xf32> to vector<256x64xf32>
    %c0_7 = arith.constant 0 : index
    %c0_8 = arith.constant 0 : index
    %6 = vector.load %arg4[%c0_7, %c0_8] : memref<1x64xf32, #tpu.memory_space<vmem>>, vector<1x64xf32>
    %7 = vector.broadcast %6 : vector<1x64xf32> to vector<256x64xf32>
    %8 = arith.mulf %5, %7 : vector<256x64xf32>
    %c0_9 = arith.constant 0 : index
    %c0_10 = arith.constant 0 : index
    %9 = vector.load %arg5[%c0_9, %c0_10] : memref<1x64xf32, #tpu.memory_space<vmem>>, vector<1x64xf32>
    %10 = vector.broadcast %9 : vector<1x64xf32> to vector<256x64xf32>
    %11 = arith.mulf %3, %10 : vector<256x64xf32>
    %12 = arith.addf %8, %11 : vector<256x64xf32>
    %c0_11 = arith.constant 0 : index
    %c0_12 = arith.constant 0 : index
    %13 = vector.load %arg6[%c0_11, %c0_12] : memref<1x64xf32, #tpu.memory_space<vmem>>, vector<1x64xf32>
    %14 = vector.broadcast %13 : vector<1x64xf32> to vector<256x64xf32>
    %15 = arith.addf %12, %14 : vector<256x64xf32>
    %c0_13 = arith.constant 0 : index
    %c0_14 = arith.constant 0 : index
    %c0_15 = arith.constant 0 : index
    %16 = vector.load %arg7[%c0_13, %c0_14, %c0_15] : memref<1x256x64xf32, #tpu.memory_space<vmem>>, vector<1x256x64xf32>
    %17 = vector.shape_cast %16 : vector<1x256x64xf32> to vector<256x64xf32>
    %18 = vector.shape_cast %15 : vector<256x64xf32> to vector<1x256x64xf32>
    tpu.vector_store %arg7[%c0_13, %c0_14, %c0_15], %18 {strides = array<i32>} : memref<1x256x64xf32, #tpu.memory_space<vmem>>, vector<1x256x64xf32>,
    return
  }
  func.func @transform_0(%arg0: i32) -> (i32, i32, i32) {
    %c0_i32 = arith.constant 0 : i32
    %c0_i32_0 = arith.constant 0 : i32
    %c0_i32_1 = arith.constant 0 : i32
    return %arg0, %c0_i32, %c0_i32_0 : i32, i32, i32
  }
  func.func @transform_1(%arg0: i32) -> (i32, i32, i32) {
    %c0_i32 = arith.constant 0 : i32
    %c0_i32_0 = arith.constant 0 : i32
    %c0_i32_1 = arith.constant 0 : i32
    return %arg0, %c0_i32, %c0_i32_0 : i32, i32, i32
  }
  func.func @transform_2(%arg0: i32) -> (i32, i32) {
    %c0_i32 = arith.constant 0 : i32
    %c0_i32_0 = arith.constant 0 : i32
    %c0_i32_1 = arith.constant 0 : i32
    return %c0_i32, %c0_i32_0 : i32, i32
  }
  func.func @transform_3(%arg0: i32) -> (i32, i32) {
    %c0_i32 = arith.constant 0 : i32
    %c0_i32_0 = arith.constant 0 : i32
    %c0_i32_1 = arith.constant 0 : i32
    return %c0_i32, %c0_i32_0 : i32, i32
  }
  func.func @transform_4(%arg0: i32) -> (i32, i32) {
    %c0_i32 = arith.constant 0 : i32
    %c0_i32_0 = arith.constant 0 : i32
    %c0_i32_1 = arith.constant 0 : i32
    return %c0_i32, %c0_i32_0 : i32, i32
  }
  func.func @transform_5(%arg0: i32) -> (i32, i32) {
    %c0_i32 = arith.constant 0 : i32
    %c0_i32_0 = arith.constant 0 : i32
    %c0_i32_1 = arith.constant 0 : i32
    return %c0_i32, %c0_i32_0 : i32, i32
  }
  func.func @transform_6(%arg0: i32) -> (i32, i32, i32) {
    %c0_i32 = arith.constant 0 : i32
    %c0_i32_0 = arith.constant 0 : i32
    %c0_i32_1 = arith.constant 0 : i32
    return %arg0, %c0_i32, %c0_i32_0 : i32, i32, i32
  }
}

</mosaic_0001>

<llo_original>
// kernel: residual_block.3
$region0: #{residual_block.3}
  #allocation0 [shape = 'u32[]', space=smem, size = 0x4, offset = 0x4, fixed_abs, tag = 'smem constant byte address 0x4 - core index']
  #allocation1 [shape = 'u32[144,128]{1,0:T(1,128)}', space=vmem, size = 0x12000, scoped, tag = 'internal scratch']
  %s0 = inlined_call_operand.vmem [shape: bf16[2,256,36], index: 0, kind: input, shape index: {}]
  %s1 = inlined_call_operand.vmem [shape: bf16[36,128], index: 1, kind: input, shape index: {}]
  %s2 = inlined_call_operand.vmem [shape: f32[2,256,64], index: 2, kind: output, shape index: {0}]
  %s3 = inlined_call_operand.vmem [shape: f32[2,2,128], index: 3, kind: output, shape index: {1}]
  %4 = xla_tuple %s2, %s3
  %s5 = sld [smem:[#allocation0]]
  $region49: #{residual_block.3} parent=0
    _
  %s7 = ssub.s32 1, %s5
  %s8 = scalar_select 0, %s7, %s5
  loop: start=0, step=1, limit=4
  $region2: #{residual_block.3} parent=0 // loop_pre_header
    _
  $region3: #{residual_block.3} parent=0 // loop_header
    %s10 = sphi 0, %s14
    %p11 = scmp.ge.s32.totalorder %s10, 4
    %s20 = sphi 0, %s22
    %s23 = sphi 0, %s20
    %s24 = sphi 0, %s23
    %s40 = sphi 0, %s24
    %s44 = sphi 0, %s44
    %s46 = sphi 0, %s44
    %s47 = sphi 0, %s46
    %s61 = sphi 0, %s47
    %s67 = sphi 0, %s69
    %s70 = sphi 0, %s67
    %s71 = sphi 0, %s70
    %s87 = sphi 0, %s71
    %s93 = sphi 0, %s95
    %s96 = sphi 0, %s93
    %s97 = sphi 0, %s96
    %s113 = sphi 0, %s97
  $region4: #{residual_block.3} parent=0 // loop_header_branch
    %13 = sbr.rel (%p11) target = $region8
  $region5: #{residual_block.3} parent=0 // loop_body
    %s15 = ssub.s32 %s10, 1
    %s16 = ssub.s32 %s10, 2
    %s17 = sadd.s32 %s10, 1
    %s18 = ssub.s32 %s10, %s17
    %p19 = scmp.eq.s32.totalorder %s18, 0
    %s21 = sadd.s32 %s20, 1
    %s22 = scalar_select %p19, %s20, %s21
    %p25 = pneg %p19
    %p26 = scmp.eq.s32.totalorder %s10, 1
    %p27 = por %p25, %p26
    %p28 = scmp.ne.s32.totalorder %s20, %s23
    %p29 = scmp.eq.s32.totalorder %s10, 0
    %p30 = por %p28, %p29
    %p31 = scmp.ne.s32.totalorder %s20, %s23
    %p32 = scmp.eq.s32.totalorder %s15, 1
    %p33 = por %p31, %p32
    %p34 = scmp.ne.s32.totalorder %s23, %s24
    %p35 = scmp.eq.s32.totalorder %s15, 0
    %p36 = por %p34, %p35
    %p37 = scmp.ne.s32.totalorder %s23, %s24
    %p38 = scmp.eq.s32.totalorder %s16, 1
    %p39 = por %p37, %p38
    %p41 = scmp.ne.s32.totalorder %s24, %s40
    %p42 = scmp.eq.s32.totalorder %s16, 0
    %p43 = por %p41, %p42
    %s45 = sadd.s32 %s44, 1
    %p48 = scmp.eq.s32.totalorder %s10, 1
    %p49 = scmp.ne.s32.totalorder %s44, %s46
    %p50 = scmp.eq.s32.totalorder %s10, 0
    %p51 = por %p49, %p50
    %p52 = scmp.ne.s32.totalorder %s44, %s46
    %p53 = scmp.eq.s32.totalorder %s15, 1
    %p54 = por %p52, %p53
    %p55 = scmp.ne.s32.totalorder %s46, %s47
    %p56 = scmp.eq.s32.totalorder %s15, 0
    %p57 = por %p55, %p56
    %p58 = scmp.ne.s32.totalorder %s46, %s47
    %p59 = scmp.eq.s32.totalorder %s16, 1
    %p60 = por %p58, %p59
    %p62 = scmp.ne.s32.totalorder %s47, %s61
    %p63 = scmp.eq.s32.totalorder %s16, 0
    %p64 = por %p62, %p63
    %s65 = ssub.s32 %s10, %s17
    %p66 = scmp.eq.s32.totalorder %s65, 0
    %s68 = sadd.s32 %s67, 1
    %s69 = scalar_select %p66, %s67, %s68
    %p72 = pneg %p66
    %p73 = scmp.eq.s32.totalorder %s10, 1
    %p74 = por %p72, %p73
    %p75 = scmp.ne.s32.totalorder %s67, %s70
    %p76 = scmp.eq.s32.totalorder %s10, 0
    %p77 = por %p75, %p76
    %p78 = scmp.ne.s32.totalorder %s67, %s70
    %p79 = scmp.eq.s32.totalorder %s15, 1
    %p80 = por %p78, %p79
    %p81 = scmp.ne.s32.totalorder %s70, %s71
    %p82 = scmp.eq.s32.totalorder %s15, 0
    %p83 = por %p81, %p82
    %p84 = scmp.ne.s32.totalorder %s70, %s71
    %p85 = scmp.eq.s32.totalorder %s16, 1
    %p86 = por %p84, %p85
    %p88 = scmp.ne.s32.totalorder %s71, %s87
    %p89 = scmp.eq.s32.totalorder %s16, 0
    %p90 = por %p88, %p89
    %s91 = ssub.s32 %s10, %s17
    %p92 = scmp.eq.s32.totalorder %s91, 0
    %s94 = sadd.s32 %s93, 1
    %s95 = scalar_select %p92, %s93, %s94
    %p98 = pneg %p92
    %p99 = scmp.eq.s32.totalorder %s10, 1
    %p100 = por %p98, %p99
    %p101 = scmp.ne.s32.totalorder %s93, %s96
    %p102 = scmp.eq.s32.totalorder %s10, 0
    %p103 = por %p101, %p102
    %p104 = scmp.ne.s32.totalorder %s93, %s96
    %p105 = scmp.eq.s32.totalorder %s15, 1
    %p106 = por %p104, %p105
    %p107 = scmp.ne.s32.totalorder %s96, %s97
    %p108 = scmp.eq.s32.totalorder %s15, 0
    %p109 = por %p107, %p108
    %p110 = scmp.ne.s32.totalorder %s96, %s97
    %p111 = scmp.eq.s32.totalorder %s16, 1
    %p112 = por %p110, %p111
    %p114 = scmp.ne.s32.totalorder %s97, %s113
    %p115 = scmp.eq.s32.totalorder %s16, 0
    %p116 = por %p114, %p115
    %p117 = scmp.le.s32.totalorder 1, %s10
    %p118 = scmp.lt.s32.totalorder %s10, 3
    %p119 = pnand %p117, %p118
    %p120 = pneg %p119
    // Predicated region
    $region9: #{residual_block.3} parent=5 // pred_check
      _
    $region10: #{residual_block.3} parent=5 // pred_check_branch
      %122 = sbr.rel (%p119) target = $region12
    $region11: #{residual_block.3} parent=5 // pred_region
      %s123 = ssub.s32 %s10, 1
      // Predicated region
      $region13: #{residual_block.3} parent=11 // pred_check
        %p124 = pneg %p57
      $region14: #{residual_block.3} parent=11 // pred_check_branch
        %126 = sbr.rel (%p124) target = $region16
      $region15: #{residual_block.3} parent=11 // pred_region
        _
      $region16: #{residual_block.3} parent=11 // pred_fallthru
        _
    $region12: #{residual_block.3} parent=5 // pred_fallthru
      _
    %p127 = scmp.lt.s32.totalorder %s10, 2
    // Predicated region
    $region17: #{residual_block.3} parent=5 // pred_check
      %p128 = pneg %p127
    $region18: #{residual_block.3} parent=5 // pred_check_branch
      %130 = sbr.rel (%p128) target = $region20
    $region19: #{residual_block.3} parent=5 // pred_region
      // Predicated region
      $region21: #{residual_block.3} parent=19 // pred_check
        %p131 = pneg %p30
      $region22: #{residual_block.3} parent=19 // pred_check_branch
        %133 = sbr.rel (%p131) target = $region24
      $region23: #{residual_block.3} parent=19 // pred_region
        %p134 = scmp.lt.s32.totalorder %s10, 1
        %s135 = scalar_select %p134, %s10, 1
        %s136 = smul.addr %s135, 32
        %s137 = smul.addr %s136, 4
        %s138 = scalar_lea.vmem %s0, %s137
      $region24: #{residual_block.3} parent=19 // pred_fallthru
        _
    $region20: #{residual_block.3} parent=5 // pred_fallthru
      _
    %p139 = scmp.le.s32.totalorder 1, %s10
    %p140 = scmp.lt.s32.totalorder %s10, 3
    %p141 = pnand %p139, %p140
    %p142 = pneg %p141
    // Predicated region
    $region25: #{residual_block.3} parent=5 // pred_check
      _
    $region26: #{residual_block.3} parent=5 // pred_check_branch
      %144 = sbr.rel (%p141) target = $region28
    $region27: #{residual_block.3} parent=5 // pred_region
      %s145 = ssub.s32 %s10, 1
      %p146 = scmp.lt.s32.totalorder %s15, 1
      %s147 = scalar_select %p146, %s15, 1
      %s148 = smul.addr %s147, 32
      %s149 = smul.addr %s148, 4
      %s150 = scalar_lea.vmem %s0, %s149
      %p151 = pneg %p36
      %p152 = pneg %p33
      %p153 = pneg %p57
      %p154 = pneg %p54
      %p155 = pneg %p83
      %p156 = pneg %p80
      %p157 = scmp.lt.s32.totalorder %s15, 1
      %s158 = scalar_select %p157, %s15, 1
      %s159 = smul.addr %s158, 32
      %s160 = smul.addr %s159, 8
      %s161 = scalar_lea.vmem %s2, %s160
      %p162 = pneg %p109
      %p163 = pneg %p106
      %p164 = scmp.lt.s32.totalorder %s15, 1
      %s165 = scalar_select %p164, %s15, 1
      %s166 = smul.addr %s165, 2
      %s167 = scalar_lea.vmem %s3, %s166
      %p168 = scmp.lt.s32.totalorder %s15, 1
      %s169 = scalar_select %p168, %s15, 1
      %s170 = smul.addr %s169, 32
      %s171 = smul.addr %s170, 4
      %s172 = scalar_lea.vmem %s0, %s171
      %p173 = scmp.lt.s32.totalorder %s15, 1
      %s174 = scalar_select %p173, %s15, 1
      %s175 = smul.addr %s174, 32
      %s176 = smul.addr %s175, 8
      %s177 = scalar_lea.vmem %s2, %s176
      %p178 = scmp.lt.s32.totalorder %s15, 1
      %s179 = scalar_select %p178, %s15, 1
      %s180 = smul.addr %s179, 2
      %s181 = scalar_lea.vmem %s3, %s180
      %v183 = vld [vmem:[%s172] sm:$0xf]
      %v184 = vld [vmem:[%s172 + $0x4] sm:$0xf]
      %v185 = vld [vmem:[%s172 + $0x8] sm:$0xf]
      %v186 = vld [vmem:[%s172 + $0xc] sm:$0xf]
      %v187 = vld [vmem:[%s172 + $0x10] sm:$0xf]
      %v188 = vld [vmem:[%s172 + $0x14] sm:$0xf]
      %v189 = vld [vmem:[%s172 + $0x18] sm:$0xf]
      %v190 = vld [vmem:[%s172 + $0x1c] sm:$0xf]
      %v191 = vld [vmem:[%s172 + $0x20] sm:$0xf]
      %v192 = vld [vmem:[%s172 + $0x24] sm:$0xf]
      %v193 = vld [vmem:[%s172 + $0x28] sm:$0xf]
      %v194 = vld [vmem:[%s172 + $0x2c] sm:$0xf]
      %v195 = vld [vmem:[%s172 + $0x30] sm:$0xf]
      %v196 = vld [vmem:[%s172 + $0x34] sm:$0xf]
      %v197 = vld [vmem:[%s172 + $0x38] sm:$0xf]
      %v198 = vld [vmem:[%s172 + $0x3c] sm:$0xf]
      %v199 = vld [vmem:[%s172 + $0x40] sm:$0xf]
      %v200 = vld [vmem:[%s172 + $0x44] sm:$0xf]
      %v201 = vld [vmem:[%s172 + $0x48] sm:$0xf]
      %v202 = vld [vmem:[%s172 + $0x4c] sm:$0xf]
      %v203 = vld [vmem:[%s172 + $0x50] sm:$0xf]
      %v204 = vld [vmem:[%s172 + $0x54] sm:$0xf]
      %v205 = vld [vmem:[%s172 + $0x58] sm:$0xf]
      %v206 = vld [vmem:[%s172 + $0x5c] sm:$0xf]
      %v207 = vld [vmem:[%s172 + $0x60] sm:$0xf]
      %v208 = vld [vmem:[%s172 + $0x64] sm:$0xf]
      %v209 = vld [vmem:[%s172 + $0x68] sm:$0xf]
      %v210 = vld [vmem:[%s172 + $0x6c] sm:$0xf]
      %v211 = vld [vmem:[%s172 + $0x70] sm:$0xf]
      %v212 = vld [vmem:[%s172 + $0x74] sm:$0xf]
      %v213 = vld [vmem:[%s172 + $0x78] sm:$0xf]
      %v214 = vld [vmem:[%s172 + $0x7c] sm:$0xf]
      %v215 = vld [vmem:[%s1] sm:$0xf]
      %v216 = vld [vmem:[%s1 + $0x4] sm:$0xf]
      %v217 = vld [vmem:[%s1 + $0x8] sm:$0xf]
      %v218 = vld [vmem:[%s1 + $0xc] sm:$0xf]
      %v219 = vld [vmem:[%s1 + $0x10] sm:$0x3]
      %v252 = vunpack.c.l.b16 %v183
      %v253 = vunpack.c.l.b16 %v184
      %v254 = vunpack.c.l.b16 %v185
      %v255 = vunpack.c.l.b16 %v186
      %v256 = vunpack.c.l.b16 %v187
      %v257 = vunpack.c.l.b16 %v188
      %v258 = vunpack.c.l.b16 %v189
      %v259 = vunpack.c.l.b16 %v190
      %v260 = vunpack.c.l.b16 %v191
      %v261 = vunpack.c.l.b16 %v192
      %v262 = vunpack.c.l.b16 %v193
      %v263 = vunpack.c.l.b16 %v194
      %v264 = vunpack.c.l.b16 %v195
      %v265 = vunpack.c.l.b16 %v196
      %v266 = vunpack.c.l.b16 %v197
      %v267 = vunpack.c.l.b16 %v198
      %v268 = vunpack.c.l.b16 %v199
      %v269 = vunpack.c.l.b16 %v200
      %v270 = vunpack.c.l.b16 %v201
      %v271 = vunpack.c.l.b16 %v202
      %v272 = vunpack.c.l.b16 %v203
      %v273 = vunpack.c.l.b16 %v204
      %v274 = vunpack.c.l.b16 %v205
      %v275 = vunpack.c.l.b16 %v206
      %v276 = vunpack.c.l.b16 %v207
      %v277 = vunpack.c.l.b16 %v208
      %v278 = vunpack.c.l.b16 %v209
      %v279 = vunpack.c.l.b16 %v210
      %v280 = vunpack.c.l.b16 %v211
      %v281 = vunpack.c.l.b16 %v212
      %v282 = vunpack.c.l.b16 %v213
      %v283 = vunpack.c.l.b16 %v214
      %v284 = vpack.c.b16 %v253, %v252
      %v285 = vpack.c.b16 %v255, %v254
      %v286 = vpack.c.b16 %v257, %v256
      %v287 = vpack.c.b16 %v259, %v258
      %v288 = vpack.c.b16 %v261, %v260
      %v289 = vpack.c.b16 %v263, %v262
      %v290 = vpack.c.b16 %v265, %v264
      %v291 = vpack.c.b16 %v267, %v266
      %v292 = vpack.c.b16 %v269, %v268
      %v293 = vpack.c.b16 %v271, %v270
      %v294 = vpack.c.b16 %v273, %v272
      %v295 = vpack.c.b16 %v275, %v274
      %v296 = vpack.c.b16 %v277, %v276
      %v297 = vpack.c.b16 %v279, %v278
      %v298 = vpack.c.b16 %v281, %v280
      %v299 = vpack.c.b16 %v283, %v282
      %v305 = vunpack.c.l.b16 %v215
      %v306 = vunpack.c.l.b16 %v216
      %v307 = vunpack.c.l.b16 %v217
      %v308 = vunpack.c.l.b16 %v218
      %v309 = vunpack.c.l.b16 %v219
      %v310 = vpack.c.b16 %v306, %v305
      %v311 = vpack.c.b16 %v308, %v307
      %v312 = vpack.c.b16 %v309, %v309
      %vm315 = vcmask 293888
      %v317 = vsel %vm315, %v284, 0
      %v320 = vsel %vm315, %v285, 0
      %v323 = vsel %vm315, %v286, 0
      %v326 = vsel %vm315, %v287, 0
      %v329 = vsel %vm315, %v288, 0
      %v332 = vsel %vm315, %v289, 0
      %v335 = vsel %vm315, %v290, 0
      %v338 = vsel %vm315, %v291, 0
      %v341 = vsel %vm315, %v292, 0
      %v344 = vsel %vm315, %v293, 0
      %v347 = vsel %vm315, %v294, 0
      %v350 = vsel %vm315, %v295, 0
      %v353 = vsel %vm315, %v296, 0
      %v356 = vsel %vm315, %v297, 0
      %v359 = vsel %vm315, %v298, 0
      %v362 = vsel %vm315, %v299, 0
      %vm364 = vcmask 1041408
      %v366 = vsel %vm364, %v312, 0
      %368 = vmatprep.subr.bf16.mxu0 0
      %369 = vmatpush1.bf16.msra.mxu0 %v310
      %370 = vmatprep.subr.bf16.mxu0 0
      %371 = vmatpush1.bf16.msra.mxu0 %v311
      %372 = vmatprep.subr.bf16.mxu0 0
      %373 = vmatpush1.bf16.msra.mxu0 %v366
      %374 = vmatprep.subr.bf16.mxu0 0
      %375 = vmatpush1.bf16.msra.mxu0 0
      %376 = vmatprep.subr.bf16.mxu0 0
      %377 = vmatpush1.bf16.msra.mxu0 0
      %378 = vmatprep.subr.bf16.mxu0 0
      %379 = vmatpush1.bf16.msra.mxu0 0
      %380 = vmatprep.subr.bf16.mxu0 0
      %381 = vmatpush1.bf16.msra.mxu0 0
      %382 = vmatprep.subr.bf16.mxu0 0
      %383 = vmatpush1.bf16.msra.mxu0 0
      %384 = vmatprep.subr.bf16.mxu0 0
      %385 = vmatpush1.bf16.msra.mxu0 0
      %386 = vmatprep.subr.bf16.mxu0 0
      %387 = vmatpush1.bf16.msra.mxu0 0
      %388 = vmatprep.subr.bf16.mxu0 0
      %389 = vmatpush1.bf16.msra.mxu0 0
      %390 = vmatprep.subr.bf16.mxu0 0
      %391 = vmatpush1.bf16.msra.mxu0 0
      %392 = vmatprep.subr.bf16.mxu0 0
      %393 = vmatpush1.bf16.msra.mxu0 0
      %394 = vmatprep.subr.bf16.mxu0 0
      %395 = vmatpush1.bf16.msra.mxu0 0
      %396 = vmatprep.subr.bf16.mxu0 0
      %397 = vmatpush1.bf16.msra.mxu0 0
      %398 = vmatprep.subr.bf16.mxu0 0
      %399 = vmatpush1.bf16.msra.mxu0 0
      %400 = vmatprep.mubr.bf16.mxu0 0
      %401 = vmatmul.mubr.bf16.gmra.mrb[0].mxu0 %v317
      %v402 = vpop.f32.mrb[0].mxu0
      %v403 = vadd.f32 0.0, %v402
      %v404 = vpop.f32.mrb[0].mxu0
      %v405 = vpop.f32.mrb[0].mxu0
      %v406 = vadd.f32 0.0, %v405
      %v407 = vpop.f32.mrb[0].mxu0
      %408 = vmatprep.mubr.bf16.mxu0 0
      %409 = vmatmul.mubr.bf16.gmra.mrb[0].mxu0 %v320
      %v410 = vpop.f32.mrb[0].mxu0
      %v411 = vadd.f32 0.0, %v410
      %v412 = vpop.f32.mrb[0].mxu0
      %v413 = vpop.f32.mrb[0].mxu0
      %v414 = vadd.f32 0.0, %v413
      %v415 = vpop.f32.mrb[0].mxu0
      %416 = vmatprep.mubr.bf16.mxu0 0
      %417 = vmatmul.mubr.bf16.gmra.mrb[0].mxu0 %v323
      %v418 = vpop.f32.mrb[0].mxu0
      %v419 = vadd.f32 0.0, %v418
      %v420 = vpop.f32.mrb[0].mxu0
      %v421 = vpop.f32.mrb[0].mxu0
      %v422 = vadd.f32 0.0, %v421
      %v423 = vpop.f32.mrb[0].mxu0
      %424 = vmatprep.mubr.bf16.mxu0 0
      %425 = vmatmul.mubr.bf16.gmra.mrb[0].mxu0 %v326
      %v426 = vpop.f32.mrb[0].mxu0
      %v427 = vadd.f32 0.0, %v426
      %v428 = vpop.f32.mrb[0].mxu0
      %v429 = vpop.f32.mrb[0].mxu0
      %v430 = vadd.f32 0.0, %v429
      %v431 = vpop.f32.mrb[0].mxu0
      %432 = vmatprep.mubr.bf16.mxu0 0
      %433 = vmatmul.mubr.bf16.gmra.mrb[0].mxu0 %v329
      %v434 = vpop.f32.mrb[0].mxu0
      %v435 = vadd.f32 0.0, %v434
      %v436 = vpop.f32.mrb[0].mxu0
      %v437 = vpop.f32.mrb[0].mxu0
      %v438 = vadd.f32 0.0, %v437
      %v439 = vpop.f32.mrb[0].mxu0
      %440 = vmatprep.mubr.bf16.mxu0 0
      %441 = vmatmul.mubr.bf16.gmra.mrb[0].mxu0 %v332
      %v442 = vpop.f32.mrb[0].mxu0
      %v443 = vadd.f32 0.0, %v442
      %v444 = vpop.f32.mrb[0].mxu0
      %v445 = vpop.f32.mrb[0].mxu0
      %v446 = vadd.f32 0.0, %v445
      %v447 = vpop.f32.mrb[0].mxu0
      %448 = vmatprep.mubr.bf16.mxu0 0
      %449 = vmatmul.mubr.bf16.gmra.mrb[0].mxu0 %v335
      %v450 = vpop.f32.mrb[0].mxu0
      %v451 = vadd.f32 0.0, %v450
      %v452 = vpop.f32.mrb[0].mxu0
      %v453 = vpop.f32.mrb[0].mxu0
      %v454 = vadd.f32 0.0, %v453
      %v455 = vpop.f32.mrb[0].mxu0
      %456 = vmatprep.mubr.bf16.mxu0 0
      %457 = vmatmul.mubr.bf16.gmra.mrb[0].mxu0 %v338
      %v458 = vpop.f32.mrb[0].mxu0
      %v459 = vadd.f32 0.0, %v458
      %v460 = vpop.f32.mrb[0].mxu0
      %v461 = vpop.f32.mrb[0].mxu0
      %v462 = vadd.f32 0.0, %v461
      %v463 = vpop.f32.mrb[0].mxu0
      %464 = vmatprep.mubr.bf16.mxu0 0
      %465 = vmatmul.mubr.bf16.gmra.mrb[0].mxu0 %v341
      %v466 = vpop.f32.mrb[0].mxu0
      %v467 = vadd.f32 0.0, %v466
      %v468 = vpop.f32.mrb[0].mxu0
      %v469 = vpop.f32.mrb[0].mxu0
      %v470 = vadd.f32 0.0, %v469
      %v471 = vpop.f32.mrb[0].mxu0
      %472 = vmatprep.mubr.bf16.mxu0 0
      %473 = vmatmul.mubr.bf16.gmra.mrb[0].mxu0 %v344
      %v474 = vpop.f32.mrb[0].mxu0
      %v475 = vadd.f32 0.0, %v474
      %v476 = vpop.f32.mrb[0].mxu0
      %v477 = vpop.f32.mrb[0].mxu0
      %v478 = vadd.f32 0.0, %v477
      %v479 = vpop.f32.mrb[0].mxu0
      %480 = vmatprep.mubr.bf16.mxu0 0
      %481 = vmatmul.mubr.bf16.gmra.mrb[0].mxu0 %v347
      %v482 = vpop.f32.mrb[0].mxu0
      %v483 = vadd.f32 0.0, %v482
      %v484 = vpop.f32.mrb[0].mxu0
      %v485 = vpop.f32.mrb[0].mxu0
      %v486 = vadd.f32 0.0, %v485
      %v487 = vpop.f32.mrb[0].mxu0
      %488 = vmatprep.mubr.bf16.mxu0 0
      %489 = vmatmul.mubr.bf16.gmra.mrb[0].mxu0 %v350
      %v490 = vpop.f32.mrb[0].mxu0
      %v491 = vadd.f32 0.0, %v490
      %v492 = vpop.f32.mrb[0].mxu0
      %v493 = vpop.f32.mrb[0].mxu0
      %v494 = vadd.f32 0.0, %v493
      %v495 = vpop.f32.mrb[0].mxu0
      %496 = vmatprep.mubr.bf16.mxu0 0
      %497 = vmatmul.mubr.bf16.gmra.mrb[0].mxu0 %v353
      %v498 = vpop.f32.mrb[0].mxu0
      %v499 = vadd.f32 0.0, %v498
      %v500 = vpop.f32.mrb[0].mxu0
      %v501 = vpop.f32.mrb[0].mxu0
      %v502 = vadd.f32 0.0, %v501
      %v503 = vpop.f32.mrb[0].mxu0
      %504 = vmatprep.mubr.bf16.mxu0 0
      %505 = vmatmul.mubr.bf16.gmra.mrb[0].mxu0 %v356
      %v506 = vpop.f32.mrb[0].mxu0
      %v507 = vadd.f32 0.0, %v506
      %v508 = vpop.f32.mrb[0].mxu0
      %v509 = vpop.f32.mrb[0].mxu0
      %v510 = vadd.f32 0.0, %v509
      %v511 = vpop.f32.mrb[0].mxu0
      %512 = vmatprep.mubr.bf16.mxu0 0
      %513 = vmatmul.mubr.bf16.gmra.mrb[0].mxu0 %v359
      %v514 = vpop.f32.mrb[0].mxu0
      %v515 = vadd.f32 0.0, %v514
      %v516 = vpop.f32.mrb[0].mxu0
      %v517 = vpop.f32.mrb[0].mxu0
      %v518 = vadd.f32 0.0, %v517
      %v519 = vpop.f32.mrb[0].mxu0
      %520 = vmatprep.mubr.bf16.mxu0 0
      %521 = vmatmul.mubr.bf16.gmra.mrb[0].mxu0 %v362
      %v522 = vpop.f32.mrb[0].mxu0
      %v523 = vadd.f32 0.0, %v522
      %v524 = vpop.f32.mrb[0].mxu0
      %v525 = vpop.f32.mrb[0].mxu0
      %v526 = vadd.f32 0.0, %v525
      %v527 = vpop.f32.mrb[0].mxu0
      %528 = vdwg.mxu0
      %vm529 = vcmask 523264
      %530 = vst.msk [vmem:[%s177] sm:$0xff] %vm529, %v403
      %531 = vst.msk [vmem:[%s177 + $0x8] sm:$0xff] %vm529, %v406
      %532 = vst.msk [vmem:[%s177 + $0x10] sm:$0xff] %vm529, %v411
      %533 = vst.msk [vmem:[%s177 + $0x18] sm:$0xff] %vm529, %v414
      %534 = vst.msk [vmem:[%s177 + $0x20] sm:$0xff] %vm529, %v419
      %535 = vst.msk [vmem:[%s177 + $0x28] sm:$0xff] %vm529, %v422
      %536 = vst.msk [vmem:[%s177 + $0x30] sm:$0xff] %vm529, %v427
      %537 = vst.msk [vmem:[%s177 + $0x38] sm:$0xff] %vm529, %v430
      %538 = vst.msk [vmem:[%s177 + $0x40] sm:$0xff] %vm529, %v435
      %539 = vst.msk [vmem:[%s177 + $0x48] sm:$0xff] %vm529, %v438
      %540 = vst.msk [vmem:[%s177 + $0x50] sm:$0xff] %vm529, %v443
      %541 = vst.msk [vmem:[%s177 + $0x58] sm:$0xff] %vm529, %v446
      %542 = vst.msk [vmem:[%s177 + $0x60] sm:$0xff] %vm529, %v451
      %543 = vst.msk [vmem:[%s177 + $0x68] sm:$0xff] %vm529, %v454
      %544 = vst.msk [vmem:[%s177 + $0x70] sm:$0xff] %vm529, %v459
      %545 = vst.msk [vmem:[%s177 + $0x78] sm:$0xff] %vm529, %v462
      %546 = vst.msk [vmem:[%s177 + $0x80] sm:$0xff] %vm529, %v467
      %547 = vst.msk [vmem:[%s177 + $0x88] sm:$0xff] %vm529, %v470
      %548 = vst.msk [vmem:[%s177 + $0x90] sm:$0xff] %vm529, %v475
      %549 = vst.msk [vmem:[%s177 + $0x98] sm:$0xff] %vm529, %v478
      %550 = vst.msk [vmem:[%s177 + $0xa0] sm:$0xff] %vm529, %v483
      %551 = vst.msk [vmem:[%s177 + $0xa8] sm:$0xff] %vm529, %v486
      %552 = vst.msk [vmem:[%s177 + $0xb0] sm:$0xff] %vm529, %v491
      %553 = vst.msk [vmem:[%s177 + $0xb8] sm:$0xff] %vm529, %v494
      %554 = vst.msk [vmem:[%s177 + $0xc0] sm:$0xff] %vm529, %v499
      %555 = vst.msk [vmem:[%s177 + $0xc8] sm:$0xff] %vm529, %v502
      %556 = vst.msk [vmem:[%s177 + $0xd0] sm:$0xff] %vm529, %v507
      %557 = vst.msk [vmem:[%s177 + $0xd8] sm:$0xff] %vm529, %v510
      %558 = vst.msk [vmem:[%s177 + $0xe0] sm:$0xff] %vm529, %v515
      %559 = vst.msk [vmem:[%s177 + $0xe8] sm:$0xff] %vm529, %v518
      %560 = vst.msk [vmem:[%s177 + $0xf0] sm:$0xff] %vm529, %v523
      %561 = vst.msk [vmem:[%s177 + $0xf8] sm:$0xff] %vm529, %v526
      %v562 = vadd.f32 %v403, %v406
      %v563 = vadd.f32 %v562, %v411
      %v564 = vadd.f32 %v563, %v414
      %v565 = vadd.f32 %v564, %v419
      %v566 = vadd.f32 %v565, %v422
      %v567 = vadd.f32 %v566, %v427
      %v568 = vadd.f32 %v567, %v430
      %v569 = vadd.f32 %v568, %v435
      %v570 = vadd.f32 %v569, %v438
      %v571 = vadd.f32 %v570, %v443
      %v572 = vadd.f32 %v571, %v446
      %v573 = vadd.f32 %v572, %v451
      %v574 = vadd.f32 %v573, %v454
      %v575 = vadd.f32 %v574, %v459
      %v576 = vadd.f32 %v575, %v462
      %v577 = vadd.f32 %v576, %v467
      %v578 = vadd.f32 %v577, %v470
      %v579 = vadd.f32 %v578, %v475
      %v580 = vadd.f32 %v579, %v478
      %v581 = vadd.f32 %v580, %v483
      %v582 = vadd.f32 %v581, %v486
      %v583 = vadd.f32 %v582, %v491
      %v584 = vadd.f32 %v583, %v494
      %v585 = vadd.f32 %v584, %v499
      %v586 = vadd.f32 %v585, %v502
      %v587 = vadd.f32 %v586, %v507
      %v588 = vadd.f32 %v587, %v510
      %v589 = vadd.f32 %v588, %v515
      %v590 = vadd.f32 %v589, %v518
      %v591 = vadd.f32 %v590, %v523
      %v592 = vadd.f32 %v591, %v526
      %v593 = vrot.slane %v592, 4
      %v594 = vadd.f32 %v592, %v593
      %v595 = vrot.slane %v594, 2
      %v596 = vadd.f32 %v594, %v595
      %v597 = vrot.slane %v596, 1
      %v598 = vadd.f32 %v596, %v597
      %v599 = vmul.f32 %v403, %v403
      %v600 = vmul.f32 %v406, %v406
      %v601 = vmul.f32 %v411, %v411
      %v602 = vmul.f32 %v414, %v414
      %v603 = vmul.f32 %v419, %v419
      %v604 = vmul.f32 %v422, %v422
      %v605 = vmul.f32 %v427, %v427
      %v606 = vmul.f32 %v430, %v430
      %v607 = vmul.f32 %v435, %v435
      %v608 = vmul.f32 %v438, %v438
      %v609 = vmul.f32 %v443, %v443
      %v610 = vmul.f32 %v446, %v446
      %v611 = vmul.f32 %v451, %v451
      %v612 = vmul.f32 %v454, %v454
      %v613 = vmul.f32 %v459, %v459
      %v614 = vmul.f32 %v462, %v462
      %v615 = vmul.f32 %v467, %v467
      %v616 = vmul.f32 %v470, %v470
      %v617 = vmul.f32 %v475, %v475
      %v618 = vmul.f32 %v478, %v478
      %v619 = vmul.f32 %v483, %v483
      %v620 = vmul.f32 %v486, %v486
      %v621 = vmul.f32 %v491, %v491
      %v622 = vmul.f32 %v494, %v494
      %v623 = vmul.f32 %v499, %v499
      %v624 = vmul.f32 %v502, %v502
      %v625 = vmul.f32 %v507, %v507
      %v626 = vmul.f32 %v510, %v510
      %v627 = vmul.f32 %v515, %v515
      %v628 = vmul.f32 %v518, %v518
      %v629 = vmul.f32 %v523, %v523
      %v630 = vmul.f32 %v526, %v526
      %v631 = vadd.f32 %v599, %v600
      %v632 = vadd.f32 %v631, %v601
      %v633 = vadd.f32 %v632, %v602
      %v634 = vadd.f32 %v633, %v603
      %v635 = vadd.f32 %v634, %v604
      %v636 = vadd.f32 %v635, %v605
      %v637 = vadd.f32 %v636, %v606
      %v638 = vadd.f32 %v637, %v607
      %v639 = vadd.f32 %v638, %v608
      %v640 = vadd.f32 %v639, %v609
      %v641 = vadd.f32 %v640, %v610
      %v642 = vadd.f32 %v641, %v611
      %v643 = vadd.f32 %v642, %v612
      %v644 = vadd.f32 %v643, %v613
      %v645 = vadd.f32 %v644, %v614
      %v646 = vadd.f32 %v645, %v615
      %v647 = vadd.f32 %v646, %v616
      %v648 = vadd.f32 %v647, %v617
      %v649 = vadd.f32 %v648, %v618
      %v650 = vadd.f32 %v649, %v619
      %v651 = vadd.f32 %v650, %v620
      %v652 = vadd.f32 %v651, %v621
      %v653 = vadd.f32 %v652, %v622
      %v654 = vadd.f32 %v653, %v623
      %v655 = vadd.f32 %v654, %v624
      %v656 = vadd.f32 %v655, %v625
      %v657 = vadd.f32 %v656, %v626
      %v658 = vadd.f32 %v657, %v627
      %v659 = vadd.f32 %v658, %v628
      %v660 = vadd.f32 %v659, %v629
      %v661 = vadd.f32 %v660, %v630
      %v662 = vrot.slane %v661, 4
      %v663 = vadd.f32 %v661, %v662
      %v664 = vrot.slane %v663, 2
      %v665 = vadd.f32 %v663, %v664
      %v666 = vrot.slane %v665, 1
      %v667 = vadd.f32 %v665, %v666
      %vm668 = vcmask 1040384
      %v669 = vsel %vm668, %v598, %v667
      %670 = vst [vmem:[%s181] sm:$0x3] %v669
      %p671 = scmp.lt.s32.totalorder %s15, 1
      %s672 = scalar_select %p671, %s15, 1
      %s673 = smul.addr %s672, 32
      %s674 = smul.addr %s673, 8
      %s675 = scalar_lea.vmem %s2, %s674
      %p676 = scmp.lt.s32.totalorder %s15, 1
      %s677 = scalar_select %p676, %s15, 1
      %s678 = smul.addr %s677, 2
      %s679 = scalar_lea.vmem %s3, %s678
      // Predicated region
      $region29: #{residual_block.3} parent=27 // pred_check
        %p680 = pneg %p80
      $region30: #{residual_block.3} parent=27 // pred_check_branch
        %682 = sbr.rel (%p680) target = $region32
      $region31: #{residual_block.3} parent=27 // pred_region
        _
      $region32: #{residual_block.3} parent=27 // pred_fallthru
        _
      // Predicated region
      $region33: #{residual_block.3} parent=27 // pred_check
        %p683 = pneg %p106
      $region34: #{residual_block.3} parent=27 // pred_check_branch
        %685 = sbr.rel (%p683) target = $region36
      $region35: #{residual_block.3} parent=27 // pred_region
        _
      $region36: #{residual_block.3} parent=27 // pred_fallthru
        _
    $region28: #{residual_block.3} parent=5 // pred_fallthru
      _
    %p686 = scmp.le.s32.totalorder 2, %s10
    // Predicated region
    $region37: #{residual_block.3} parent=5 // pred_check
      %p687 = pneg %p686
    $region38: #{residual_block.3} parent=5 // pred_check_branch
      %689 = sbr.rel (%p687) target = $region40
    $region39: #{residual_block.3} parent=5 // pred_region
      %s690 = ssub.s32 %s10, 2
      // Predicated region
      $region41: #{residual_block.3} parent=39 // pred_check
        %p691 = pneg %p86
      $region42: #{residual_block.3} parent=39 // pred_check_branch
        %693 = sbr.rel (%p691) target = $region44
      $region43: #{residual_block.3} parent=39 // pred_region
        %p694 = scmp.lt.s32.totalorder %s16, 1
        %s695 = scalar_select %p694, %s16, 1
        %s696 = smul.addr %s695, 32
        %s697 = smul.addr %s696, 8
        %s698 = scalar_lea.vmem %s2, %s697
      $region44: #{residual_block.3} parent=39 // pred_fallthru
        _
      // Predicated region
      $region45: #{residual_block.3} parent=39 // pred_check
        %p699 = pneg %p112
      $region46: #{residual_block.3} parent=39 // pred_check_branch
        %701 = sbr.rel (%p699) target = $region48
      $region47: #{residual_block.3} parent=39 // pred_region
        %p702 = scmp.lt.s32.totalorder %s16, 1
        %s703 = scalar_select %p702, %s16, 1
        %s704 = smul.addr %s703, 2
        %s705 = scalar_lea.vmem %s3, %s704
      $region48: #{residual_block.3} parent=39 // pred_fallthru
        _
    $region40: #{residual_block.3} parent=5 // pred_fallthru
      _
  $region6: #{residual_block.3} parent=0 // loop_footer
    %s14 = sadd.s32 1, %s10
  $region7: #{residual_block.3} parent=0 // loop_footer_branch
    %9 = sbr.rel target = $region3
  $region8: #{residual_block.3} parent=0 // loop_exit
    _

// kernel: residual_block.5
$region0: #{residual_block.5}
  #allocation0 [shape = 'u32[]', space=smem, size = 0x4, offset = 0x4, fixed_abs, tag = 'smem constant byte address 0x4 - core index']
  #allocation1 [shape = 'u32[144,128]{1,0:T(1,128)}', space=vmem, size = 0x12000, scoped, tag = 'internal scratch']
  %s0 = inlined_call_operand.vmem [shape: f32[2,256,64], index: 0, kind: input, shape index: {}]
  %s1 = inlined_call_operand.vmem [shape: bf16[2,256,36], index: 1, kind: input, shape index: {}]
  %s2 = inlined_call_operand.vmem [shape: bf16[36,64], index: 2, kind: input, shape index: {}]
  %s3 = inlined_call_operand.vmem [shape: f32[1,64], index: 3, kind: input, shape index: {}]
  %s4 = inlined_call_operand.vmem [shape: f32[1,64], index: 4, kind: input, shape index: {}]
  %s5 = inlined_call_operand.vmem [shape: f32[1,64], index: 5, kind: input, shape index: {}]
  %s6 = inlined_call_operand.hbm [shape: f32[2,256,64], index: 6, kind: output, shape index: {}]
  %s7 = sld [smem:[#allocation0]]
  $region57: #{residual_block.5} parent=0
    _
  %s9 = ssub.s32 1, %s7
  %s10 = scalar_select 0, %s9, %s7
  $region1: #{residual_block.5} parent=0
    #allocation2 [shape = 'u8[262144]{0}', space=vmem, size = 0x40000, scoped, tag = 'output window, operand 0']
    #allocation3 [shape = 's32[2]{0}', space=sflag, size = 0x8, scoped, tag = 'scoped memory for residual_block.5']
    %11 = vsyncpa [#allocation3], 0
    %s12 = scalar_lea.sflag [#allocation3], 1
    %13 = vsyncpa %s12, 0
    loop: start=0, step=1, limit=4
    $region2: #{residual_block.5} parent=1 // loop_pre_header
      _
    $region3: #{residual_block.5} parent=1 // loop_header
      %s15 = sphi 0, %s19
      %p16 = scmp.ge.s32.totalorder %s15, 4
      %s25 = sphi 0, %s27
      %s28 = sphi 0, %s25
      %s29 = sphi 0, %s28
      %s45 = sphi 0, %s29
      %s51 = sphi 0, %s53
      %s54 = sphi 0, %s51
      %s55 = sphi 0, %s54
      %s71 = sphi 0, %s55
      %s75 = sphi 0, %s75
      %s77 = sphi 0, %s75
      %s78 = sphi 0, %s77
      %s92 = sphi 0, %s78
      %s96 = sphi 0, %s96
      %s98 = sphi 0, %s96
      %s99 = sphi 0, %s98
      %s113 = sphi 0, %s99
      %s117 = sphi 0, %s117
      %s119 = sphi 0, %s117
      %s120 = sphi 0, %s119
      %s134 = sphi 0, %s120
      %s138 = sphi 0, %s138
      %s140 = sphi 0, %s138
      %s141 = sphi 0, %s140
      %s155 = sphi 0, %s141
      %s161 = sphi 0, %s163
      %s164 = sphi 0, %s161
      %s165 = sphi 0, %s164
      %s181 = sphi 0, %s165
    $region4: #{residual_block.5} parent=1 // loop_header_branch
      %18 = sbr.rel (%p16) target = $region8
    $region5: #{residual_block.5} parent=1 // loop_body
      %s20 = ssub.s32 %s15, 1
      %s21 = ssub.s32 %s15, 2
      %s22 = sadd.s32 %s15, 1
      %s23 = ssub.s32 %s15, %s22
      %p24 = scmp.eq.s32.totalorder %s23, 0
      %s26 = sadd.s32 %s25, 1
      %s27 = scalar_select %p24, %s25, %s26
      %p30 = pneg %p24
      %p31 = scmp.eq.s32.totalorder %s15, 1
      %p32 = por %p30, %p31
      %p33 = scmp.ne.s32.totalorder %s25, %s28
      %p34 = scmp.eq.s32.totalorder %s15, 0
      %p35 = por %p33, %p34
      %p36 = scmp.ne.s32.totalorder %s25, %s28
      %p37 = scmp.eq.s32.totalorder %s20, 1
      %p38 = por %p36, %p37
      %p39 = scmp.ne.s32.totalorder %s28, %s29
      %p40 = scmp.eq.s32.totalorder %s20, 0
      %p41 = por %p39, %p40
      %p42 = scmp.ne.s32.totalorder %s28, %s29
      %p43 = scmp.eq.s32.totalorder %s21, 1
      %p44 = por %p42, %p43
      %p46 = scmp.ne.s32.totalorder %s29, %s45
      %p47 = scmp.eq.s32.totalorder %s21, 0
      %p48 = por %p46, %p47
      %s49 = ssub.s32 %s15, %s22
      %p50 = scmp.eq.s32.totalorder %s49, 0
      %s52 = sadd.s32 %s51, 1
      %s53 = scalar_select %p50, %s51, %s52
      %p56 = pneg %p50
      %p57 = scmp.eq.s32.totalorder %s15, 1
      %p58 = por %p56, %p57
      %p59 = scmp.ne.s32.totalorder %s51, %s54
      %p60 = scmp.eq.s32.totalorder %s15, 0
      %p61 = por %p59, %p60
      %p62 = scmp.ne.s32.totalorder %s51, %s54
      %p63 = scmp.eq.s32.totalorder %s20, 1
      %p64 = por %p62, %p63
      %p65 = scmp.ne.s32.totalorder %s54, %s55
      %p66 = scmp.eq.s32.totalorder %s20, 0
      %p67 = por %p65, %p66
      %p68 = scmp.ne.s32.totalorder %s54, %s55
      %p69 = scmp.eq.s32.totalorder %s21, 1
      %p70 = por %p68, %p69
      %p72 = scmp.ne.s32.totalorder %s55, %s71
      %p73 = scmp.eq.s32.totalorder %s21, 0
      %p74 = por %p72, %p73
      %s76 = sadd.s32 %s75, 1
      %p79 = scmp.eq.s32.totalorder %s15, 1
      %p80 = scmp.ne.s32.totalorder %s75, %s77
      %p81 = scmp.eq.s32.totalorder %s15, 0
      %p82 = por %p80, %p81
      %p83 = scmp.ne.s32.totalorder %s75, %s77
      %p84 = scmp.eq.s32.totalorder %s20, 1
      %p85 = por %p83, %p84
      %p86 = scmp.ne.s32.totalorder %s77, %s78
      %p87 = scmp.eq.s32.totalorder %s20, 0
      %p88 = por %p86, %p87
      %p89 = scmp.ne.s32.totalorder %s77, %s78
      %p90 = scmp.eq.s32.totalorder %s21, 1
      %p91 = por %p89, %p90
      %p93 = scmp.ne.s32.totalorder %s78, %s92
      %p94 = scmp.eq.s32.totalorder %s21, 0
      %p95 = por %p93, %p94
      %s97 = sadd.s32 %s96, 1
      %p100 = scmp.eq.s32.totalorder %s15, 1
      %p101 = scmp.ne.s32.totalorder %s96, %s98
      %p102 = scmp.eq.s32.totalorder %s15, 0
      %p103 = por %p101, %p102
      %p104 = scmp.ne.s32.totalorder %s96, %s98
      %p105 = scmp.eq.s32.totalorder %s20, 1
      %p106 = por %p104, %p105
      %p107 = scmp.ne.s32.totalorder %s98, %s99
      %p108 = scmp.eq.s32.totalorder %s20, 0
      %p109 = por %p107, %p108
      %p110 = scmp.ne.s32.totalorder %s98, %s99
      %p111 = scmp.eq.s32.totalorder %s21, 1
      %p112 = por %p110, %p111
      %p114 = scmp.ne.s32.totalorder %s99, %s113
      %p115 = scmp.eq.s32.totalorder %s21, 0
      %p116 = por %p114, %p115
      %s118 = sadd.s32 %s117, 1
      %p121 = scmp.eq.s32.totalorder %s15, 1
      %p122 = scmp.ne.s32.totalorder %s117, %s119
      %p123 = scmp.eq.s32.totalorder %s15, 0
      %p124 = por %p122, %p123
      %p125 = scmp.ne.s32.totalorder %s117, %s119
      %p126 = scmp.eq.s32.totalorder %s20, 1
      %p127 = por %p125, %p126
      %p128 = scmp.ne.s32.totalorder %s119, %s120
      %p129 = scmp.eq.s32.totalorder %s20, 0
      %p130 = por %p128, %p129
      %p131 = scmp.ne.s32.totalorder %s119, %s120
      %p132 = scmp.eq.s32.totalorder %s21, 1
      %p133 = por %p131, %p132
      %p135 = scmp.ne.s32.totalorder %s120, %s134
      %p136 = scmp.eq.s32.totalorder %s21, 0
      %p137 = por %p135, %p136
      %s139 = sadd.s32 %s138, 1
      %p142 = scmp.eq.s32.totalorder %s15, 1
      %p143 = scmp.ne.s32.totalorder %s138, %s140
      %p144 = scmp.eq.s32.totalorder %s15, 0
      %p145 = por %p143, %p144
      %p146 = scmp.ne.s32.totalorder %s138, %s140
      %p147 = scmp.eq.s32.totalorder %s20, 1
      %p148 = por %p146, %p147
      %p149 = scmp.ne.s32.totalorder %s140, %s141
      %p150 = scmp.eq.s32.totalorder %s20, 0
      %p151 = por %p149, %p150
      %p152 = scmp.ne.s32.totalorder %s140, %s141
      %p153 = scmp.eq.s32.totalorder %s21, 1
      %p154 = por %p152, %p153
      %p156 = scmp.ne.s32.totalorder %s141, %s155
      %p157 = scmp.eq.s32.totalorder %s21, 0
      %p158 = por %p156, %p157
      %s159 = ssub.s32 %s15, %s22
      %p160 = scmp.eq.s32.totalorder %s159, 0
      %s162 = sadd.s32 %s161, 1
      %s163 = scalar_select %p160, %s161, %s162
      %p166 = pneg %p160
      %p167 = scmp.eq.s32.totalorder %s15, 1
      %p168 = por %p166, %p167
      %p169 = scmp.ne.s32.totalorder %s161, %s164
      %p170 = scmp.eq.s32.totalorder %s15, 0
      %p171 = por %p169, %p170
      %p172 = scmp.ne.s32.totalorder %s161, %s164
      %p173 = scmp.eq.s32.totalorder %s20, 1
      %p174 = por %p172, %p173
      %p175 = scmp.ne.s32.totalorder %s164, %s165
      %p176 = scmp.eq.s32.totalorder %s20, 0
      %p177 = por %p175, %p176
      %p178 = scmp.ne.s32.totalorder %s164, %s165
      %p179 = scmp.eq.s32.totalorder %s21, 1
      %p180 = por %p178, %p179
      %p182 = scmp.ne.s32.totalorder %s165, %s181
      %p183 = scmp.eq.s32.totalorder %s21, 0
      %p184 = por %p182, %p183
      %p185 = scmp.le.s32.totalorder 1, %s15
      %p186 = scmp.lt.s32.totalorder %s15, 3
      %p187 = pnand %p185, %p186
      %p188 = pneg %p187
      // Predicated region
      $region9: #{residual_block.5} parent=5 // pred_check
        _
      $region10: #{residual_block.5} parent=5 // pred_check_branch
        %190 = sbr.rel (%p187) target = $region12
      $region11: #{residual_block.5} parent=5 // pred_region
        %s191 = ssub.s32 %s15, 1
        // Predicated region
        $region13: #{residual_block.5} parent=11 // pred_check
          %p192 = pneg %p88
        $region14: #{residual_block.5} parent=11 // pred_check_branch
          %194 = sbr.rel (%p192) target = $region16
        $region15: #{residual_block.5} parent=11 // pred_region
          _
        $region16: #{residual_block.5} parent=11 // pred_fallthru
          _
        // Predicated region
        $region17: #{residual_block.5} parent=11 // pred_check
          %p195 = pneg %p109
        $region18: #{residual_block.5} parent=11 // pred_check_branch
          %197 = sbr.rel (%p195) target = $region20
        $region19: #{residual_block.5} parent=11 // pred_region
          _
        $region20: #{residual_block.5} parent=11 // pred_fallthru
          _
        // Predicated region
        $region21: #{residual_block.5} parent=11 // pred_check
          %p198 = pneg %p130
        $region22: #{residual_block.5} parent=11 // pred_check_branch
          %200 = sbr.rel (%p198) target = $region24
        $region23: #{residual_block.5} parent=11 // pred_region
          _
        $region24: #{residual_block.5} parent=11 // pred_fallthru
          _
        // Predicated region
        $region25: #{residual_block.5} parent=11 // pred_check
          %p201 = pneg %p151
        $region26: #{residual_block.5} parent=11 // pred_check_branch
          %203 = sbr.rel (%p201) target = $region28
        $region27: #{residual_block.5} parent=11 // pred_region
          _
        $region28: #{residual_block.5} parent=11 // pred_fallthru
          _
      $region12: #{residual_block.5} parent=5 // pred_fallthru
        _
      %p204 = scmp.lt.s32.totalorder %s15, 2
      // Predicated region
      $region29: #{residual_block.5} parent=5 // pred_check
        %p205 = pneg %p204
      $region30: #{residual_block.5} parent=5 // pred_check_branch
        %207 = sbr.rel (%p205) target = $region32
      $region31: #{residual_block.5} parent=5 // pred_region
        // Predicated region
        $region33: #{residual_block.5} parent=31 // pred_check
          %p208 = pneg %p35
        $region34: #{residual_block.5} parent=31 // pred_check_branch
          %210 = sbr.rel (%p208) target = $region36
        $region35: #{residual_block.5} parent=31 // pred_region
          %p211 = scmp.lt.s32.totalorder %s15, 1
          %s212 = scalar_select %p211, %s15, 1
          %s213 = smul.addr %s212, 32
          %s214 = smul.addr %s213, 8
          %s215 = scalar_lea.vmem %s0, %s214
        $region36: #{residual_block.5} parent=31 // pred_fallthru
          _
        // Predicated region
        $region37: #{residual_block.5} parent=31 // pred_check
          %p216 = pneg %p61
        $region38: #{residual_block.5} parent=31 // pred_check_branch
          %218 = sbr.rel (%p216) target = $region40
        $region39: #{residual_block.5} parent=31 // pred_region
          %p219 = scmp.lt.s32.totalorder %s15, 1
          %s220 = scalar_select %p219, %s15, 1
          %s221 = smul.addr %s220, 32
          %s222 = smul.addr %s221, 4
          %s223 = scalar_lea.vmem %s1, %s222
        $region40: #{residual_block.5} parent=31 // pred_fallthru
          _
      $region32: #{residual_block.5} parent=5 // pred_fallthru
        _
      %p224 = scmp.le.s32.totalorder 1, %s15
      %p225 = scmp.lt.s32.totalorder %s15, 3
      %p226 = pnand %p224, %p225
      %p227 = pneg %p226
      // Predicated region
      $region41: #{residual_block.5} parent=5 // pred_check
        _
      $region42: #{residual_block.5} parent=5 // pred_check_branch
        %229 = sbr.rel (%p226) target = $region44
      $region43: #{residual_block.5} parent=5 // pred_region
        %s230 = ssub.s32 %s15, 1
        %p231 = scmp.lt.s32.totalorder %s20, 1
        %s232 = scalar_select %p231, %s20, 1
        %s233 = smul.addr %s232, 32
        %s234 = smul.addr %s233, 8
        %s235 = scalar_lea.vmem %s0, %s234
        %p236 = pneg %p41
        %p237 = pneg %p38
        %p238 = scmp.lt.s32.totalorder %s20, 1
        %s239 = scalar_select %p238, %s20, 1
        %s240 = smul.addr %s239, 32
        %s241 = smul.addr %s240, 4
        %s242 = scalar_lea.vmem %s1, %s241
        %p243 = pneg %p67
        %p244 = pneg %p64
        %p245 = pneg %p88
        %p246 = pneg %p85
        %p247 = pneg %p109
        %p248 = pneg %p106
        %p249 = pneg %p130
        %p250 = pneg %p127
        %p251 = pneg %p151
        %p252 = pneg %p148
        %p253 = pneg %p177
        %p254 = pneg %p174
        %s255 = sand.u32 %s164, 1
        %s256 = scalar_lea.sflag [#allocation3], %s255
        %s257 = sand.u32 %s164, 1
        %s258 = smul.addr %s257, 256
        %s259 = scalar_lea.vmem [#allocation2], %s258
        %p260 = scmp.lt.s32.totalorder %s20, 1
        %s261 = scalar_select %p260, %s20, 1
        %s262 = smul.addr %s261, 32
        %s263 = smul.addr %s262, 8
        %s264 = scalar_lea.vmem %s0, %s263
        %p265 = scmp.lt.s32.totalorder %s20, 1
        %s266 = scalar_select %p265, %s20, 1
        %s267 = smul.addr %s266, 32
        %s268 = smul.addr %s267, 4
        %s269 = scalar_lea.vmem %s1, %s268
        %v271 = vld [vmem:[%s269] sm:$0xf]
        %v272 = vld [vmem:[%s269 + $0x4] sm:$0xf]
        %v273 = vld [vmem:[%s269 + $0x8] sm:$0xf]
        %v274 = vld [vmem:[%s269 + $0xc] sm:$0xf]
        %v275 = vld [vmem:[%s269 + $0x10] sm:$0xf]
        %v276 = vld [vmem:[%s269 + $0x14] sm:$0xf]
        %v277 = vld [vmem:[%s269 + $0x18] sm:$0xf]
        %v278 = vld [vmem:[%s269 + $0x1c] sm:$0xf]
        %v279 = vld [vmem:[%s269 + $0x20] sm:$0xf]
        %v280 = vld [vmem:[%s269 + $0x24] sm:$0xf]
        %v281 = vld [vmem:[%s269 + $0x28] sm:$0xf]
        %v282 = vld [vmem:[%s269 + $0x2c] sm:$0xf]
        %v283 = vld [vmem:[%s269 + $0x30] sm:$0xf]
        %v284 = vld [vmem:[%s269 + $0x34] sm:$0xf]
        %v285 = vld [vmem:[%s269 + $0x38] sm:$0xf]
        %v286 = vld [vmem:[%s269 + $0x3c] sm:$0xf]
        %v287 = vld [vmem:[%s269 + $0x40] sm:$0xf]
        %v288 = vld [vmem:[%s269 + $0x44] sm:$0xf]
        %v289 = vld [vmem:[%s269 + $0x48] sm:$0xf]
        %v290 = vld [vmem:[%s269 + $0x4c] sm:$0xf]
        %v291 = vld [vmem:[%s269 + $0x50] sm:$0xf]
        %v292 = vld [vmem:[%s269 + $0x54] sm:$0xf]
        %v293 = vld [vmem:[%s269 + $0x58] sm:$0xf]
        %v294 = vld [vmem:[%s269 + $0x5c] sm:$0xf]
        %v295 = vld [vmem:[%s269 + $0x60] sm:$0xf]
        %v296 = vld [vmem:[%s269 + $0x64] sm:$0xf]
        %v297 = vld [vmem:[%s269 + $0x68] sm:$0xf]
        %v298 = vld [vmem:[%s269 + $0x6c] sm:$0xf]
        %v299 = vld [vmem:[%s269 + $0x70] sm:$0xf]
        %v300 = vld [vmem:[%s269 + $0x74] sm:$0xf]
        %v301 = vld [vmem:[%s269 + $0x78] sm:$0xf]
        %v302 = vld [vmem:[%s269 + $0x7c] sm:$0xf]
        %v303 = vld [vmem:[%s2] sm:$0xf]
        %v304 = vld [vmem:[%s2 + $0x4] sm:$0xf]
        %v305 = vld [vmem:[%s2 + $0x8] sm:$0xf]
        %v306 = vld [vmem:[%s2 + $0xc] sm:$0xf]
        %v307 = vld [vmem:[%s2 + $0x10] sm:$0x3]
        %v340 = vunpack.c.l.b16 %v271
        %v341 = vunpack.c.l.b16 %v272
        %v342 = vunpack.c.l.b16 %v273
        %v343 = vunpack.c.l.b16 %v274
        %v344 = vunpack.c.l.b16 %v275
        %v345 = vunpack.c.l.b16 %v276
        %v346 = vunpack.c.l.b16 %v277
        %v347 = vunpack.c.l.b16 %v278
        %v348 = vunpack.c.l.b16 %v279
        %v349 = vunpack.c.l.b16 %v280
        %v350 = vunpack.c.l.b16 %v281
        %v351 = vunpack.c.l.b16 %v282
        %v352 = vunpack.c.l.b16 %v283
        %v353 = vunpack.c.l.b16 %v284
        %v354 = vunpack.c.l.b16 %v285
        %v355 = vunpack.c.l.b16 %v286
        %v356 = vunpack.c.l.b16 %v287
        %v357 = vunpack.c.l.b16 %v288
        %v358 = vunpack.c.l.b16 %v289
        %v359 = vunpack.c.l.b16 %v290
        %v360 = vunpack.c.l.b16 %v291
        %v361 = vunpack.c.l.b16 %v292
        %v362 = vunpack.c.l.b16 %v293
        %v363 = vunpack.c.l.b16 %v294
        %v364 = vunpack.c.l.b16 %v295
        %v365 = vunpack.c.l.b16 %v296
        %v366 = vunpack.c.l.b16 %v297
        %v367 = vunpack.c.l.b16 %v298
        %v368 = vunpack.c.l.b16 %v299
        %v369 = vunpack.c.l.b16 %v300
        %v370 = vunpack.c.l.b16 %v301
        %v371 = vunpack.c.l.b16 %v302
        %v372 = vpack.c.b16 %v341, %v340
        %v373 = vpack.c.b16 %v343, %v342
        %v374 = vpack.c.b16 %v345, %v344
        %v375 = vpack.c.b16 %v347, %v346
        %v376 = vpack.c.b16 %v349, %v348
        %v377 = vpack.c.b16 %v351, %v350
        %v378 = vpack.c.b16 %v353, %v352
        %v379 = vpack.c.b16 %v355, %v354
        %v380 = vpack.c.b16 %v357, %v356
        %v381 = vpack.c.b16 %v359, %v358
        %v382 = vpack.c.b16 %v361, %v360
        %v383 = vpack.c.b16 %v363, %v362
        %v384 = vpack.c.b16 %v365, %v364
        %v385 = vpack.c.b16 %v367, %v366
        %v386 = vpack.c.b16 %v369, %v368
        %v387 = vpack.c.b16 %v371, %v370
        %v393 = vunpack.c.l.b16 %v303
        %v394 = vunpack.c.l.b16 %v304
        %v395 = vunpack.c.l.b16 %v305
        %v396 = vunpack.c.l.b16 %v306
        %v397 = vunpack.c.l.b16 %v307
        %v398 = vpack.c.b16 %v394, %v393
        %v399 = vpack.c.b16 %v396, %v395
        %v400 = vpack.c.b16 %v397, %v397
        %vm403 = vcmask 293888
        %v405 = vsel %vm403, %v372, 0
        %v408 = vsel %vm403, %v373, 0
        %v411 = vsel %vm403, %v374, 0
        %v414 = vsel %vm403, %v375, 0
        %v417 = vsel %vm403, %v376, 0
        %v420 = vsel %vm403, %v377, 0
        %v423 = vsel %vm403, %v378, 0
        %v426 = vsel %vm403, %v379, 0
        %v429 = vsel %vm403, %v380, 0
        %v432 = vsel %vm403, %v381, 0
        %v435 = vsel %vm403, %v382, 0
        %v438 = vsel %vm403, %v383, 0
        %v441 = vsel %vm403, %v384, 0
        %v444 = vsel %vm403, %v385, 0
        %v447 = vsel %vm403, %v386, 0
        %v450 = vsel %vm403, %v387, 0
        %vm452 = vcmask 1041408
        %v454 = vsel %vm452, %v400, 0
        %456 = vmatprep.subr.bf16.mxu0 0
        %457 = vmatpush1.bf16.msra.mxu0 %v398
        %458 = vmatprep.subr.bf16.mxu0 0
        %459 = vmatpush1.bf16.msra.mxu0 %v399
        %460 = vmatprep.subr.bf16.mxu0 0
        %461 = vmatpush1.bf16.msra.mxu0 %v454
        %462 = vmatprep.subr.bf16.mxu0 0
        %463 = vmatpush1.bf16.msra.mxu0 0
        %464 = vmatprep.subr.bf16.mxu0 0
        %465 = vmatpush1.bf16.msra.mxu0 0
        %466 = vmatprep.subr.bf16.mxu0 0
        %467 = vmatpush1.bf16.msra.mxu0 0
        %468 = vmatprep.subr.bf16.mxu0 0
        %469 = vmatpush1.bf16.msra.mxu0 0
        %470 = vmatprep.subr.bf16.mxu0 0
        %471 = vmatpush1.bf16.msra.mxu0 0
        %472 = vmatprep.subr.bf16.mxu0 0
        %473 = vmatpush1.bf16.msra.mxu0 0
        %474 = vmatprep.subr.bf16.mxu0 0
        %475 = vmatpush1.bf16.msra.mxu0 0
        %476 = vmatprep.subr.bf16.mxu0 0
        %477 = vmatpush1.bf16.msra.mxu0 0
        %478 = vmatprep.subr.bf16.mxu0 0
        %479 = vmatpush1.bf16.msra.mxu0 0
        %480 = vmatprep.subr.bf16.mxu0 0
        %481 = vmatpush1.bf16.msra.mxu0 0
        %482 = vmatprep.subr.bf16.mxu0 0
        %483 = vmatpush1.bf16.msra.mxu0 0
        %484 = vmatprep.subr.bf16.mxu0 0
        %485 = vmatpush1.bf16.msra.mxu0 0
        %486 = vmatprep.subr.bf16.mxu0 0
        %487 = vmatpush1.bf16.msra.mxu0 0
        %488 = vmatprep.mubr.bf16.mxu0 0
        %489 = vmatmul.mubr.bf16.gmra.mrb[0].mxu0 %v405
        %v490 = vpop.f32.mrb[0].mxu0
        %v491 = vadd.f32 0.0, %v490
        %v492 = vpop.f32.mrb[0].mxu0
        %v493 = vpop.f32.mrb[0].mxu0
        %v494 = vadd.f32 0.0, %v493
        %v495 = vpop.f32.mrb[0].mxu0
        %496 = vmatprep.mubr.bf16.mxu0 0
        %497 = vmatmul.mubr.bf16.gmra.mrb[0].mxu0 %v408
        %v498 = vpop.f32.mrb[0].mxu0
        %v499 = vadd.f32 0.0, %v498
        %v500 = vpop.f32.mrb[0].mxu0
        %v501 = vpop.f32.mrb[0].mxu0
        %v502 = vadd.f32 0.0, %v501
        %v503 = vpop.f32.mrb[0].mxu0
        %504 = vmatprep.mubr.bf16.mxu0 0
        %505 = vmatmul.mubr.bf16.gmra.mrb[0].mxu0 %v411
        %v506 = vpop.f32.mrb[0].mxu0
        %v507 = vadd.f32 0.0, %v506
        %v508 = vpop.f32.mrb[0].mxu0
        %v509 = vpop.f32.mrb[0].mxu0
        %v510 = vadd.f32 0.0, %v509
        %v511 = vpop.f32.mrb[0].mxu0
        %512 = vmatprep.mubr.bf16.mxu0 0
        %513 = vmatmul.mubr.bf16.gmra.mrb[0].mxu0 %v414
        %v514 = vpop.f32.mrb[0].mxu0
        %v515 = vadd.f32 0.0, %v514
        %v516 = vpop.f32.mrb[0].mxu0
        %v517 = vpop.f32.mrb[0].mxu0
        %v518 = vadd.f32 0.0, %v517
        %v519 = vpop.f32.mrb[0].mxu0
        %520 = vmatprep.mubr.bf16.mxu0 0
        %521 = vmatmul.mubr.bf16.gmra.mrb[0].mxu0 %v417
        %v522 = vpop.f32.mrb[0].mxu0
        %v523 = vadd.f32 0.0, %v522
        %v524 = vpop.f32.mrb[0].mxu0
        %v525 = vpop.f32.mrb[0].mxu0
        %v526 = vadd.f32 0.0, %v525
        %v527 = vpop.f32.mrb[0].mxu0
        %528 = vmatprep.mubr.bf16.mxu0 0
        %529 = vmatmul.mubr.bf16.gmra.mrb[0].mxu0 %v420
        %v530 = vpop.f32.mrb[0].mxu0
        %v531 = vadd.f32 0.0, %v530
        %v532 = vpop.f32.mrb[0].mxu0
        %v533 = vpop.f32.mrb[0].mxu0
        %v534 = vadd.f32 0.0, %v533
        %v535 = vpop.f32.mrb[0].mxu0
        %536 = vmatprep.mubr.bf16.mxu0 0
        %537 = vmatmul.mubr.bf16.gmra.mrb[0].mxu0 %v423
        %v538 = vpop.f32.mrb[0].mxu0
        %v539 = vadd.f32 0.0, %v538
        %v540 = vpop.f32.mrb[0].mxu0
        %v541 = vpop.f32.mrb[0].mxu0
        %v542 = vadd.f32 0.0, %v541
        %v543 = vpop.f32.mrb[0].mxu0
        %544 = vmatprep.mubr.bf16.mxu0 0
        %545 = vmatmul.mubr.bf16.gmra.mrb[0].mxu0 %v426
        %v546 = vpop.f32.mrb[0].mxu0
        %v547 = vadd.f32 0.0, %v546
        %v548 = vpop.f32.mrb[0].mxu0
        %v549 = vpop.f32.mrb[0].mxu0
        %v550 = vadd.f32 0.0, %v549
        %v551 = vpop.f32.mrb[0].mxu0
        %552 = vmatprep.mubr.bf16.mxu0 0
        %553 = vmatmul.mubr.bf16.gmra.mrb[0].mxu0 %v429
        %v554 = vpop.f32.mrb[0].mxu0
        %v555 = vadd.f32 0.0, %v554
        %v556 = vpop.f32.mrb[0].mxu0
        %v557 = vpop.f32.mrb[0].mxu0
        %v558 = vadd.f32 0.0, %v557
        %v559 = vpop.f32.mrb[0].mxu0
        %560 = vmatprep.mubr.bf16.mxu0 0
        %561 = vmatmul.mubr.bf16.gmra.mrb[0].mxu0 %v432
        %v562 = vpop.f32.mrb[0].mxu0
        %v563 = vadd.f32 0.0, %v562
        %v564 = vpop.f32.mrb[0].mxu0
        %v565 = vpop.f32.mrb[0].mxu0
        %v566 = vadd.f32 0.0, %v565
        %v567 = vpop.f32.mrb[0].mxu0
        %568 = vmatprep.mubr.bf16.mxu0 0
        %569 = vmatmul.mubr.bf16.gmra.mrb[0].mxu0 %v435
        %v570 = vpop.f32.mrb[0].mxu0
        %v571 = vadd.f32 0.0, %v570
        %v572 = vpop.f32.mrb[0].mxu0
        %v573 = vpop.f32.mrb[0].mxu0
        %v574 = vadd.f32 0.0, %v573
        %v575 = vpop.f32.mrb[0].mxu0
        %576 = vmatprep.mubr.bf16.mxu0 0
        %577 = vmatmul.mubr.bf16.gmra.mrb[0].mxu0 %v438
        %v578 = vpop.f32.mrb[0].mxu0
        %v579 = vadd.f32 0.0, %v578
        %v580 = vpop.f32.mrb[0].mxu0
        %v581 = vpop.f32.mrb[0].mxu0
        %v582 = vadd.f32 0.0, %v581
        %v583 = vpop.f32.mrb[0].mxu0
        %584 = vmatprep.mubr.bf16.mxu0 0
        %585 = vmatmul.mubr.bf16.gmra.mrb[0].mxu0 %v441
        %v586 = vpop.f32.mrb[0].mxu0
        %v587 = vadd.f32 0.0, %v586
        %v588 = vpop.f32.mrb[0].mxu0
        %v589 = vpop.f32.mrb[0].mxu0
        %v590 = vadd.f32 0.0, %v589
        %v591 = vpop.f32.mrb[0].mxu0
        %592 = vmatprep.mubr.bf16.mxu0 0
        %593 = vmatmul.mubr.bf16.gmra.mrb[0].mxu0 %v444
        %v594 = vpop.f32.mrb[0].mxu0
        %v595 = vadd.f32 0.0, %v594
        %v596 = vpop.f32.mrb[0].mxu0
        %v597 = vpop.f32.mrb[0].mxu0
        %v598 = vadd.f32 0.0, %v597
        %v599 = vpop.f32.mrb[0].mxu0
        %600 = vmatprep.mubr.bf16.mxu0 0
        %601 = vmatmul.mubr.bf16.gmra.mrb[0].mxu0 %v447
        %v602 = vpop.f32.mrb[0].mxu0
        %v603 = vadd.f32 0.0, %v602
        %v604 = vpop.f32.mrb[0].mxu0
        %v605 = vpop.f32.mrb[0].mxu0
        %v606 = vadd.f32 0.0, %v605
        %v607 = vpop.f32.mrb[0].mxu0
        %608 = vmatprep.mubr.bf16.mxu0 0
        %609 = vmatmul.mubr.bf16.gmra.mrb[0].mxu0 %v450
        %v610 = vpop.f32.mrb[0].mxu0
        %v611 = vadd.f32 0.0, %v610
        %v612 = vpop.f32.mrb[0].mxu0
        %v613 = vpop.f32.mrb[0].mxu0
        %v614 = vadd.f32 0.0, %v613
        %v615 = vpop.f32.mrb[0].mxu0
        %616 = vdwg.mxu0
        %v617 = vld [vmem:[%s264] sm:$0xff]
        %v618 = vld [vmem:[%s264 + $0x8] sm:$0xff]
        %v619 = vld [vmem:[%s264 + $0x10] sm:$0xff]
        %v620 = vld [vmem:[%s264 + $0x18] sm:$0xff]
        %v621 = vld [vmem:[%s264 + $0x20] sm:$0xff]
        %v622 = vld [vmem:[%s264 + $0x28] sm:$0xff]
        %v623 = vld [vmem:[%s264 + $0x30] sm:$0xff]
        %v624 = vld [vmem:[%s264 + $0x38] sm:$0xff]
        %v625 = vld [vmem:[%s264 + $0x40] sm:$0xff]
        %v626 = vld [vmem:[%s264 + $0x48] sm:$0xff]
        %v627 = vld [vmem:[%s264 + $0x50] sm:$0xff]
        %v628 = vld [vmem:[%s264 + $0x58] sm:$0xff]
        %v629 = vld [vmem:[%s264 + $0x60] sm:$0xff]
        %v630 = vld [vmem:[%s264 + $0x68] sm:$0xff]
        %v631 = vld [vmem:[%s264 + $0x70] sm:$0xff]
        %v632 = vld [vmem:[%s264 + $0x78] sm:$0xff]
        %v633 = vld [vmem:[%s264 + $0x80] sm:$0xff]
        %v634 = vld [vmem:[%s264 + $0x88] sm:$0xff]
        %v635 = vld [vmem:[%s264 + $0x90] sm:$0xff]
        %v636 = vld [vmem:[%s264 + $0x98] sm:$0xff]
        %v637 = vld [vmem:[%s264 + $0xa0] sm:$0xff]
        %v638 = vld [vmem:[%s264 + $0xa8] sm:$0xff]
        %v639 = vld [vmem:[%s264 + $0xb0] sm:$0xff]
        %v640 = vld [vmem:[%s264 + $0xb8] sm:$0xff]
        %v641 = vld [vmem:[%s264 + $0xc0] sm:$0xff]
        %v642 = vld [vmem:[%s264 + $0xc8] sm:$0xff]
        %v643 = vld [vmem:[%s264 + $0xd0] sm:$0xff]
        %v644 = vld [vmem:[%s264 + $0xd8] sm:$0xff]
        %v645 = vld [vmem:[%s264 + $0xe0] sm:$0xff]
        %v646 = vld [vmem:[%s264 + $0xe8] sm:$0xff]
        %v647 = vld [vmem:[%s264 + $0xf0] sm:$0xff]
        %v648 = vld [vmem:[%s264 + $0xf8] sm:$0xff]
        %v649 = vld [vmem:[%s3] sm:$0x1]
        %v651 = vlaneseq
        %v652 = vshrl.u32 %v651, 7
        %v653 = vsub.s32 0, %v652
        %v654 = vrot.slane %v649, %v653
        %v656 = vmul.f32 %v617, %v654
        %v657 = vmul.f32 %v618, %v654
        %v658 = vmul.f32 %v619, %v654
        %v659 = vmul.f32 %v620, %v654
        %v660 = vmul.f32 %v621, %v654
        %v661 = vmul.f32 %v622, %v654
        %v662 = vmul.f32 %v623, %v654
        %v663 = vmul.f32 %v624, %v654
        %v664 = vmul.f32 %v625, %v654
        %v665 = vmul.f32 %v626, %v654
        %v666 = vmul.f32 %v627, %v654
        %v667 = vmul.f32 %v628, %v654
        %v668 = vmul.f32 %v629, %v654
        %v669 = vmul.f32 %v630, %v654
        %v670 = vmul.f32 %v631, %v654
        %v671 = vmul.f32 %v632, %v654
        %v672 = vmul.f32 %v633, %v654
        %v673 = vmul.f32 %v634, %v654
        %v674 = vmul.f32 %v635, %v654
        %v675 = vmul.f32 %v636, %v654
        %v676 = vmul.f32 %v637, %v654
        %v677 = vmul.f32 %v638, %v654
        %v678 = vmul.f32 %v639, %v654
        %v679 = vmul.f32 %v640, %v654
        %v680 = vmul.f32 %v641, %v654
        %v681 = vmul.f32 %v642, %v654
        %v682 = vmul.f32 %v643, %v654
        %v683 = vmul.f32 %v644, %v654
        %v684 = vmul.f32 %v645, %v654
        %v685 = vmul.f32 %v646, %v654
        %v686 = vmul.f32 %v647, %v654
        %v687 = vmul.f32 %v648, %v654
        %v688 = vld [vmem:[%s4] sm:$0x1]
        %v690 = vlaneseq
        %v691 = vshrl.u32 %v690, 7
        %v692 = vsub.s32 0, %v691
        %v693 = vrot.slane %v688, %v692
        %v695 = vmul.f32 %v491, %v693
        %v696 = vmul.f32 %v494, %v693
        %v697 = vmul.f32 %v499, %v693
        %v698 = vmul.f32 %v502, %v693
        %v699 = vmul.f32 %v507, %v693
        %v700 = vmul.f32 %v510, %v693
        %v701 = vmul.f32 %v515, %v693
        %v702 = vmul.f32 %v518, %v693
        %v703 = vmul.f32 %v523, %v693
        %v704 = vmul.f32 %v526, %v693
        %v705 = vmul.f32 %v531, %v693
        %v706 = vmul.f32 %v534, %v693
        %v707 = vmul.f32 %v539, %v693
        %v708 = vmul.f32 %v542, %v693
        %v709 = vmul.f32 %v547, %v693
        %v710 = vmul.f32 %v550, %v693
        %v711 = vmul.f32 %v555, %v693
        %v712 = vmul.f32 %v558, %v693
        %v713 = vmul.f32 %v563, %v693
        %v714 = vmul.f32 %v566, %v693
        %v715 = vmul.f32 %v571, %v693
        %v716 = vmul.f32 %v574, %v693
        %v717 = vmul.f32 %v579, %v693
        %v718 = vmul.f32 %v582, %v693
        %v719 = vmul.f32 %v587, %v693
        %v720 = vmul.f32 %v590, %v693
        %v721 = vmul.f32 %v595, %v693
        %v722 = vmul.f32 %v598, %v693
        %v723 = vmul.f32 %v603, %v693
        %v724 = vmul.f32 %v606, %v693
        %v725 = vmul.f32 %v611, %v693
        %v726 = vmul.f32 %v614, %v693
        %v727 = vadd.f32 %v656, %v695
        %v728 = vadd.f32 %v657, %v696
        %v729 = vadd.f32 %v658, %v697
        %v730 = vadd.f32 %v659, %v698
        %v731 = vadd.f32 %v660, %v699
        %v732 = vadd.f32 %v661, %v700
        %v733 = vadd.f32 %v662, %v701
        %v734 = vadd.f32 %v663, %v702
        %v735 = vadd.f32 %v664, %v703
        %v736 = vadd.f32 %v665, %v704
        %v737 = vadd.f32 %v666, %v705
        %v738 = vadd.f32 %v667, %v706
        %v739 = vadd.f32 %v668, %v707
        %v740 = vadd.f32 %v669, %v708
        %v741 = vadd.f32 %v670, %v709
        %v742 = vadd.f32 %v671, %v710
        %v743 = vadd.f32 %v672, %v711
        %v744 = vadd.f32 %v673, %v712
        %v745 = vadd.f32 %v674, %v713
        %v746 = vadd.f32 %v675, %v714
        %v747 = vadd.f32 %v676, %v715
        %v748 = vadd.f32 %v677, %v716
        %v749 = vadd.f32 %v678, %v717
        %v750 = vadd.f32 %v679, %v718
        %v751 = vadd.f32 %v680, %v719
        %v752 = vadd.f32 %v681, %v720
        %v753 = vadd.f32 %v682, %v721
        %v754 = vadd.f32 %v683, %v722
        %v755 = vadd.f32 %v684, %v723
        %v756 = vadd.f32 %v685, %v724
        %v757 = vadd.f32 %v686, %v725
        %v758 = vadd.f32 %v687, %v726
        %v759 = vld [vmem:[%s5] sm:$0x1]
        %v761 = vlaneseq
        %v762 = vshrl.u32 %v761, 7
        %v763 = vsub.s32 0, %v762
        %v764 = vrot.slane %v759, %v763
        %v766 = vadd.f32 %v727, %v764
        %v767 = vadd.f32 %v728, %v764
        %v768 = vadd.f32 %v729, %v764
        %v769 = vadd.f32 %v730, %v764
        %v770 = vadd.f32 %v731, %v764
        %v771 = vadd.f32 %v732, %v764
        %v772 = vadd.f32 %v733, %v764
        %v773 = vadd.f32 %v734, %v764
        %v774 = vadd.f32 %v735, %v764
        %v775 = vadd.f32 %v736, %v764
        %v776 = vadd.f32 %v737, %v764
        %v777 = vadd.f32 %v738, %v764
        %v778 = vadd.f32 %v739, %v764
        %v779 = vadd.f32 %v740, %v764
        %v780 = vadd.f32 %v741, %v764
        %v781 = vadd.f32 %v742, %v764
        %v782 = vadd.f32 %v743, %v764
        %v783 = vadd.f32 %v744, %v764
        %v784 = vadd.f32 %v745, %v764
        %v785 = vadd.f32 %v746, %v764
        %v786 = vadd.f32 %v747, %v764
        %v787 = vadd.f32 %v748, %v764
        %v788 = vadd.f32 %v749, %v764
        %v789 = vadd.f32 %v750, %v764
        %v790 = vadd.f32 %v751, %v764
        %v791 = vadd.f32 %v752, %v764
        %v792 = vadd.f32 %v753, %v764
        %v793 = vadd.f32 %v754, %v764
        %v794 = vadd.f32 %v755, %v764
        %v795 = vadd.f32 %v756, %v764
        %v796 = vadd.f32 %v757, %v764
        %v797 = vadd.f32 %v758, %v764
        %vm798 = vcmask 523264
        %799 = vst.msk [vmem:[%s259] sm:$0xff] %vm798, %v766
        %800 = vst.msk [vmem:[%s259 + $0x8] sm:$0xff] %vm798, %v767
        %801 = vst.msk [vmem:[%s259 + $0x10] sm:$0xff] %vm798, %v768
        %802 = vst.msk [vmem:[%s259 + $0x18] sm:$0xff] %vm798, %v769
        %803 = vst.msk [vmem:[%s259 + $0x20] sm:$0xff] %vm798, %v770
        %804 = vst.msk [vmem:[%s259 + $0x28] sm:$0xff] %vm798, %v771
        %805 = vst.msk [vmem:[%s259 + $0x30] sm:$0xff] %vm798, %v772
        %806 = vst.msk [vmem:[%s259 + $0x38] sm:$0xff] %vm798, %v773
        %807 = vst.msk [vmem:[%s259 + $0x40] sm:$0xff] %vm798, %v774
        %808 = vst.msk [vmem:[%s259 + $0x48] sm:$0xff] %vm798, %v775
        %809 = vst.msk [vmem:[%s259 + $0x50] sm:$0xff] %vm798, %v776
        %810 = vst.msk [vmem:[%s259 + $0x58] sm:$0xff] %vm798, %v777
        %811 = vst.msk [vmem:[%s259 + $0x60] sm:$0xff] %vm798, %v778
        %812 = vst.msk [vmem:[%s259 + $0x68] sm:$0xff] %vm798, %v779
        %813 = vst.msk [vmem:[%s259 + $0x70] sm:$0xff] %vm798, %v780
        %814 = vst.msk [vmem:[%s259 + $0x78] sm:$0xff] %vm798, %v781
        %815 = vst.msk [vmem:[%s259 + $0x80] sm:$0xff] %vm798, %v782
        %816 = vst.msk [vmem:[%s259 + $0x88] sm:$0xff] %vm798, %v783
        %817 = vst.msk [vmem:[%s259 + $0x90] sm:$0xff] %vm798, %v784
        %818 = vst.msk [vmem:[%s259 + $0x98] sm:$0xff] %vm798, %v785
        %819 = vst.msk [vmem:[%s259 + $0xa0] sm:$0xff] %vm798, %v786
        %820 = vst.msk [vmem:[%s259 + $0xa8] sm:$0xff] %vm798, %v787
        %821 = vst.msk [vmem:[%s259 + $0xb0] sm:$0xff] %vm798, %v788
        %822 = vst.msk [vmem:[%s259 + $0xb8] sm:$0xff] %vm798, %v789
        %823 = vst.msk [vmem:[%s259 + $0xc0] sm:$0xff] %vm798, %v790
        %824 = vst.msk [vmem:[%s259 + $0xc8] sm:$0xff] %vm798, %v791
        %825 = vst.msk [vmem:[%s259 + $0xd0] sm:$0xff] %vm798, %v792
        %826 = vst.msk [vmem:[%s259 + $0xd8] sm:$0xff] %vm798, %v793
        %827 = vst.msk [vmem:[%s259 + $0xe0] sm:$0xff] %vm798, %v794
        %828 = vst.msk [vmem:[%s259 + $0xe8] sm:$0xff] %vm798, %v795
        %829 = vst.msk [vmem:[%s259 + $0xf0] sm:$0xff] %vm798, %v796
        %830 = vst.msk [vmem:[%s259 + $0xf8] sm:$0xff] %vm798, %v797
        %s831 = sand.u32 %s164, 1
        %s832 = scalar_lea.sflag [#allocation3], %s831
        %s833 = sand.u32 %s164, 1
        %s834 = smul.addr %s833, 256
        %s835 = scalar_lea.vmem [#allocation2], %s834
        // Predicated region
        $region45: #{residual_block.5} parent=43 // pred_check
          %p836 = pneg %p174
        $region46: #{residual_block.5} parent=43 // pred_check_branch
          %838 = sbr.rel (%p836) target = $region48
        $region47: #{residual_block.5} parent=43 // pred_region
          %s840 = ssub.s32 4096, 4096
          %841 = vsyncadd %s832, %s840
          %s842 = smul.addr %s20, 32
          %s843 = smul.addr %s842, 128
          %s844 = scalar_lea.hbm %s6, %s843
          %s845 = sshll.u32 %s835, 4
          %s846 = int_to_ptr.vmem [resolvable:$true] %s845
          %851 = dma.vmem_to_hbm [thread:$0]  %s846, 4096, %s844, %s832, 128, 128, 8
        $region48: #{residual_block.5} parent=43 // pred_fallthru
          _
      $region44: #{residual_block.5} parent=5 // pred_fallthru
        _
      %p852 = scmp.le.s32.totalorder 2, %s15
      // Predicated region
      $region49: #{residual_block.5} parent=5 // pred_check
        %p853 = pneg %p852
      $region50: #{residual_block.5} parent=5 // pred_check_branch
        %855 = sbr.rel (%p853) target = $region52
      $region51: #{residual_block.5} parent=5 // pred_region
        %s856 = ssub.s32 %s15, 2
        // Predicated region
        $region53: #{residual_block.5} parent=51 // pred_check
          %p857 = pneg %p180
        $region54: #{residual_block.5} parent=51 // pred_check_branch
          %859 = sbr.rel (%p857) target = $region56
        $region55: #{residual_block.5} parent=51 // pred_region
          %s860 = sand.u32 %s165, 1
          %s861 = scalar_lea.sflag [#allocation3], %s860
          %s862 = sand.u32 %s165, 1
          %s863 = smul.addr %s862, 256
          %s864 = scalar_lea.vmem [#allocation2], %s863
          %865 = dma.done %s861, 4096
        $region56: #{residual_block.5} parent=51 // pred_fallthru
          _
      $region52: #{residual_block.5} parent=5 // pred_fallthru
        _
    $region6: #{residual_block.5} parent=1 // loop_footer
      %s19 = sadd.s32 1, %s15
    $region7: #{residual_block.5} parent=1 // loop_footer_branch
      %14 = sbr.rel target = $region3
    $region8: #{residual_block.5} parent=1 // loop_exit
      _
    %866 = vsyncpa [#allocation3], 1
    %s867 = scalar_lea.sflag [#allocation3], 1
    %868 = vsyncpa %s867, 1

// kernel: residual_block.4
$region0: #{residual_block.4}
  #allocation0 [shape = 'u32[]', space=smem, size = 0x4, offset = 0x4, fixed_abs, tag = 'smem constant byte address 0x4 - core index']
  #allocation1 [shape = 'u32[144,128]{1,0:T(1,128)}', space=vmem, size = 0x12000, scoped, tag = 'internal scratch']
  %s0 = inlined_call_operand.vmem [shape: f32[2,256,64], index: 0, kind: input, shape index: {}]
  %s1 = inlined_call_operand.vmem [shape: bf16[576,64], index: 1, kind: input, shape index: {}]
  %s2 = inlined_call_operand.vmem [shape: f32[1,64], index: 2, kind: input, shape index: {}]
  %s3 = inlined_call_operand.vmem [shape: f32[1,64], index: 3, kind: input, shape index: {}]
  %s4 = inlined_call_operand.vmem [shape: f32[2,256,64], index: 4, kind: output, shape index: {0}]
  %s5 = inlined_call_operand.vmem [shape: f32[2,2,64], index: 5, kind: output, shape index: {1}]
  %6 = xla_tuple %s4, %s5
  %s7 = sld [smem:[#allocation0]]
  $region57: #{residual_block.4} parent=0
    _
  %s9 = ssub.s32 1, %s7
  %s10 = scalar_select 0, %s9, %s7
  loop: start=0, step=1, limit=4
  $region2: #{residual_block.4} parent=0 // loop_pre_header
    _
  $region3: #{residual_block.4} parent=0 // loop_header
    %s12 = sphi 0, %s16
    %p13 = scmp.ge.s32.totalorder %s12, 4
    %s22 = sphi 0, %s24
    %s25 = sphi 0, %s22
    %s26 = sphi 0, %s25
    %s42 = sphi 0, %s26
    %s46 = sphi 0, %s46
    %s48 = sphi 0, %s46
    %s49 = sphi 0, %s48
    %s63 = sphi 0, %s49
    %s67 = sphi 0, %s67
    %s69 = sphi 0, %s67
    %s70 = sphi 0, %s69
    %s84 = sphi 0, %s70
    %s88 = sphi 0, %s88
    %s90 = sphi 0, %s88
    %s91 = sphi 0, %s90
    %s105 = sphi 0, %s91
    %s111 = sphi 0, %s113
    %s114 = sphi 0, %s111
    %s115 = sphi 0, %s114
    %s131 = sphi 0, %s115
    %s137 = sphi 0, %s139
    %s140 = sphi 0, %s137
    %s141 = sphi 0, %s140
    %s157 = sphi 0, %s141
  $region4: #{residual_block.4} parent=0 // loop_header_branch
    %15 = sbr.rel (%p13) target = $region8
  $region5: #{residual_block.4} parent=0 // loop_body
    %s17 = ssub.s32 %s12, 1
    %s18 = ssub.s32 %s12, 2
    %s19 = sadd.s32 %s12, 1
    %s20 = ssub.s32 %s12, %s19
    %p21 = scmp.eq.s32.totalorder %s20, 0
    %s23 = sadd.s32 %s22, 1
    %s24 = scalar_select %p21, %s22, %s23
    %p27 = pneg %p21
    %p28 = scmp.eq.s32.totalorder %s12, 1
    %p29 = por %p27, %p28
    %p30 = scmp.ne.s32.totalorder %s22, %s25
    %p31 = scmp.eq.s32.totalorder %s12, 0
    %p32 = por %p30, %p31
    %p33 = scmp.ne.s32.totalorder %s22, %s25
    %p34 = scmp.eq.s32.totalorder %s17, 1
    %p35 = por %p33, %p34
    %p36 = scmp.ne.s32.totalorder %s25, %s26
    %p37 = scmp.eq.s32.totalorder %s17, 0
    %p38 = por %p36, %p37
    %p39 = scmp.ne.s32.totalorder %s25, %s26
    %p40 = scmp.eq.s32.totalorder %s18, 1
    %p41 = por %p39, %p40
    %p43 = scmp.ne.s32.totalorder %s26, %s42
    %p44 = scmp.eq.s32.totalorder %s18, 0
    %p45 = por %p43, %p44
    %s47 = sadd.s32 %s46, 1
    %p50 = scmp.eq.s32.totalorder %s12, 1
    %p51 = scmp.ne.s32.totalorder %s46, %s48
    %p52 = scmp.eq.s32.totalorder %s12, 0
    %p53 = por %p51, %p52
    %p54 = scmp.ne.s32.totalorder %s46, %s48
    %p55 = scmp.eq.s32.totalorder %s17, 1
    %p56 = por %p54, %p55
    %p57 = scmp.ne.s32.totalorder %s48, %s49
    %p58 = scmp.eq.s32.totalorder %s17, 0
    %p59 = por %p57, %p58
    %p60 = scmp.ne.s32.totalorder %s48, %s49
    %p61 = scmp.eq.s32.totalorder %s18, 1
    %p62 = por %p60, %p61
    %p64 = scmp.ne.s32.totalorder %s49, %s63
    %p65 = scmp.eq.s32.totalorder %s18, 0
    %p66 = por %p64, %p65
    %s68 = sadd.s32 %s67, 1
    %p71 = scmp.eq.s32.totalorder %s12, 1
    %p72 = scmp.ne.s32.totalorder %s67, %s69
    %p73 = scmp.eq.s32.totalorder %s12, 0
    %p74 = por %p72, %p73
    %p75 = scmp.ne.s32.totalorder %s67, %s69
    %p76 = scmp.eq.s32.totalorder %s17, 1
    %p77 = por %p75, %p76
    %p78 = scmp.ne.s32.totalorder %s69, %s70
    %p79 = scmp.eq.s32.totalorder %s17, 0
    %p80 = por %p78, %p79
    %p81 = scmp.ne.s32.totalorder %s69, %s70
    %p82 = scmp.eq.s32.totalorder %s18, 1
    %p83 = por %p81, %p82
    %p85 = scmp.ne.s32.totalorder %s70, %s84
    %p86 = scmp.eq.s32.totalorder %s18, 0
    %p87 = por %p85, %p86
    %s89 = sadd.s32 %s88, 1
    %p92 = scmp.eq.s32.totalorder %s12, 1
    %p93 = scmp.ne.s32.totalorder %s88, %s90
    %p94 = scmp.eq.s32.totalorder %s12, 0
    %p95 = por %p93, %p94
    %p96 = scmp.ne.s32.totalorder %s88, %s90
    %p97 = scmp.eq.s32.totalorder %s17, 1
    %p98 = por %p96, %p97
    %p99 = scmp.ne.s32.totalorder %s90, %s91
    %p100 = scmp.eq.s32.totalorder %s17, 0
    %p101 = por %p99, %p100
    %p102 = scmp.ne.s32.totalorder %s90, %s91
    %p103 = scmp.eq.s32.totalorder %s18, 1
    %p104 = por %p102, %p103
    %p106 = scmp.ne.s32.totalorder %s91, %s105
    %p107 = scmp.eq.s32.totalorder %s18, 0
    %p108 = por %p106, %p107
    %s109 = ssub.s32 %s12, %s19
    %p110 = scmp.eq.s32.totalorder %s109, 0
    %s112 = sadd.s32 %s111, 1
    %s113 = scalar_select %p110, %s111, %s112
    %p116 = pneg %p110
    %p117 = scmp.eq.s32.totalorder %s12, 1
    %p118 = por %p116, %p117
    %p119 = scmp.ne.s32.totalorder %s111, %s114
    %p120 = scmp.eq.s32.totalorder %s12, 0
    %p121 = por %p119, %p120
    %p122 = scmp.ne.s32.totalorder %s111, %s114
    %p123 = scmp.eq.s32.totalorder %s17, 1
    %p124 = por %p122, %p123
    %p125 = scmp.ne.s32.totalorder %s114, %s115
    %p126 = scmp.eq.s32.totalorder %s17, 0
    %p127 = por %p125, %p126
    %p128 = scmp.ne.s32.totalorder %s114, %s115
    %p129 = scmp.eq.s32.totalorder %s18, 1
    %p130 = por %p128, %p129
    %p132 = scmp.ne.s32.totalorder %s115, %s131
    %p133 = scmp.eq.s32.totalorder %s18, 0
    %p134 = por %p132, %p133
    %s135 = ssub.s32 %s12, %s19
    %p136 = scmp.eq.s32.totalorder %s135, 0
    %s138 = sadd.s32 %s137, 1
    %s139 = scalar_select %p136, %s137, %s138
    %p142 = pneg %p136
    %p143 = scmp.eq.s32.totalorder %s12, 1
    %p144 = por %p142, %p143
    %p145 = scmp.ne.s32.totalorder %s137, %s140
    %p146 = scmp.eq.s32.totalorder %s12, 0
    %p147 = por %p145, %p146
    %p148 = scmp.ne.s32.totalorder %s137, %s140
    %p149 = scmp.eq.s32.totalorder %s17, 1
    %p150 = por %p148, %p149
    %p151 = scmp.ne.s32.totalorder %s140, %s141
    %p152 = scmp.eq.s32.totalorder %s17, 0
    %p153 = por %p151, %p152
    %p154 = scmp.ne.s32.totalorder %s140, %s141
    %p155 = scmp.eq.s32.totalorder %s18, 1
    %p156 = por %p154, %p155
    %p158 = scmp.ne.s32.totalorder %s141, %s157
    %p159 = scmp.eq.s32.totalorder %s18, 0
    %p160 = por %p158, %p159
    %p161 = scmp.le.s32.totalorder 1, %s12
    %p162 = scmp.lt.s32.totalorder %s12, 3
    %p163 = pnand %p161, %p162
    %p164 = pneg %p163
    // Predicated region
    $region9: #{residual_block.4} parent=5 // pred_check
      _
    $region10: #{residual_block.4} parent=5 // pred_check_branch
      %166 = sbr.rel (%p163) target = $region12
    $region11: #{residual_block.4} parent=5 // pred_region
      %s167 = ssub.s32 %s12, 1
      // Predicated region
      $region13: #{residual_block.4} parent=11 // pred_check
        %p168 = pneg %p59
      $region14: #{residual_block.4} parent=11 // pred_check_branch
        %170 = sbr.rel (%p168) target = $region16
      $region15: #{residual_block.4} parent=11 // pred_region
        _
      $region16: #{residual_block.4} parent=11 // pred_fallthru
        _
      // Predicated region
      $region17: #{residual_block.4} parent=11 // pred_check
        %p171 = pneg %p80
      $region18: #{residual_block.4} parent=11 // pred_check_branch
        %173 = sbr.rel (%p171) target = $region20
      $region19: #{residual_block.4} parent=11 // pred_region
        _
      $region20: #{residual_block.4} parent=11 // pred_fallthru
        _
      // Predicated region
      $region21: #{residual_block.4} parent=11 // pred_check
        %p174 = pneg %p101
      $region22: #{residual_block.4} parent=11 // pred_check_branch
        %176 = sbr.rel (%p174) target = $region24
      $region23: #{residual_block.4} parent=11 // pred_region
        _
      $region24: #{residual_block.4} parent=11 // pred_fallthru
        _
    $region12: #{residual_block.4} parent=5 // pred_fallthru
      _
    %p177 = scmp.lt.s32.totalorder %s12, 2
    // Predicated region
    $region25: #{residual_block.4} parent=5 // pred_check
      %p178 = pneg %p177
    $region26: #{residual_block.4} parent=5 // pred_check_branch
      %180 = sbr.rel (%p178) target = $region28
    $region27: #{residual_block.4} parent=5 // pred_region
      // Predicated region
      $region29: #{residual_block.4} parent=27 // pred_check
        %p181 = pneg %p32
      $region30: #{residual_block.4} parent=27 // pred_check_branch
        %183 = sbr.rel (%p181) target = $region32
      $region31: #{residual_block.4} parent=27 // pred_region
        %p184 = scmp.lt.s32.totalorder %s12, 1
        %s185 = scalar_select %p184, %s12, 1
        %s186 = smul.addr %s185, 32
        %s187 = smul.addr %s186, 8
        %s188 = scalar_lea.vmem %s0, %s187
      $region32: #{residual_block.4} parent=27 // pred_fallthru
        _
    $region28: #{residual_block.4} parent=5 // pred_fallthru
      _
    %p189 = scmp.le.s32.totalorder 1, %s12
    %p190 = scmp.lt.s32.totalorder %s12, 3
    %p191 = pnand %p189, %p190
    %p192 = pneg %p191
    // Predicated region
    $region33: #{residual_block.4} parent=5 // pred_check
      _
    $region34: #{residual_block.4} parent=5 // pred_check_branch
      %194 = sbr.rel (%p191) target = $region36
    $region35: #{residual_block.4} parent=5 // pred_region
      %s195 = ssub.s32 %s12, 1
      %p196 = scmp.lt.s32.totalorder %s17, 1
      %s197 = scalar_select %p196, %s17, 1
      %s198 = smul.addr %s197, 32
      %s199 = smul.addr %s198, 8
      %s200 = scalar_lea.vmem %s0, %s199
      %p201 = pneg %p38
      %p202 = pneg %p35
      %p203 = pneg %p59
      %p204 = pneg %p56
      %p205 = pneg %p80
      %p206 = pneg %p77
      %p207 = pneg %p101
      %p208 = pneg %p98
      %p209 = pneg %p127
      %p210 = pneg %p124
      %p211 = scmp.lt.s32.totalorder %s17, 1
      %s212 = scalar_select %p211, %s17, 1
      %s213 = smul.addr %s212, 32
      %s214 = smul.addr %s213, 8
      %s215 = scalar_lea.vmem %s4, %s214
      %p216 = pneg %p153
      %p217 = pneg %p150
      %p218 = scmp.lt.s32.totalorder %s17, 1
      %s219 = scalar_select %p218, %s17, 1
      %s220 = smul.addr %s219, 2
      %s221 = scalar_lea.vmem %s5, %s220
      %p222 = scmp.lt.s32.totalorder %s17, 1
      %s223 = scalar_select %p222, %s17, 1
      %s224 = smul.addr %s223, 32
      %s225 = smul.addr %s224, 8
      %s226 = scalar_lea.vmem %s0, %s225
      %p227 = scmp.lt.s32.totalorder %s17, 1
      %s228 = scalar_select %p227, %s17, 1
      %s229 = smul.addr %s228, 32
      %s230 = smul.addr %s229, 8
      %s231 = scalar_lea.vmem %s4, %s230
      %p232 = scmp.lt.s32.totalorder %s17, 1
      %s233 = scalar_select %p232, %s17, 1
      %s234 = smul.addr %s233, 2
      %s235 = scalar_lea.vmem %s5, %s234
      %v237 = vld [vmem:[%s226] sm:$0xff]
      %v238 = vld [vmem:[%s226 + $0x8] sm:$0xff]
      %v239 = vld [vmem:[%s226 + $0x10] sm:$0xff]
      %v240 = vld [vmem:[%s226 + $0x18] sm:$0xff]
      %v241 = vld [vmem:[%s226 + $0x20] sm:$0xff]
      %v242 = vld [vmem:[%s226 + $0x28] sm:$0xff]
      %v243 = vld [vmem:[%s226 + $0x30] sm:$0xff]
      %v244 = vld [vmem:[%s226 + $0x38] sm:$0xff]
      %v245 = vld [vmem:[%s226 + $0x40] sm:$0xff]
      %v246 = vld [vmem:[%s226 + $0x48] sm:$0xff]
      %v247 = vld [vmem:[%s226 + $0x50] sm:$0xff]
      %v248 = vld [vmem:[%s226 + $0x58] sm:$0xff]
      %v249 = vld [vmem:[%s226 + $0x60] sm:$0xff]
      %v250 = vld [vmem:[%s226 + $0x68] sm:$0xff]
      %v251 = vld [vmem:[%s226 + $0x70] sm:$0xff]
      %v252 = vld [vmem:[%s226 + $0x78] sm:$0xff]
      %v253 = vld [vmem:[%s226 + $0x80] sm:$0xff]
      %v254 = vld [vmem:[%s226 + $0x88] sm:$0xff]
      %v255 = vld [vmem:[%s226 + $0x90] sm:$0xff]
      %v256 = vld [vmem:[%s226 + $0x98] sm:$0xff]
      %v257 = vld [vmem:[%s226 + $0xa0] sm:$0xff]
      %v258 = vld [vmem:[%s226 + $0xa8] sm:$0xff]
      %v259 = vld [vmem:[%s226 + $0xb0] sm:$0xff]
      %v260 = vld [vmem:[%s226 + $0xb8] sm:$0xff]
      %v261 = vld [vmem:[%s226 + $0xc0] sm:$0xff]
      %v262 = vld [vmem:[%s226 + $0xc8] sm:$0xff]
      %v263 = vld [vmem:[%s226 + $0xd0] sm:$0xff]
      %v264 = vld [vmem:[%s226 + $0xd8] sm:$0xff]
      %v265 = vld [vmem:[%s226 + $0xe0] sm:$0xff]
      %v266 = vld [vmem:[%s226 + $0xe8] sm:$0xff]
      %v267 = vld [vmem:[%s226 + $0xf0] sm:$0xff]
      %v268 = vld [vmem:[%s226 + $0xf8] sm:$0xff]
      %v269 = vld [vmem:[%s2] sm:$0x1]
      %v271 = vlaneseq
      %v272 = vshrl.u32 %v271, 7
      %v273 = vsub.s32 0, %v272
      %v274 = vrot.slane %v269, %v273
      %v276 = vmul.f32 %v237, %v274
      %v277 = vmul.f32 %v238, %v274
      %v278 = vmul.f32 %v239, %v274
      %v279 = vmul.f32 %v240, %v274
      %v280 = vmul.f32 %v241, %v274
      %v281 = vmul.f32 %v242, %v274
      %v282 = vmul.f32 %v243, %v274
      %v283 = vmul.f32 %v244, %v274
      %v284 = vmul.f32 %v245, %v274
      %v285 = vmul.f32 %v246, %v274
      %v286 = vmul.f32 %v247, %v274
      %v287 = vmul.f32 %v248, %v274
      %v288 = vmul.f32 %v249, %v274
      %v289 = vmul.f32 %v250, %v274
      %v290 = vmul.f32 %v251, %v274
      %v291 = vmul.f32 %v252, %v274
      %v292 = vmul.f32 %v253, %v274
      %v293 = vmul.f32 %v254, %v274
      %v294 = vmul.f32 %v255, %v274
      %v295 = vmul.f32 %v256, %v274
      %v296 = vmul.f32 %v257, %v274
      %v297 = vmul.f32 %v258, %v274
      %v298 = vmul.f32 %v259, %v274
      %v299 = vmul.f32 %v260, %v274
      %v300 = vmul.f32 %v261, %v274
      %v301 = vmul.f32 %v262, %v274
      %v302 = vmul.f32 %v263, %v274
      %v303 = vmul.f32 %v264, %v274
      %v304 = vmul.f32 %v265, %v274
      %v305 = vmul.f32 %v266, %v274
      %v306 = vmul.f32 %v267, %v274
      %v307 = vmul.f32 %v268, %v274
      %v308 = vld [vmem:[%s3] sm:$0x1]
      %v310 = vlaneseq
      %v311 = vshrl.u32 %v310, 7
      %v312 = vsub.s32 0, %v311
      %v313 = vrot.slane %v308, %v312
      %v315 = vadd.f32 %v276, %v313
      %v316 = vadd.f32 %v277, %v313
      %v317 = vadd.f32 %v278, %v313
      %v318 = vadd.f32 %v279, %v313
      %v319 = vadd.f32 %v280, %v313
      %v320 = vadd.f32 %v281, %v313
      %v321 = vadd.f32 %v282, %v313
      %v322 = vadd.f32 %v283, %v313
      %v323 = vadd.f32 %v284, %v313
      %v324 = vadd.f32 %v285, %v313
      %v325 = vadd.f32 %v286, %v313
      %v326 = vadd.f32 %v287, %v313
      %v327 = vadd.f32 %v288, %v313
      %v328 = vadd.f32 %v289, %v313
      %v329 = vadd.f32 %v290, %v313
      %v330 = vadd.f32 %v291, %v313
      %v331 = vadd.f32 %v292, %v313
      %v332 = vadd.f32 %v293, %v313
      %v333 = vadd.f32 %v294, %v313
      %v334 = vadd.f32 %v295, %v313
      %v335 = vadd.f32 %v296, %v313
      %v336 = vadd.f32 %v297, %v313
      %v337 = vadd.f32 %v298, %v313
      %v338 = vadd.f32 %v299, %v313
      %v339 = vadd.f32 %v300, %v313
      %v340 = vadd.f32 %v301, %v313
      %v341 = vadd.f32 %v302, %v313
      %v342 = vadd.f32 %v303, %v313
      %v343 = vadd.f32 %v304, %v313
      %v344 = vadd.f32 %v305, %v313
      %v345 = vadd.f32 %v306, %v313
      %v346 = vadd.f32 %v307, %v313
      %v347 = vmax.f32 %v315, 0.0
      %v348 = vmax.f32 %v316, 0.0
      %v349 = vmax.f32 %v317, 0.0
      %v350 = vmax.f32 %v318, 0.0
      %v351 = vmax.f32 %v319, 0.0
      %v352 = vmax.f32 %v320, 0.0
      %v353 = vmax.f32 %v321, 0.0
      %v354 = vmax.f32 %v322, 0.0
      %v355 = vmax.f32 %v323, 0.0
      %v356 = vmax.f32 %v324, 0.0
      %v357 = vmax.f32 %v325, 0.0
      %v358 = vmax.f32 %v326, 0.0
      %v359 = vmax.f32 %v327, 0.0
      %v360 = vmax.f32 %v328, 0.0
      %v361 = vmax.f32 %v329, 0.0
      %v362 = vmax.f32 %v330, 0.0
      %v363 = vmax.f32 %v331, 0.0
      %v364 = vmax.f32 %v332, 0.0
      %v365 = vmax.f32 %v333, 0.0
      %v366 = vmax.f32 %v334, 0.0
      %v367 = vmax.f32 %v335, 0.0
      %v368 = vmax.f32 %v336, 0.0
      %v369 = vmax.f32 %v337, 0.0
      %v370 = vmax.f32 %v338, 0.0
      %v371 = vmax.f32 %v339, 0.0
      %v372 = vmax.f32 %v340, 0.0
      %v373 = vmax.f32 %v341, 0.0
      %v374 = vmax.f32 %v342, 0.0
      %v375 = vmax.f32 %v343, 0.0
      %v376 = vmax.f32 %v344, 0.0
      %v377 = vmax.f32 %v345, 0.0
      %v378 = vmax.f32 %v346, 0.0
      %vm411 = vcmask 1040384
      %v412 = vrot.slane %v347, 7
      %v413 = vrot.slane %v348, 7
      %v414 = vsel %vm411, %v412, %v413
      %v415 = vrot.slane %v349, 7
      %v416 = vrot.slane %v350, 7
      %v417 = vsel %vm411, %v415, %v416
      %v418 = vrot.slane %v351, 7
      %v419 = vrot.slane %v352, 7
      %v420 = vsel %vm411, %v418, %v419
      %v421 = vrot.slane %v353, 7
      %v422 = vrot.slane %v354, 7
      %v423 = vsel %vm411, %v421, %v422
      %v424 = vrot.slane %v355, 7
      %v425 = vrot.slane %v356, 7
      %v426 = vsel %vm411, %v424, %v425
      %v427 = vrot.slane %v357, 7
      %v428 = vrot.slane %v358, 7
      %v429 = vsel %vm411, %v427, %v428
      %v430 = vrot.slane %v359, 7
      %v431 = vrot.slane %v360, 7
      %v432 = vsel %vm411, %v430, %v431
      %v433 = vrot.slane %v361, 7
      %v434 = vrot.slane %v362, 7
      %v435 = vsel %vm411, %v433, %v434
      %v436 = vrot.slane %v363, 7
      %v437 = vrot.slane %v364, 7
      %v438 = vsel %vm411, %v436, %v437
      %v439 = vrot.slane %v365, 7
      %v440 = vrot.slane %v366, 7
      %v441 = vsel %vm411, %v439, %v440
      %v442 = vrot.slane %v367, 7
      %v443 = vrot.slane %v368, 7
      %v444 = vsel %vm411, %v442, %v443
      %v445 = vrot.slane %v369, 7
      %v446 = vrot.slane %v370, 7
      %v447 = vsel %vm411, %v445, %v446
      %v448 = vrot.slane %v371, 7
      %v449 = vrot.slane %v372, 7
      %v450 = vsel %vm411, %v448, %v449
      %v451 = vrot.slane %v373, 7
      %v452 = vrot.slane %v374, 7
      %v453 = vsel %vm411, %v451, %v452
      %v454 = vrot.slane %v375, 7
      %v455 = vrot.slane %v376, 7
      %v456 = vsel %vm411, %v454, %v455
      %v457 = vrot.slane %v377, 7
      %v458 = vrot.slane %v378, 7
      %v459 = vsel %vm411, %v457, %v458
      %v508 = vsel %vm411, 0.0, %v412
      %v509 = vsel %vm411, 0.0, %v415
      %v510 = vsel %vm411, 0.0, %v418
      %v511 = vsel %vm411, 0.0, %v421
      %v512 = vsel %vm411, 0.0, %v424
      %v513 = vsel %vm411, 0.0, %v427
      %v514 = vsel %vm411, 0.0, %v430
      %v515 = vsel %vm411, 0.0, %v433
      %v516 = vsel %vm411, 0.0, %v436
      %v517 = vsel %vm411, 0.0, %v439
      %v518 = vsel %vm411, 0.0, %v442
      %v519 = vsel %vm411, 0.0, %v445
      %v520 = vsel %vm411, 0.0, %v448
      %v521 = vsel %vm411, 0.0, %v451
      %v522 = vsel %vm411, 0.0, %v454
      %v523 = vsel %vm411, 0.0, %v457
      %v524 = vsel %vm411, %v413, 0.0
      %v525 = vsel %vm411, %v416, 0.0
      %v526 = vsel %vm411, %v419, 0.0
      %v527 = vsel %vm411, %v422, 0.0
      %v528 = vsel %vm411, %v425, 0.0
      %v529 = vsel %vm411, %v428, 0.0
      %v530 = vsel %vm411, %v431, 0.0
      %v531 = vsel %vm411, %v434, 0.0
      %v532 = vsel %vm411, %v437, 0.0
      %v533 = vsel %vm411, %v440, 0.0
      %v534 = vsel %vm411, %v443, 0.0
      %v535 = vsel %vm411, %v446, 0.0
      %v536 = vsel %vm411, %v449, 0.0
      %v537 = vsel %vm411, %v452, 0.0
      %v538 = vsel %vm411, %v455, 0.0
      %v539 = vsel %vm411, %v458, 0.0
      %vm571 = vcmask 1046528
      %v572 = vrot.slane 0.0, 1
      %v573 = vsel %vm571, %v572, %v572
      %v574 = vrot.slane %v508, 1
      %v575 = vrot.slane %v414, 1
      %v576 = vsel %vm571, %v574, %v575
      %v577 = vrot.slane %v524, 1
      %v578 = vsel %vm571, %v575, %v577
      %v579 = vrot.slane %v509, 1
      %v580 = vrot.slane %v417, 1
      %v581 = vsel %vm571, %v579, %v580
      %v582 = vrot.slane %v525, 1
      %v583 = vsel %vm571, %v580, %v582
      %v584 = vrot.slane %v510, 1
      %v585 = vrot.slane %v420, 1
      %v586 = vsel %vm571, %v584, %v585
      %v587 = vrot.slane %v526, 1
      %v588 = vsel %vm571, %v585, %v587
      %v589 = vrot.slane %v511, 1
      %v590 = vrot.slane %v423, 1
      %v591 = vsel %vm571, %v589, %v590
      %v592 = vrot.slane %v527, 1
      %v593 = vsel %vm571, %v590, %v592
      %v594 = vrot.slane %v512, 1
      %v595 = vrot.slane %v426, 1
      %v596 = vsel %vm571, %v594, %v595
      %v597 = vrot.slane %v528, 1
      %v598 = vsel %vm571, %v595, %v597
      %v599 = vrot.slane %v513, 1
      %v600 = vrot.slane %v429, 1
      %v601 = vsel %vm571, %v599, %v600
      %v602 = vrot.slane %v529, 1
      %v603 = vsel %vm571, %v600, %v602
      %v604 = vrot.slane %v514, 1
      %v605 = vrot.slane %v432, 1
      %v606 = vsel %vm571, %v604, %v605
      %v607 = vrot.slane %v530, 1
      %v608 = vsel %vm571, %v605, %v607
      %v609 = vrot.slane %v515, 1
      %v610 = vrot.slane %v435, 1
      %v611 = vsel %vm571, %v609, %v610
      %v612 = vrot.slane %v531, 1
      %v613 = vsel %vm571, %v610, %v612
      %v614 = vrot.slane %v516, 1
      %v615 = vrot.slane %v438, 1
      %v616 = vsel %vm571, %v614, %v615
      %v617 = vrot.slane %v532, 1
      %v618 = vsel %vm571, %v615, %v617
      %v619 = vrot.slane %v517, 1
      %v620 = vrot.slane %v441, 1
      %v621 = vsel %vm571, %v619, %v620
      %v622 = vrot.slane %v533, 1
      %v623 = vsel %vm571, %v620, %v622
      %v624 = vrot.slane %v518, 1
      %v625 = vrot.slane %v444, 1
      %v626 = vsel %vm571, %v624, %v625
      %v627 = vrot.slane %v534, 1
      %v628 = vsel %vm571, %v625, %v627
      %v629 = vrot.slane %v519, 1
      %v630 = vrot.slane %v447, 1
      %v631 = vsel %vm571, %v629, %v630
      %v632 = vrot.slane %v535, 1
      %v633 = vsel %vm571, %v630, %v632
      %v634 = vrot.slane %v520, 1
      %v635 = vrot.slane %v450, 1
      %v636 = vsel %vm571, %v634, %v635
      %v637 = vrot.slane %v536, 1
      %v638 = vsel %vm571, %v635, %v637
      %v639 = vrot.slane %v521, 1
      %v640 = vrot.slane %v453, 1
      %v641 = vsel %vm571, %v639, %v640
      %v642 = vrot.slane %v537, 1
      %v643 = vsel %vm571, %v640, %v642
      %v644 = vrot.slane %v522, 1
      %v645 = vrot.slane %v456, 1
      %v646 = vsel %vm571, %v644, %v645
      %v647 = vrot.slane %v538, 1
      %v648 = vsel %vm571, %v645, %v647
      %649 = vrot.lane.b32.xlu0 %v573, 64
      %v650 = vpop.permute.xlu0 %649
      %651 = vrot.lane.b32.xlu0 %v576, 64
      %v652 = vpop.permute.xlu0 %651
      %653 = vrot.lane.b32.xlu0 %v578, 64
      %v654 = vpop.permute.xlu0 %653
      %655 = vrot.lane.b32.xlu0 %v581, 64
      %v656 = vpop.permute.xlu0 %655
      %657 = vrot.lane.b32.xlu0 %v583, 64
      %v658 = vpop.permute.xlu0 %657
      %659 = vrot.lane.b32.xlu0 %v586, 64
      %v660 = vpop.permute.xlu0 %659
      %661 = vrot.lane.b32.xlu0 %v588, 64
      %v662 = vpop.permute.xlu0 %661
      %663 = vrot.lane.b32.xlu0 %v591, 64
      %v664 = vpop.permute.xlu0 %663
      %665 = vrot.lane.b32.xlu0 %v593, 64
      %v666 = vpop.permute.xlu0 %665
      %667 = vrot.lane.b32.xlu0 %v596, 64
      %v668 = vpop.permute.xlu0 %667
      %669 = vrot.lane.b32.xlu0 %v598, 64
      %v670 = vpop.permute.xlu0 %669
      %671 = vrot.lane.b32.xlu0 %v601, 64
      %v672 = vpop.permute.xlu0 %671
      %673 = vrot.lane.b32.xlu0 %v603, 64
      %v674 = vpop.permute.xlu0 %673
      %675 = vrot.lane.b32.xlu0 %v606, 64
      %v676 = vpop.permute.xlu0 %675
      %677 = vrot.lane.b32.xlu0 %v608, 64
      %v678 = vpop.permute.xlu0 %677
      %679 = vrot.lane.b32.xlu0 %v611, 64
      %v680 = vpop.permute.xlu0 %679
      %681 = vrot.lane.b32.xlu0 %v613, 64
      %v682 = vpop.permute.xlu0 %681
      %683 = vrot.lane.b32.xlu0 %v616, 64
      %v684 = vpop.permute.xlu0 %683
      %685 = vrot.lane.b32.xlu0 %v618, 64
      %v686 = vpop.permute.xlu0 %685
      %687 = vrot.lane.b32.xlu0 %v621, 64
      %v688 = vpop.permute.xlu0 %687
      %689 = vrot.lane.b32.xlu0 %v623, 64
      %v690 = vpop.permute.xlu0 %689
      %691 = vrot.lane.b32.xlu0 %v626, 64
      %v692 = vpop.permute.xlu0 %691
      %693 = vrot.lane.b32.xlu0 %v628, 64
      %v694 = vpop.permute.xlu0 %693
      %695 = vrot.lane.b32.xlu0 %v631, 64
      %v696 = vpop.permute.xlu0 %695
      %697 = vrot.lane.b32.xlu0 %v633, 64
      %v698 = vpop.permute.xlu0 %697
      %699 = vrot.lane.b32.xlu0 %v636, 64
      %v700 = vpop.permute.xlu0 %699
      %701 = vrot.lane.b32.xlu0 %v638, 64
      %v702 = vpop.permute.xlu0 %701
      %703 = vrot.lane.b32.xlu0 %v641, 64
      %v704 = vpop.permute.xlu0 %703
      %705 = vrot.lane.b32.xlu0 %v643, 64
      %v706 = vpop.permute.xlu0 %705
      %707 = vrot.lane.b32.xlu0 %v646, 64
      %v708 = vpop.permute.xlu0 %707
      %709 = vrot.lane.b32.xlu0 %v648, 64
      %v710 = vpop.permute.xlu0 %709
      %vm742 = vcmask 1045504
      %v743 = vrot.slane 0.0, 2
      %v744 = vsel %vm742, %v743, %v743
      %v745 = vrot.slane %v508, 2
      %v746 = vrot.slane %v414, 2
      %v747 = vsel %vm742, %v745, %v746
      %v748 = vrot.slane %v524, 2
      %v749 = vsel %vm742, %v746, %v748
      %v750 = vrot.slane %v509, 2
      %v751 = vrot.slane %v417, 2
      %v752 = vsel %vm742, %v750, %v751
      %v753 = vrot.slane %v525, 2
      %v754 = vsel %vm742, %v751, %v753
      %v755 = vrot.slane %v510, 2
      %v756 = vrot.slane %v420, 2
      %v757 = vsel %vm742, %v755, %v756
      %v758 = vrot.slane %v526, 2
      %v759 = vsel %vm742, %v756, %v758
      %v760 = vrot.slane %v511, 2
      %v761 = vrot.slane %v423, 2
      %v762 = vsel %vm742, %v760, %v761
      %v763 = vrot.slane %v527, 2
      %v764 = vsel %vm742, %v761, %v763
      %v765 = vrot.slane %v512, 2
      %v766 = vrot.slane %v426, 2
      %v767 = vsel %vm742, %v765, %v766
      %v768 = vrot.slane %v528, 2
      %v769 = vsel %vm742, %v766, %v768
      %v770 = vrot.slane %v513, 2
      %v771 = vrot.slane %v429, 2
      %v772 = vsel %vm742, %v770, %v771
      %v773 = vrot.slane %v529, 2
      %v774 = vsel %vm742, %v771, %v773
      %v775 = vrot.slane %v514, 2
      %v776 = vrot.slane %v432, 2
      %v777 = vsel %vm742, %v775, %v776
      %v778 = vrot.slane %v530, 2
      %v779 = vsel %vm742, %v776, %v778
      %v780 = vrot.slane %v515, 2
      %v781 = vrot.slane %v435, 2
      %v782 = vsel %vm742, %v780, %v781
      %v783 = vrot.slane %v531, 2
      %v784 = vsel %vm742, %v781, %v783
      %v785 = vrot.slane %v516, 2
      %v786 = vrot.slane %v438, 2
      %v787 = vsel %vm742, %v785, %v786
      %v788 = vrot.slane %v532, 2
      %v789 = vsel %vm742, %v786, %v788
      %v790 = vrot.slane %v517, 2
      %v791 = vrot.slane %v441, 2
      %v792 = vsel %vm742, %v790, %v791
      %v793 = vrot.slane %v533, 2
      %v794 = vsel %vm742, %v791, %v793
      %v795 = vrot.slane %v518, 2
      %v796 = vrot.slane %v444, 2
      %v797 = vsel %vm742, %v795, %v796
      %v798 = vrot.slane %v534, 2
      %v799 = vsel %vm742, %v796, %v798
      %v800 = vrot.slane %v519, 2
      %v801 = vrot.slane %v447, 2
      %v802 = vsel %vm742, %v800, %v801
      %v803 = vrot.slane %v535, 2
      %v804 = vsel %vm742, %v801, %v803
      %v805 = vrot.slane %v520, 2
      %v806 = vrot.slane %v450, 2
      %v807 = vsel %vm742, %v805, %v806
      %v808 = vrot.slane %v536, 2
      %v809 = vsel %vm742, %v806, %v808
      %v810 = vrot.slane %v521, 2
      %v811 = vrot.slane %v453, 2
      %v812 = vsel %vm742, %v810, %v811
      %v813 = vrot.slane %v537, 2
      %v814 = vsel %vm742, %v811, %v813
      %v815 = vrot.slane %v522, 2
      %v816 = vrot.slane %v456, 2
      %v817 = vsel %vm742, %v815, %v816
      %v818 = vrot.slane %v538, 2
      %v819 = vsel %vm742, %v816, %v818
      %852 = vrot.lane.b32.xlu0 %v508, 64
      %v853 = vpop.permute.xlu0 %852
      %854 = vrot.lane.b32.xlu0 %v414, 64
      %v855 = vpop.permute.xlu0 %854
      %856 = vrot.lane.b32.xlu0 %v509, 64
      %v857 = vpop.permute.xlu0 %856
      %858 = vrot.lane.b32.xlu0 %v417, 64
      %v859 = vpop.permute.xlu0 %858
      %860 = vrot.lane.b32.xlu0 %v510, 64
      %v861 = vpop.permute.xlu0 %860
      %862 = vrot.lane.b32.xlu0 %v420, 64
      %v863 = vpop.permute.xlu0 %862
      %864 = vrot.lane.b32.xlu0 %v511, 64
      %v865 = vpop.permute.xlu0 %864
      %866 = vrot.lane.b32.xlu0 %v423, 64
      %v867 = vpop.permute.xlu0 %866
      %868 = vrot.lane.b32.xlu0 %v512, 64
      %v869 = vpop.permute.xlu0 %868
      %870 = vrot.lane.b32.xlu0 %v426, 64
      %v871 = vpop.permute.xlu0 %870
      %872 = vrot.lane.b32.xlu0 %v513, 64
      %v873 = vpop.permute.xlu0 %872
      %874 = vrot.lane.b32.xlu0 %v429, 64
      %v875 = vpop.permute.xlu0 %874
      %876 = vrot.lane.b32.xlu0 %v514, 64
      %v877 = vpop.permute.xlu0 %876
      %878 = vrot.lane.b32.xlu0 %v432, 64
      %v879 = vpop.permute.xlu0 %878
      %880 = vrot.lane.b32.xlu0 %v515, 64
      %v881 = vpop.permute.xlu0 %880
      %882 = vrot.lane.b32.xlu0 %v435, 64
      %v883 = vpop.permute.xlu0 %882
      %884 = vrot.lane.b32.xlu0 %v516, 64
      %v885 = vpop.permute.xlu0 %884
      %886 = vrot.lane.b32.xlu0 %v438, 64
      %v887 = vpop.permute.xlu0 %886
      %888 = vrot.lane.b32.xlu0 %v517, 64
      %v889 = vpop.permute.xlu0 %888
      %890 = vrot.lane.b32.xlu0 %v441, 64
      %v891 = vpop.permute.xlu0 %890
      %892 = vrot.lane.b32.xlu0 %v518, 64
      %v893 = vpop.permute.xlu0 %892
      %894 = vrot.lane.b32.xlu0 %v444, 64
      %v895 = vpop.permute.xlu0 %894
      %896 = vrot.lane.b32.xlu0 %v519, 64
      %v897 = vpop.permute.xlu0 %896
      %898 = vrot.lane.b32.xlu0 %v447, 64
      %v899 = vpop.permute.xlu0 %898
      %900 = vrot.lane.b32.xlu0 %v520, 64
      %v901 = vpop.permute.xlu0 %900
      %902 = vrot.lane.b32.xlu0 %v450, 64
      %v903 = vpop.permute.xlu0 %902
      %904 = vrot.lane.b32.xlu0 %v521, 64
      %v905 = vpop.permute.xlu0 %904
      %906 = vrot.lane.b32.xlu0 %v453, 64
      %v907 = vpop.permute.xlu0 %906
      %908 = vrot.lane.b32.xlu0 %v522, 64
      %v909 = vpop.permute.xlu0 %908
      %910 = vrot.lane.b32.xlu0 %v456, 64
      %v911 = vpop.permute.xlu0 %910
      %912 = vrot.lane.b32.xlu0 %v523, 64
      %v913 = vpop.permute.xlu0 %912
      %914 = vrot.lane.b32.xlu0 %v459, 64
      %v915 = vpop.permute.xlu0 %914
      %v949 = vrot.slane %v523, 1
      %v950 = vrot.slane %v459, 1
      %v951 = vsel %vm571, %v949, %v950
      %v952 = vrot.slane %v539, 1
      %v953 = vsel %vm571, %v950, %v952
      %v986 = vrot.slane %v523, 2
      %v987 = vrot.slane %v459, 2
      %v988 = vsel %vm742, %v986, %v987
      %v989 = vrot.slane %v539, 2
      %v990 = vsel %vm742, %v987, %v989
      %991 = vrot.lane.b32.xlu0 %v747, 64
      %v992 = vpop.permute.xlu0 %991
      %993 = vrot.lane.b32.xlu0 %v749, 64
      %v994 = vpop.permute.xlu0 %993
      %995 = vrot.lane.b32.xlu0 %v752, 64
      %v996 = vpop.permute.xlu0 %995
      %997 = vrot.lane.b32.xlu0 %v754, 64
      %v998 = vpop.permute.xlu0 %997
      %999 = vrot.lane.b32.xlu0 %v757, 64
      %v1000 = vpop.permute.xlu0 %999
      %1001 = vrot.lane.b32.xlu0 %v759, 64
      %v1002 = vpop.permute.xlu0 %1001
      %1003 = vrot.lane.b32.xlu0 %v762, 64
      %v1004 = vpop.permute.xlu0 %1003
      %1005 = vrot.lane.b32.xlu0 %v764, 64
      %v1006 = vpop.permute.xlu0 %1005
      %1007 = vrot.lane.b32.xlu0 %v767, 64
      %v1008 = vpop.permute.xlu0 %1007
      %1009 = vrot.lane.b32.xlu0 %v769, 64
      %v1010 = vpop.permute.xlu0 %1009
      %1011 = vrot.lane.b32.xlu0 %v772, 64
      %v1012 = vpop.permute.xlu0 %1011
      %1013 = vrot.lane.b32.xlu0 %v774, 64
      %v1014 = vpop.permute.xlu0 %1013
      %1015 = vrot.lane.b32.xlu0 %v777, 64
      %v1016 = vpop.permute.xlu0 %1015
      %1017 = vrot.lane.b32.xlu0 %v779, 64
      %v1018 = vpop.permute.xlu0 %1017
      %1019 = vrot.lane.b32.xlu0 %v782, 64
      %v1020 = vpop.permute.xlu0 %1019
      %1021 = vrot.lane.b32.xlu0 %v784, 64
      %v1022 = vpop.permute.xlu0 %1021
      %1023 = vrot.lane.b32.xlu0 %v787, 64
      %v1024 = vpop.permute.xlu0 %1023
      %1025 = vrot.lane.b32.xlu0 %v789, 64
      %v1026 = vpop.permute.xlu0 %1025
      %1027 = vrot.lane.b32.xlu0 %v792, 64
      %v1028 = vpop.permute.xlu0 %1027
      %1029 = vrot.lane.b32.xlu0 %v794, 64
      %v1030 = vpop.permute.xlu0 %1029
      %1031 = vrot.lane.b32.xlu0 %v797, 64
      %v1032 = vpop.permute.xlu0 %1031
      %1033 = vrot.lane.b32.xlu0 %v799, 64
      %v1034 = vpop.permute.xlu0 %1033
      %1035 = vrot.lane.b32.xlu0 %v802, 64
      %v1036 = vpop.permute.xlu0 %1035
      %1037 = vrot.lane.b32.xlu0 %v804, 64
      %v1038 = vpop.permute.xlu0 %1037
      %1039 = vrot.lane.b32.xlu0 %v807, 64
      %v1040 = vpop.permute.xlu0 %1039
      %1041 = vrot.lane.b32.xlu0 %v809, 64
      %v1042 = vpop.permute.xlu0 %1041
      %1043 = vrot.lane.b32.xlu0 %v812, 64
      %v1044 = vpop.permute.xlu0 %1043
      %1045 = vrot.lane.b32.xlu0 %v814, 64
      %v1046 = vpop.permute.xlu0 %1045
      %1047 = vrot.lane.b32.xlu0 %v817, 64
      %v1048 = vpop.permute.xlu0 %1047
      %1049 = vrot.lane.b32.xlu0 %v819, 64
      %v1050 = vpop.permute.xlu0 %1049
      %1051 = vrot.lane.b32.xlu0 %v988, 64
      %v1052 = vpop.permute.xlu0 %1051
      %1053 = vrot.lane.b32.xlu0 %v990, 64
      %v1054 = vpop.permute.xlu0 %1053
      %1087 = vrot.lane.b32.xlu0 %v951, 64
      %v1088 = vpop.permute.xlu0 %1087
      %1089 = vrot.lane.b32.xlu0 %v953, 64
      %v1090 = vpop.permute.xlu0 %1089
      %vm1095 = vcmask 523264
      %v1096 = vsel %vm1095, 0.0, %v650
      %v1097 = vsel %vm1095, %v508, %v652
      %v1098 = vsel %vm1095, %v414, %v654
      %v1099 = vsel %vm1095, %v509, %v656
      %v1100 = vsel %vm1095, %v417, %v658
      %v1101 = vsel %vm1095, %v510, %v660
      %v1102 = vsel %vm1095, %v420, %v662
      %v1103 = vsel %vm1095, %v511, %v664
      %v1104 = vsel %vm1095, %v423, %v666
      %v1105 = vsel %vm1095, %v512, %v668
      %v1106 = vsel %vm1095, %v426, %v670
      %v1107 = vsel %vm1095, %v513, %v672
      %v1108 = vsel %vm1095, %v429, %v674
      %v1109 = vsel %vm1095, %v514, %v676
      %v1110 = vsel %vm1095, %v432, %v678
      %v1111 = vsel %vm1095, %v515, %v680
      %v1112 = vsel %vm1095, %v435, %v682
      %v1113 = vsel %vm1095, %v516, %v684
      %v1114 = vsel %vm1095, %v438, %v686
      %v1115 = vsel %vm1095, %v517, %v688
      %v1116 = vsel %vm1095, %v441, %v690
      %v1117 = vsel %vm1095, %v518, %v692
      %v1118 = vsel %vm1095, %v444, %v694
      %v1119 = vsel %vm1095, %v519, %v696
      %v1120 = vsel %vm1095, %v447, %v698
      %v1121 = vsel %vm1095, %v520, %v700
      %v1122 = vsel %vm1095, %v450, %v702
      %v1123 = vsel %vm1095, %v521, %v704
      %v1124 = vsel %vm1095, %v453, %v706
      %v1125 = vsel %vm1095, %v522, %v708
      %v1126 = vsel %vm1095, %v456, %v710
      %v1127 = vsel %vm1095, %v744, %v853
      %v1128 = vsel %vm1095, %v744, %v855
      %v1129 = vsel %vm1095, %v747, %v857
      %v1130 = vsel %vm1095, %v749, %v859
      %v1131 = vsel %vm1095, %v752, %v861
      %v1132 = vsel %vm1095, %v754, %v863
      %v1133 = vsel %vm1095, %v757, %v865
      %v1134 = vsel %vm1095, %v759, %v867
      %v1135 = vsel %vm1095, %v762, %v869
      %v1136 = vsel %vm1095, %v764, %v871
      %v1137 = vsel %vm1095, %v767, %v873
      %v1138 = vsel %vm1095, %v769, %v875
      %v1139 = vsel %vm1095, %v772, %v877
      %v1140 = vsel %vm1095, %v774, %v879
      %v1141 = vsel %vm1095, %v777, %v881
      %v1142 = vsel %vm1095, %v779, %v883
      %v1143 = vsel %vm1095, %v782, %v885
      %v1144 = vsel %vm1095, %v784, %v887
      %v1145 = vsel %vm1095, %v787, %v889
      %v1146 = vsel %vm1095, %v789, %v891
      %v1147 = vsel %vm1095, %v792, %v893
      %v1148 = vsel %vm1095, %v794, %v895
      %v1149 = vsel %vm1095, %v797, %v897
      %v1150 = vsel %vm1095, %v799, %v899
      %v1151 = vsel %vm1095, %v802, %v901
      %v1152 = vsel %vm1095, %v804, %v903
      %v1153 = vsel %vm1095, %v807, %v905
      %v1154 = vsel %vm1095, %v809, %v907
      %v1155 = vsel %vm1095, %v812, %v909
      %v1156 = vsel %vm1095, %v814, %v911
      %v1157 = vsel %vm1095, %v817, %v913
      %v1158 = vsel %vm1095, %v819, %v915
      %v1159 = vsel %vm1095, %v576, %v992
      %v1160 = vsel %vm1095, %v578, %v994
      %v1161 = vsel %vm1095, %v581, %v996
      %v1162 = vsel %vm1095, %v583, %v998
      %v1163 = vsel %vm1095, %v586, %v1000
      %v1164 = vsel %vm1095, %v588, %v1002
      %v1165 = vsel %vm1095, %v591, %v1004
      %v1166 = vsel %vm1095, %v593, %v1006
      %v1167 = vsel %vm1095, %v596, %v1008
      %v1168 = vsel %vm1095, %v598, %v1010
      %v1169 = vsel %vm1095, %v601, %v1012
      %v1170 = vsel %vm1095, %v603, %v1014
      %v1171 = vsel %vm1095, %v606, %v1016
      %v1172 = vsel %vm1095, %v608, %v1018
      %v1173 = vsel %vm1095, %v611, %v1020
      %v1174 = vsel %vm1095, %v613, %v1022
      %v1175 = vsel %vm1095, %v616, %v1024
      %v1176 = vsel %vm1095, %v618, %v1026
      %v1177 = vsel %vm1095, %v621, %v1028
      %v1178 = vsel %vm1095, %v623, %v1030
      %v1179 = vsel %vm1095, %v626, %v1032
      %v1180 = vsel %vm1095, %v628, %v1034
      %v1181 = vsel %vm1095, %v631, %v1036
      %v1182 = vsel %vm1095, %v633, %v1038
      %v1183 = vsel %vm1095, %v636, %v1040
      %v1184 = vsel %vm1095, %v638, %v1042
      %v1185 = vsel %vm1095, %v641, %v1044
      %v1186 = vsel %vm1095, %v643, %v1046
      %v1187 = vsel %vm1095, %v646, %v1048
      %v1188 = vsel %vm1095, %v648, %v1050
      %v1189 = vsel %vm1095, %v951, %v1052
      %v1190 = vsel %vm1095, %v953, %v1054
      %v1191 = vsel %vm1095, %v523, %v1088
      %v1192 = vsel %vm1095, %v459, %v1090
      %v1193 = vpack.c.bf16 %v1096, %v1096
      %v1194 = vpack.c.bf16 %v1128, %v1127
      %v1195 = vpack.c.bf16 %v1160, %v1159
      %v1196 = vpack.c.bf16 %v1100, %v1099
      %v1197 = vpack.c.bf16 %v754, %v752
      %v1198 = vpack.c.bf16 %v1098, %v1097
      %v1199 = vpack.c.bf16 %v1130, %v1129
      %v1200 = vpack.c.bf16 %v1162, %v1161
      %v1201 = vpack.c.bf16 %v1102, %v1101
      %v1202 = vpack.c.bf16 %v759, %v757
      %v1203 = vpack.c.bf16 %v1132, %v1131
      %v1204 = vpack.c.bf16 %v1164, %v1163
      %v1205 = vpack.c.bf16 %v1104, %v1103
      %v1206 = vpack.c.bf16 %v764, %v762
      %v1207 = vpack.c.bf16 %v1134, %v1133
      %v1208 = vpack.c.bf16 %v1166, %v1165
      %v1209 = vpack.c.bf16 %v1106, %v1105
      %v1210 = vpack.c.bf16 %v769, %v767
      %v1211 = vpack.c.bf16 %v1136, %v1135
      %v1212 = vpack.c.bf16 %v1168, %v1167
      %v1213 = vpack.c.bf16 %v1108, %v1107
      %v1214 = vpack.c.bf16 %v774, %v772
      %v1215 = vpack.c.bf16 %v1138, %v1137
      %v1216 = vpack.c.bf16 %v1170, %v1169
      %v1217 = vpack.c.bf16 %v1110, %v1109
      %v1218 = vpack.c.bf16 %v779, %v777
      %v1219 = vpack.c.bf16 %v1140, %v1139
      %v1220 = vpack.c.bf16 %v1172, %v1171
      %v1221 = vpack.c.bf16 %v1112, %v1111
      %v1222 = vpack.c.bf16 %v784, %v782
      %v1223 = vpack.c.bf16 %v1142, %v1141
      %v1224 = vpack.c.bf16 %v1174, %v1173
      %v1225 = vpack.c.bf16 %v1114, %v1113
      %v1226 = vpack.c.bf16 %v789, %v787
      %v1227 = vpack.c.bf16 %v1144, %v1143
      %v1228 = vpack.c.bf16 %v1176, %v1175
      %v1229 = vpack.c.bf16 %v1116, %v1115
      %v1230 = vpack.c.bf16 %v794, %v792
      %v1231 = vpack.c.bf16 %v1146, %v1145
      %v1232 = vpack.c.bf16 %v1178, %v1177
      %v1233 = vpack.c.bf16 %v1118, %v1117
      %v1234 = vpack.c.bf16 %v799, %v797
      %v1235 = vpack.c.bf16 %v1148, %v1147
      %v1236 = vpack.c.bf16 %v1180, %v1179
      %v1237 = vpack.c.bf16 %v1120, %v1119
      %v1238 = vpack.c.bf16 %v804, %v802
      %v1239 = vpack.c.bf16 %v1150, %v1149
      %v1240 = vpack.c.bf16 %v1182, %v1181
      %v1241 = vpack.c.bf16 %v1122, %v1121
      %v1242 = vpack.c.bf16 %v809, %v807
      %v1243 = vpack.c.bf16 %v1152, %v1151
      %v1244 = vpack.c.bf16 %v1184, %v1183
      %v1245 = vpack.c.bf16 %v1124, %v1123
      %v1246 = vpack.c.bf16 %v814, %v812
      %v1247 = vpack.c.bf16 %v1154, %v1153
      %v1248 = vpack.c.bf16 %v1186, %v1185
      %v1249 = vpack.c.bf16 %v1126, %v1125
      %v1250 = vpack.c.bf16 %v819, %v817
      %v1251 = vpack.c.bf16 %v1156, %v1155
      %v1252 = vpack.c.bf16 %v1188, %v1187
      %v1253 = vpack.c.bf16 %v1192, %v1191
      %v1254 = vpack.c.bf16 %v990, %v988
      %v1255 = vpack.c.bf16 %v1158, %v1157
      %v1256 = vpack.c.bf16 %v1190, %v1189
      %v1257 = vpack.c.bf16 %v744, %v744
      %v1258 = vld [vmem:[%s1] sm:$0xf]
      %v1259 = vld [vmem:[%s1 + $0x4] sm:$0xf]
      %v1260 = vld [vmem:[%s1 + $0x8] sm:$0xf]
      %v1261 = vld [vmem:[%s1 + $0xc] sm:$0xf]
      %v1262 = vld [vmem:[%s1 + $0x10] sm:$0xf]
      %v1263 = vld [vmem:[%s1 + $0x14] sm:$0xf]
      %v1264 = vld [vmem:[%s1 + $0x18] sm:$0xf]
      %v1265 = vld [vmem:[%s1 + $0x1c] sm:$0xf]
      %v1266 = vld [vmem:[%s1 + $0x20] sm:$0xf]
      %v1267 = vld [vmem:[%s1 + $0x24] sm:$0xf]
      %v1268 = vld [vmem:[%s1 + $0x28] sm:$0xf]
      %v1269 = vld [vmem:[%s1 + $0x2c] sm:$0xf]
      %v1270 = vld [vmem:[%s1 + $0x30] sm:$0xf]
      %v1271 = vld [vmem:[%s1 + $0x34] sm:$0xf]
      %v1272 = vld [vmem:[%s1 + $0x38] sm:$0xf]
      %v1273 = vld [vmem:[%s1 + $0x3c] sm:$0xf]
      %v1274 = vld [vmem:[%s1 + $0x40] sm:$0xf]
      %v1275 = vld [vmem:[%s1 + $0x44] sm:$0xf]
      %v1276 = vld [vmem:[%s1 + $0x48] sm:$0xf]
      %v1277 = vld [vmem:[%s1 + $0x4c] sm:$0xf]
      %v1278 = vld [vmem:[%s1 + $0x50] sm:$0xf]
      %v1279 = vld [vmem:[%s1 + $0x54] sm:$0xf]
      %v1280 = vld [vmem:[%s1 + $0x58] sm:$0xf]
      %v1281 = vld [vmem:[%s1 + $0x5c] sm:$0xf]
      %v1282 = vld [vmem:[%s1 + $0x60] sm:$0xf]
      %v1283 = vld [vmem:[%s1 + $0x64] sm:$0xf]
      %v1284 = vld [vmem:[%s1 + $0x68] sm:$0xf]
      %v1285 = vld [vmem:[%s1 + $0x6c] sm:$0xf]
      %v1286 = vld [vmem:[%s1 + $0x70] sm:$0xf]
      %v1287 = vld [vmem:[%s1 + $0x74] sm:$0xf]
      %v1288 = vld [vmem:[%s1 + $0x78] sm:$0xf]
      %v1289 = vld [vmem:[%s1 + $0x7c] sm:$0xf]
      %v1290 = vld [vmem:[%s1 + $0x80] sm:$0xf]
      %v1291 = vld [vmem:[%s1 + $0x84] sm:$0xf]
      %v1292 = vld [vmem:[%s1 + $0x88] sm:$0xf]
      %v1293 = vld [vmem:[%s1 + $0x8c] sm:$0xf]
      %v1294 = vld [vmem:[%s1 + $0x90] sm:$0xf]
      %v1295 = vld [vmem:[%s1 + $0x94] sm:$0xf]
      %v1296 = vld [vmem:[%s1 + $0x98] sm:$0xf]
      %v1297 = vld [vmem:[%s1 + $0x9c] sm:$0xf]
      %v1298 = vld [vmem:[%s1 + $0xa0] sm:$0xf]
      %v1299 = vld [vmem:[%s1 + $0xa4] sm:$0xf]
      %v1300 = vld [vmem:[%s1 + $0xa8] sm:$0xf]
      %v1301 = vld [vmem:[%s1 + $0xac] sm:$0xf]
      %v1302 = vld [vmem:[%s1 + $0xb0] sm:$0xf]
      %v1303 = vld [vmem:[%s1 + $0xb4] sm:$0xf]
      %v1304 = vld [vmem:[%s1 + $0xb8] sm:$0xf]
      %v1305 = vld [vmem:[%s1 + $0xbc] sm:$0xf]
      %v1306 = vld [vmem:[%s1 + $0xc0] sm:$0xf]
      %v1307 = vld [vmem:[%s1 + $0xc4] sm:$0xf]
      %v1308 = vld [vmem:[%s1 + $0xc8] sm:$0xf]
      %v1309 = vld [vmem:[%s1 + $0xcc] sm:$0xf]
      %v1310 = vld [vmem:[%s1 + $0xd0] sm:$0xf]
      %v1311 = vld [vmem:[%s1 + $0xd4] sm:$0xf]
      %v1312 = vld [vmem:[%s1 + $0xd8] sm:$0xf]
      %v1313 = vld [vmem:[%s1 + $0xdc] sm:$0xf]
      %v1314 = vld [vmem:[%s1 + $0xe0] sm:$0xf]
      %v1315 = vld [vmem:[%s1 + $0xe4] sm:$0xf]
      %v1316 = vld [vmem:[%s1 + $0xe8] sm:$0xf]
      %v1317 = vld [vmem:[%s1 + $0xec] sm:$0xf]
      %v1318 = vld [vmem:[%s1 + $0xf0] sm:$0xf]
      %v1319 = vld [vmem:[%s1 + $0xf4] sm:$0xf]
      %v1320 = vld [vmem:[%s1 + $0xf8] sm:$0xf]
      %v1321 = vld [vmem:[%s1 + $0xfc] sm:$0xf]
      %v1322 = vld [vmem:[%s1 + $0x100] sm:$0xf]
      %v1323 = vld [vmem:[%s1 + $0x104] sm:$0xf]
      %v1324 = vld [vmem:[%s1 + $0x108] sm:$0xf]
      %v1325 = vld [vmem:[%s1 + $0x10c] sm:$0xf]
      %v1326 = vld [vmem:[%s1 + $0x110] sm:$0xf]
      %v1327 = vld [vmem:[%s1 + $0x114] sm:$0xf]
      %v1328 = vld [vmem:[%s1 + $0x118] sm:$0xf]
      %v1329 = vld [vmem:[%s1 + $0x11c] sm:$0xf]
      %v1402 = vunpack.c.l.b16 %v1258
      %v1403 = vunpack.c.l.b16 %v1259
      %v1404 = vunpack.c.l.b16 %v1260
      %v1405 = vunpack.c.l.b16 %v1261
      %v1406 = vunpack.c.l.b16 %v1262
      %v1407 = vunpack.c.l.b16 %v1263
      %v1408 = vunpack.c.l.b16 %v1264
      %v1409 = vunpack.c.l.b16 %v1265
      %v1410 = vunpack.c.l.b16 %v1266
      %v1411 = vunpack.c.l.b16 %v1267
      %v1412 = vunpack.c.l.b16 %v1268
      %v1413 = vunpack.c.l.b16 %v1269
      %v1414 = vunpack.c.l.b16 %v1270
      %v1415 = vunpack.c.l.b16 %v1271
      %v1416 = vunpack.c.l.b16 %v1272
      %v1417 = vunpack.c.l.b16 %v1273
      %v1418 = vunpack.c.l.b16 %v1274
      %v1419 = vunpack.c.l.b16 %v1275
      %v1420 = vunpack.c.l.b16 %v1276
      %v1421 = vunpack.c.l.b16 %v1277
      %v1422 = vunpack.c.l.b16 %v1278
      %v1423 = vunpack.c.l.b16 %v1279
      %v1424 = vunpack.c.l.b16 %v1280
      %v1425 = vunpack.c.l.b16 %v1281
      %v1426 = vunpack.c.l.b16 %v1282
      %v1427 = vunpack.c.l.b16 %v1283
      %v1428 = vunpack.c.l.b16 %v1284
      %v1429 = vunpack.c.l.b16 %v1285
      %v1430 = vunpack.c.l.b16 %v1286
      %v1431 = vunpack.c.l.b16 %v1287
      %v1432 = vunpack.c.l.b16 %v1288
      %v1433 = vunpack.c.l.b16 %v1289
      %v1434 = vunpack.c.l.b16 %v1290
      %v1435 = vunpack.c.l.b16 %v1291
      %v1436 = vunpack.c.l.b16 %v1292
      %v1437 = vunpack.c.l.b16 %v1293
      %v1438 = vunpack.c.l.b16 %v1294
      %v1439 = vunpack.c.l.b16 %v1295
      %v1440 = vunpack.c.l.b16 %v1296
      %v1441 = vunpack.c.l.b16 %v1297
      %v1442 = vunpack.c.l.b16 %v1298
      %v1443 = vunpack.c.l.b16 %v1299
      %v1444 = vunpack.c.l.b16 %v1300
      %v1445 = vunpack.c.l.b16 %v1301
      %v1446 = vunpack.c.l.b16 %v1302
      %v1447 = vunpack.c.l.b16 %v1303
      %v1448 = vunpack.c.l.b16 %v1304
      %v1449 = vunpack.c.l.b16 %v1305
      %v1450 = vunpack.c.l.b16 %v1306
      %v1451 = vunpack.c.l.b16 %v1307
      %v1452 = vunpack.c.l.b16 %v1308
      %v1453 = vunpack.c.l.b16 %v1309
      %v1454 = vunpack.c.l.b16 %v1310
      %v1455 = vunpack.c.l.b16 %v1311
      %v1456 = vunpack.c.l.b16 %v1312
      %v1457 = vunpack.c.l.b16 %v1313
      %v1458 = vunpack.c.l.b16 %v1314
      %v1459 = vunpack.c.l.b16 %v1315
      %v1460 = vunpack.c.l.b16 %v1316
      %v1461 = vunpack.c.l.b16 %v1317
      %v1462 = vunpack.c.l.b16 %v1318
      %v1463 = vunpack.c.l.b16 %v1319
      %v1464 = vunpack.c.l.b16 %v1320
      %v1465 = vunpack.c.l.b16 %v1321
      %v1466 = vunpack.c.l.b16 %v1322
      %v1467 = vunpack.c.l.b16 %v1323
      %v1468 = vunpack.c.l.b16 %v1324
      %v1469 = vunpack.c.l.b16 %v1325
      %v1470 = vunpack.c.l.b16 %v1326
      %v1471 = vunpack.c.l.b16 %v1327
      %v1472 = vunpack.c.l.b16 %v1328
      %v1473 = vunpack.c.l.b16 %v1329
      %v1474 = vpack.c.b16 %v1403, %v1402
      %v1475 = vpack.c.b16 %v1405, %v1404
      %v1476 = vpack.c.b16 %v1407, %v1406
      %v1477 = vpack.c.b16 %v1409, %v1408
      %v1478 = vpack.c.b16 %v1411, %v1410
      %v1479 = vpack.c.b16 %v1413, %v1412
      %v1480 = vpack.c.b16 %v1415, %v1414
      %v1481 = vpack.c.b16 %v1417, %v1416
      %v1482 = vpack.c.b16 %v1419, %v1418
      %v1483 = vpack.c.b16 %v1421, %v1420
      %v1484 = vpack.c.b16 %v1423, %v1422
      %v1485 = vpack.c.b16 %v1425, %v1424
      %v1486 = vpack.c.b16 %v1427, %v1426
      %v1487 = vpack.c.b16 %v1429, %v1428
      %v1488 = vpack.c.b16 %v1431, %v1430
      %v1489 = vpack.c.b16 %v1433, %v1432
      %v1490 = vpack.c.b16 %v1435, %v1434
      %v1491 = vpack.c.b16 %v1437, %v1436
      %v1492 = vpack.c.b16 %v1439, %v1438
      %v1493 = vpack.c.b16 %v1441, %v1440
      %v1494 = vpack.c.b16 %v1443, %v1442
      %v1495 = vpack.c.b16 %v1445, %v1444
      %v1496 = vpack.c.b16 %v1447, %v1446
      %v1497 = vpack.c.b16 %v1449, %v1448
      %v1498 = vpack.c.b16 %v1451, %v1450
      %v1499 = vpack.c.b16 %v1453, %v1452
      %v1500 = vpack.c.b16 %v1455, %v1454
      %v1501 = vpack.c.b16 %v1457, %v1456
      %v1502 = vpack.c.b16 %v1459, %v1458
      %v1503 = vpack.c.b16 %v1461, %v1460
      %v1504 = vpack.c.b16 %v1463, %v1462
      %v1505 = vpack.c.b16 %v1465, %v1464
      %v1506 = vpack.c.b16 %v1467, %v1466
      %v1507 = vpack.c.b16 %v1469, %v1468
      %v1508 = vpack.c.b16 %v1471, %v1470
      %v1509 = vpack.c.b16 %v1473, %v1472
      %v1547 = vsel %vm1095, %v1197, 0
      %v1550 = vsel %vm1095, %v1202, 0
      %v1553 = vsel %vm1095, %v1206, 0
      %v1556 = vsel %vm1095, %v1210, 0
      %v1559 = vsel %vm1095, %v1214, 0
      %v1562 = vsel %vm1095, %v1218, 0
      %v1565 = vsel %vm1095, %v1222, 0
      %v1568 = vsel %vm1095, %v1226, 0
      %v1571 = vsel %vm1095, %v1230, 0
      %v1574 = vsel %vm1095, %v1234, 0
      %v1577 = vsel %vm1095, %v1238, 0
      %v1580 = vsel %vm1095, %v1242, 0
      %v1583 = vsel %vm1095, %v1246, 0
      %v1586 = vsel %vm1095, %v1250, 0
      %v1589 = vsel %vm1095, %v1254, 0
      %v1592 = vsel %vm1095, %v1257, 0
      %1594 = vmatprep.subr.bf16.mxu0 0
      %1595 = vmatpush1.bf16.msra.mxu0 %v1474
      %1596 = vmatprep.subr.bf16.mxu0 0
      %1597 = vmatpush1.bf16.msra.mxu0 %v1475
      %1598 = vmatprep.subr.bf16.mxu0 0
      %1599 = vmatpush1.bf16.msra.mxu0 %v1476
      %1600 = vmatprep.subr.bf16.mxu0 0
      %1601 = vmatpush1.bf16.msra.mxu0 %v1477
      %1602 = vmatprep.subr.bf16.mxu0 0
      %1603 = vmatpush1.bf16.msra.mxu0 %v1478
      %1604 = vmatprep.subr.bf16.mxu0 0
      %1605 = vmatpush1.bf16.msra.mxu0 %v1479
      %1606 = vmatprep.subr.bf16.mxu0 0
      %1607 = vmatpush1.bf16.msra.mxu0 %v1480
      %1608 = vmatprep.subr.bf16.mxu0 0
      %1609 = vmatpush1.bf16.msra.mxu0 %v1481
      %1610 = vmatprep.subr.bf16.mxu0 0
      %1611 = vmatpush1.bf16.msra.mxu0 %v1482
      %1612 = vmatprep.subr.bf16.mxu0 0
      %1613 = vmatpush1.bf16.msra.mxu0 %v1483
      %1614 = vmatprep.subr.bf16.mxu0 0
      %1615 = vmatpush1.bf16.msra.mxu0 %v1484
      %1616 = vmatprep.subr.bf16.mxu0 0
      %1617 = vmatpush1.bf16.msra.mxu0 %v1485
      %1618 = vmatprep.subr.bf16.mxu0 0
      %1619 = vmatpush1.bf16.msra.mxu0 %v1486
      %1620 = vmatprep.subr.bf16.mxu0 0
      %1621 = vmatpush1.bf16.msra.mxu0 %v1487
      %1622 = vmatprep.subr.bf16.mxu0 0
      %1623 = vmatpush1.bf16.msra.mxu0 %v1488
      %1624 = vmatprep.subr.bf16.mxu0 0
      %1625 = vmatpush1.bf16.msra.mxu0 %v1489
      %1626 = vmatprep.mubr.bf16.mxu0 %v1194
      %1627 = vmatmul.mubr.bf16.gmra.mrb[0].mxu0 %v1193
      %v1628 = vpop.f32.mrb[0].mxu0
      %v1629 = vadd.f32 0.0, %v1628
      %v1630 = vpop.f32.mrb[0].mxu0
      %v1631 = vpop.f32.mrb[0].mxu0
      %v1632 = vadd.f32 0.0, %v1631
      %v1633 = vpop.f32.mrb[0].mxu0
      %1634 = vmatprep.mubr.bf16.mxu0 %v1199
      %1635 = vmatmul.mubr.bf16.gmra.mrb[0].mxu0 %v1198
      %v1636 = vpop.f32.mrb[0].mxu0
      %v1637 = vadd.f32 0.0, %v1636
      %v1638 = vpop.f32.mrb[0].mxu0
      %v1639 = vpop.f32.mrb[0].mxu0
      %v1640 = vadd.f32 0.0, %v1639
      %v1641 = vpop.f32.mrb[0].mxu0
      %1642 = vmatprep.mubr.bf16.mxu0 %v1203
      %1643 = vmatmul.mubr.bf16.gmra.mrb[0].mxu0 %v1196
      %v1644 = vpop.f32.mrb[0].mxu0
      %v1645 = vadd.f32 0.0, %v1644
      %v1646 = vpop.f32.mrb[0].mxu0
      %v1647 = vpop.f32.mrb[0].mxu0
      %v1648 = vadd.f32 0.0, %v1647
      %v1649 = vpop.f32.mrb[0].mxu0
      %1650 = vmatprep.mubr.bf16.mxu0 %v1207
      %1651 = vmatmul.mubr.bf16.gmra.mrb[0].mxu0 %v1201
      %v1652 = vpop.f32.mrb[0].mxu0
      %v1653 = vadd.f32 0.0, %v1652
      %v1654 = vpop.f32.mrb[0].mxu0
      %v1655 = vpop.f32.mrb[0].mxu0
      %v1656 = vadd.f32 0.0, %v1655
      %v1657 = vpop.f32.mrb[0].mxu0
      %1658 = vmatprep.mubr.bf16.mxu0 %v1211
      %1659 = vmatmul.mubr.bf16.gmra.mrb[0].mxu0 %v1205
      %v1660 = vpop.f32.mrb[0].mxu0
      %v1661 = vadd.f32 0.0, %v1660
      %v1662 = vpop.f32.mrb[0].mxu0
      %v1663 = vpop.f32.mrb[0].mxu0
      %v1664 = vadd.f32 0.0, %v1663
      %v1665 = vpop.f32.mrb[0].mxu0
      %1666 = vmatprep.mubr.bf16.mxu0 %v1215
      %1667 = vmatmul.mubr.bf16.gmra.mrb[0].mxu0 %v1209
      %v1668 = vpop.f32.mrb[0].mxu0
      %v1669 = vadd.f32 0.0, %v1668
      %v1670 = vpop.f32.mrb[0].mxu0
      %v1671 = vpop.f32.mrb[0].mxu0
      %v1672 = vadd.f32 0.0, %v1671
      %v1673 = vpop.f32.mrb[0].mxu0
      %1674 = vmatprep.mubr.bf16.mxu0 %v1219
      %1675 = vmatmul.mubr.bf16.gmra.mrb[0].mxu0 %v1213
      %v1676 = vpop.f32.mrb[0].mxu0
      %v1677 = vadd.f32 0.0, %v1676
      %v1678 = vpop.f32.mrb[0].mxu0
      %v1679 = vpop.f32.mrb[0].mxu0
      %v1680 = vadd.f32 0.0, %v1679
      %v1681 = vpop.f32.mrb[0].mxu0
      %1682 = vmatprep.mubr.bf16.mxu0 %v1223
      %1683 = vmatmul.mubr.bf16.gmra.mrb[0].mxu0 %v1217
      %v1684 = vpop.f32.mrb[0].mxu0
      %v1685 = vadd.f32 0.0, %v1684
      %v1686 = vpop.f32.mrb[0].mxu0
      %v1687 = vpop.f32.mrb[0].mxu0
      %v1688 = vadd.f32 0.0, %v1687
      %v1689 = vpop.f32.mrb[0].mxu0
      %1690 = vmatprep.mubr.bf16.mxu0 %v1227
      %1691 = vmatmul.mubr.bf16.gmra.mrb[0].mxu0 %v1221
      %v1692 = vpop.f32.mrb[0].mxu0
      %v1693 = vadd.f32 0.0, %v1692
      %v1694 = vpop.f32.mrb[0].mxu0
      %v1695 = vpop.f32.mrb[0].mxu0
      %v1696 = vadd.f32 0.0, %v1695
      %v1697 = vpop.f32.mrb[0].mxu0
      %1698 = vmatprep.mubr.bf16.mxu0 %v1231
      %1699 = vmatmul.mubr.bf16.gmra.mrb[0].mxu0 %v1225
      %v1700 = vpop.f32.mrb[0].mxu0
      %v1701 = vadd.f32 0.0, %v1700
      %v1702 = vpop.f32.mrb[0].mxu0
      %v1703 = vpop.f32.mrb[0].mxu0
      %v1704 = vadd.f32 0.0, %v1703
      %v1705 = vpop.f32.mrb[0].mxu0
      %1706 = vmatprep.mubr.bf16.mxu0 %v1235
      %1707 = vmatmul.mubr.bf16.gmra.mrb[0].mxu0 %v1229
      %v1708 = vpop.f32.mrb[0].mxu0
      %v1709 = vadd.f32 0.0, %v1708
      %v1710 = vpop.f32.mrb[0].mxu0
      %v1711 = vpop.f32.mrb[0].mxu0
      %v1712 = vadd.f32 0.0, %v1711
      %v1713 = vpop.f32.mrb[0].mxu0
      %1714 = vmatprep.mubr.bf16.mxu0 %v1239
      %1715 = vmatmul.mubr.bf16.gmra.mrb[0].mxu0 %v1233
      %v1716 = vpop.f32.mrb[0].mxu0
      %v1717 = vadd.f32 0.0, %v1716
      %v1718 = vpop.f32.mrb[0].mxu0
      %v1719 = vpop.f32.mrb[0].mxu0
      %v1720 = vadd.f32 0.0, %v1719
      %v1721 = vpop.f32.mrb[0].mxu0
      %1722 = vmatprep.mubr.bf16.mxu0 %v1243
      %1723 = vmatmul.mubr.bf16.gmra.mrb[0].mxu0 %v1237
      %v1724 = vpop.f32.mrb[0].mxu0
      %v1725 = vadd.f32 0.0, %v1724
      %v1726 = vpop.f32.mrb[0].mxu0
      %v1727 = vpop.f32.mrb[0].mxu0
      %v1728 = vadd.f32 0.0, %v1727
      %v1729 = vpop.f32.mrb[0].mxu0
      %1730 = vmatprep.mubr.bf16.mxu0 %v1247
      %1731 = vmatmul.mubr.bf16.gmra.mrb[0].mxu0 %v1241
      %v1732 = vpop.f32.mrb[0].mxu0
      %v1733 = vadd.f32 0.0, %v1732
      %v1734 = vpop.f32.mrb[0].mxu0
      %v1735 = vpop.f32.mrb[0].mxu0
      %v1736 = vadd.f32 0.0, %v1735
      %v1737 = vpop.f32.mrb[0].mxu0
      %1738 = vmatprep.mubr.bf16.mxu0 %v1251
      %1739 = vmatmul.mubr.bf16.gmra.mrb[0].mxu0 %v1245
      %v1740 = vpop.f32.mrb[0].mxu0
      %v1741 = vadd.f32 0.0, %v1740
      %v1742 = vpop.f32.mrb[0].mxu0
      %v1743 = vpop.f32.mrb[0].mxu0
      %v1744 = vadd.f32 0.0, %v1743
      %v1745 = vpop.f32.mrb[0].mxu0
      %1746 = vmatprep.mubr.bf16.mxu0 %v1255
      %1747 = vmatmul.mubr.bf16.gmra.mrb[0].mxu0 %v1249
      %v1748 = vpop.f32.mrb[0].mxu0
      %v1749 = vadd.f32 0.0, %v1748
      %v1750 = vpop.f32.mrb[0].mxu0
      %v1751 = vpop.f32.mrb[0].mxu0
      %v1752 = vadd.f32 0.0, %v1751
      %v1753 = vpop.f32.mrb[0].mxu0
      %1754 = vdwg.mxu0
      %1755 = vmatprep.subr.bf16.mxu0 0
      %1756 = vmatpush1.bf16.msra.mxu0 %v1490
      %1757 = vmatprep.subr.bf16.mxu0 0
      %1758 = vmatpush1.bf16.msra.mxu0 %v1491
      %1759 = vmatprep.subr.bf16.mxu0 0
      %1760 = vmatpush1.bf16.msra.mxu0 %v1492
      %1761 = vmatprep.subr.bf16.mxu0 0
      %1762 = vmatpush1.bf16.msra.mxu0 %v1493
      %1763 = vmatprep.subr.bf16.mxu0 0
      %1764 = vmatpush1.bf16.msra.mxu0 %v1494
      %1765 = vmatprep.subr.bf16.mxu0 0
      %1766 = vmatpush1.bf16.msra.mxu0 %v1495
      %1767 = vmatprep.subr.bf16.mxu0 0
      %1768 = vmatpush1.bf16.msra.mxu0 %v1496
      %1769 = vmatprep.subr.bf16.mxu0 0
      %1770 = vmatpush1.bf16.msra.mxu0 %v1497
      %1771 = vmatprep.subr.bf16.mxu0 0
      %1772 = vmatpush1.bf16.msra.mxu0 %v1498
      %1773 = vmatprep.subr.bf16.mxu0 0
      %1774 = vmatpush1.bf16.msra.mxu0 %v1499
      %1775 = vmatprep.subr.bf16.mxu0 0
      %1776 = vmatpush1.bf16.msra.mxu0 %v1500
      %1777 = vmatprep.subr.bf16.mxu0 0
      %1778 = vmatpush1.bf16.msra.mxu0 %v1501
      %1779 = vmatprep.subr.bf16.mxu0 0
      %1780 = vmatpush1.bf16.msra.mxu0 %v1502
      %1781 = vmatprep.subr.bf16.mxu0 0
      %1782 = vmatpush1.bf16.msra.mxu0 %v1503
      %1783 = vmatprep.subr.bf16.mxu0 0
      %1784 = vmatpush1.bf16.msra.mxu0 %v1504
      %1785 = vmatprep.subr.bf16.mxu0 0
      %1786 = vmatpush1.bf16.msra.mxu0 %v1505
      %1787 = vmatprep.mubr.bf16.mxu0 %v1196
      %1788 = vmatmul.mubr.bf16.gmra.mrb[0].mxu0 %v1195
      %v1789 = vpop.f32.mrb[0].mxu0
      %v1790 = vadd.f32 %v1629, %v1789
      %v1791 = vpop.f32.mrb[0].mxu0
      %v1792 = vpop.f32.mrb[0].mxu0
      %v1793 = vadd.f32 %v1632, %v1792
      %v1794 = vpop.f32.mrb[0].mxu0
      %1795 = vmatprep.mubr.bf16.mxu0 %v1201
      %1796 = vmatmul.mubr.bf16.gmra.mrb[0].mxu0 %v1200
      %v1797 = vpop.f32.mrb[0].mxu0
      %v1798 = vadd.f32 %v1637, %v1797
      %v1799 = vpop.f32.mrb[0].mxu0
      %v1800 = vpop.f32.mrb[0].mxu0
      %v1801 = vadd.f32 %v1640, %v1800
      %v1802 = vpop.f32.mrb[0].mxu0
      %1803 = vmatprep.mubr.bf16.mxu0 %v1205
      %1804 = vmatmul.mubr.bf16.gmra.mrb[0].mxu0 %v1204
      %v1805 = vpop.f32.mrb[0].mxu0
      %v1806 = vadd.f32 %v1645, %v1805
      %v1807 = vpop.f32.mrb[0].mxu0
      %v1808 = vpop.f32.mrb[0].mxu0
      %v1809 = vadd.f32 %v1648, %v1808
      %v1810 = vpop.f32.mrb[0].mxu0
      %1811 = vmatprep.mubr.bf16.mxu0 %v1209
      %1812 = vmatmul.mubr.bf16.gmra.mrb[0].mxu0 %v1208
      %v1813 = vpop.f32.mrb[0].mxu0
      %v1814 = vadd.f32 %v1653, %v1813
      %v1815 = vpop.f32.mrb[0].mxu0
      %v1816 = vpop.f32.mrb[0].mxu0
      %v1817 = vadd.f32 %v1656, %v1816
      %v1818 = vpop.f32.mrb[0].mxu0
      %1819 = vmatprep.mubr.bf16.mxu0 %v1213
      %1820 = vmatmul.mubr.bf16.gmra.mrb[0].mxu0 %v1212
      %v1821 = vpop.f32.mrb[0].mxu0
      %v1822 = vadd.f32 %v1661, %v1821
      %v1823 = vpop.f32.mrb[0].mxu0
      %v1824 = vpop.f32.mrb[0].mxu0
      %v1825 = vadd.f32 %v1664, %v1824
      %v1826 = vpop.f32.mrb[0].mxu0
      %1827 = vmatprep.mubr.bf16.mxu0 %v1217
      %1828 = vmatmul.mubr.bf16.gmra.mrb[0].mxu0 %v1216
      %v1829 = vpop.f32.mrb[0].mxu0
      %v1830 = vadd.f32 %v1669, %v1829
      %v1831 = vpop.f32.mrb[0].mxu0
      %v1832 = vpop.f32.mrb[0].mxu0
      %v1833 = vadd.f32 %v1672, %v1832
      %v1834 = vpop.f32.mrb[0].mxu0
      %1835 = vmatprep.mubr.bf16.mxu0 %v1221
      %1836 = vmatmul.mubr.bf16.gmra.mrb[0].mxu0 %v1220
      %v1837 = vpop.f32.mrb[0].mxu0
      %v1838 = vadd.f32 %v1677, %v1837
      %v1839 = vpop.f32.mrb[0].mxu0
      %v1840 = vpop.f32.mrb[0].mxu0
      %v1841 = vadd.f32 %v1680, %v1840
      %v1842 = vpop.f32.mrb[0].mxu0
      %1843 = vmatprep.mubr.bf16.mxu0 %v1225
      %1844 = vmatmul.mubr.bf16.gmra.mrb[0].mxu0 %v1224
      %v1845 = vpop.f32.mrb[0].mxu0
      %v1846 = vadd.f32 %v1685, %v1845
      %v1847 = vpop.f32.mrb[0].mxu0
      %v1848 = vpop.f32.mrb[0].mxu0
      %v1849 = vadd.f32 %v1688, %v1848
      %v1850 = vpop.f32.mrb[0].mxu0
      %1851 = vmatprep.mubr.bf16.mxu0 %v1229
      %1852 = vmatmul.mubr.bf16.gmra.mrb[0].mxu0 %v1228
      %v1853 = vpop.f32.mrb[0].mxu0
      %v1854 = vadd.f32 %v1693, %v1853
      %v1855 = vpop.f32.mrb[0].mxu0
      %v1856 = vpop.f32.mrb[0].mxu0
      %v1857 = vadd.f32 %v1696, %v1856
      %v1858 = vpop.f32.mrb[0].mxu0
      %1859 = vmatprep.mubr.bf16.mxu0 %v1233
      %1860 = vmatmul.mubr.bf16.gmra.mrb[0].mxu0 %v1232
      %v1861 = vpop.f32.mrb[0].mxu0
      %v1862 = vadd.f32 %v1701, %v1861
      %v1863 = vpop.f32.mrb[0].mxu0
      %v1864 = vpop.f32.mrb[0].mxu0
      %v1865 = vadd.f32 %v1704, %v1864
      %v1866 = vpop.f32.mrb[0].mxu0
      %1867 = vmatprep.mubr.bf16.mxu0 %v1237
      %1868 = vmatmul.mubr.bf16.gmra.mrb[0].mxu0 %v1236
      %v1869 = vpop.f32.mrb[0].mxu0
      %v1870 = vadd.f32 %v1709, %v1869
      %v1871 = vpop.f32.mrb[0].mxu0
      %v1872 = vpop.f32.mrb[0].mxu0
      %v1873 = vadd.f32 %v1712, %v1872
      %v1874 = vpop.f32.mrb[0].mxu0
      %1875 = vmatprep.mubr.bf16.mxu0 %v1241
      %1876 = vmatmul.mubr.bf16.gmra.mrb[0].mxu0 %v1240
      %v1877 = vpop.f32.mrb[0].mxu0
      %v1878 = vadd.f32 %v1717, %v1877
      %v1879 = vpop.f32.mrb[0].mxu0
      %v1880 = vpop.f32.mrb[0].mxu0
      %v1881 = vadd.f32 %v1720, %v1880
      %v1882 = vpop.f32.mrb[0].mxu0
      %1883 = vmatprep.mubr.bf16.mxu0 %v1245
      %1884 = vmatmul.mubr.bf16.gmra.mrb[0].mxu0 %v1244
      %v1885 = vpop.f32.mrb[0].mxu0
      %v1886 = vadd.f32 %v1725, %v1885
      %v1887 = vpop.f32.mrb[0].mxu0
      %v1888 = vpop.f32.mrb[0].mxu0
      %v1889 = vadd.f32 %v1728, %v1888
      %v1890 = vpop.f32.mrb[0].mxu0
      %1891 = vmatprep.mubr.bf16.mxu0 %v1249
      %1892 = vmatmul.mubr.bf16.gmra.mrb[0].mxu0 %v1248
      %v1893 = vpop.f32.mrb[0].mxu0
      %v1894 = vadd.f32 %v1733, %v1893
      %v1895 = vpop.f32.mrb[0].mxu0
      %v1896 = vpop.f32.mrb[0].mxu0
      %v1897 = vadd.f32 %v1736, %v1896
      %v1898 = vpop.f32.mrb[0].mxu0
      %1899 = vmatprep.mubr.bf16.mxu0 %v1253
      %1900 = vmatmul.mubr.bf16.gmra.mrb[0].mxu0 %v1252
      %v1901 = vpop.f32.mrb[0].mxu0
      %v1902 = vadd.f32 %v1741, %v1901
      %v1903 = vpop.f32.mrb[0].mxu0
      %v1904 = vpop.f32.mrb[0].mxu0
      %v1905 = vadd.f32 %v1744, %v1904
      %v1906 = vpop.f32.mrb[0].mxu0
      %1907 = vmatprep.mubr.bf16.mxu0 %v1193
      %1908 = vmatmul.mubr.bf16.gmra.mrb[0].mxu0 %v1256
      %v1909 = vpop.f32.mrb[0].mxu0
      %v1910 = vadd.f32 %v1749, %v1909
      %v1911 = vpop.f32.mrb[0].mxu0
      %v1912 = vpop.f32.mrb[0].mxu0
      %v1913 = vadd.f32 %v1752, %v1912
      %v1914 = vpop.f32.mrb[0].mxu0
      %1915 = vdwg.mxu0
      %1916 = vmatprep.subr.bf16.mxu0 0
      %1917 = vmatpush1.bf16.msra.mxu0 %v1506
      %1918 = vmatprep.subr.bf16.mxu0 0
      %1919 = vmatpush1.bf16.msra.mxu0 %v1507
      %1920 = vmatprep.subr.bf16.mxu0 0
      %1921 = vmatpush1.bf16.msra.mxu0 %v1508
      %1922 = vmatprep.subr.bf16.mxu0 0
      %1923 = vmatpush1.bf16.msra.mxu0 %v1509
      %1924 = vmatprep.subr.bf16.mxu0 0
      %1925 = vmatpush1.bf16.msra.mxu0 0
      %1926 = vmatprep.subr.bf16.mxu0 0
      %1927 = vmatpush1.bf16.msra.mxu0 0
      %1928 = vmatprep.subr.bf16.mxu0 0
      %1929 = vmatpush1.bf16.msra.mxu0 0
      %1930 = vmatprep.subr.bf16.mxu0 0
      %1931 = vmatpush1.bf16.msra.mxu0 0
      %1932 = vmatprep.subr.bf16.mxu0 0
      %1933 = vmatpush1.bf16.msra.mxu0 0
      %1934 = vmatprep.subr.bf16.mxu0 0
      %1935 = vmatpush1.bf16.msra.mxu0 0
      %1936 = vmatprep.subr.bf16.mxu0 0
      %1937 = vmatpush1.bf16.msra.mxu0 0
      %1938 = vmatprep.subr.bf16.mxu0 0
      %1939 = vmatpush1.bf16.msra.mxu0 0
      %1940 = vmatprep.subr.bf16.mxu0 0
      %1941 = vmatpush1.bf16.msra.mxu0 0
      %1942 = vmatprep.subr.bf16.mxu0 0
      %1943 = vmatpush1.bf16.msra.mxu0 0
      %1944 = vmatprep.subr.bf16.mxu0 0
      %1945 = vmatpush1.bf16.msra.mxu0 0
      %1946 = vmatprep.subr.bf16.mxu0 0
      %1947 = vmatpush1.bf16.msra.mxu0 0
      %1948 = vmatprep.mubr.bf16.mxu0 0
      %1949 = vmatmul.mubr.bf16.gmra.mrb[0].mxu0 %v1547
      %v1950 = vpop.f32.mrb[0].mxu0
      %v1951 = vadd.f32 %v1790, %v1950
      %v1952 = vpop.f32.mrb[0].mxu0
      %v1953 = vpop.f32.mrb[0].mxu0
      %v1954 = vadd.f32 %v1793, %v1953
      %v1955 = vpop.f32.mrb[0].mxu0
      %1956 = vmatprep.mubr.bf16.mxu0 0
      %1957 = vmatmul.mubr.bf16.gmra.mrb[0].mxu0 %v1550
      %v1958 = vpop.f32.mrb[0].mxu0
      %v1959 = vadd.f32 %v1798, %v1958
      %v1960 = vpop.f32.mrb[0].mxu0
      %v1961 = vpop.f32.mrb[0].mxu0
      %v1962 = vadd.f32 %v1801, %v1961
      %v1963 = vpop.f32.mrb[0].mxu0
      %1964 = vmatprep.mubr.bf16.mxu0 0
      %1965 = vmatmul.mubr.bf16.gmra.mrb[0].mxu0 %v1553
      %v1966 = vpop.f32.mrb[0].mxu0
      %v1967 = vadd.f32 %v1806, %v1966
      %v1968 = vpop.f32.mrb[0].mxu0
      %v1969 = vpop.f32.mrb[0].mxu0
      %v1970 = vadd.f32 %v1809, %v1969
      %v1971 = vpop.f32.mrb[0].mxu0
      %1972 = vmatprep.mubr.bf16.mxu0 0
      %1973 = vmatmul.mubr.bf16.gmra.mrb[0].mxu0 %v1556
      %v1974 = vpop.f32.mrb[0].mxu0
      %v1975 = vadd.f32 %v1814, %v1974
      %v1976 = vpop.f32.mrb[0].mxu0
      %v1977 = vpop.f32.mrb[0].mxu0
      %v1978 = vadd.f32 %v1817, %v1977
      %v1979 = vpop.f32.mrb[0].mxu0
      %1980 = vmatprep.mubr.bf16.mxu0 0
      %1981 = vmatmul.mubr.bf16.gmra.mrb[0].mxu0 %v1559
      %v1982 = vpop.f32.mrb[0].mxu0
      %v1983 = vadd.f32 %v1822, %v1982
      %v1984 = vpop.f32.mrb[0].mxu0
      %v1985 = vpop.f32.mrb[0].mxu0
      %v1986 = vadd.f32 %v1825, %v1985
      %v1987 = vpop.f32.mrb[0].mxu0
      %1988 = vmatprep.mubr.bf16.mxu0 0
      %1989 = vmatmul.mubr.bf16.gmra.mrb[0].mxu0 %v1562
      %v1990 = vpop.f32.mrb[0].mxu0
      %v1991 = vadd.f32 %v1830, %v1990
      %v1992 = vpop.f32.mrb[0].mxu0
      %v1993 = vpop.f32.mrb[0].mxu0
      %v1994 = vadd.f32 %v1833, %v1993
      %v1995 = vpop.f32.mrb[0].mxu0
      %1996 = vmatprep.mubr.bf16.mxu0 0
      %1997 = vmatmul.mubr.bf16.gmra.mrb[0].mxu0 %v1565
      %v1998 = vpop.f32.mrb[0].mxu0
      %v1999 = vadd.f32 %v1838, %v1998
      %v2000 = vpop.f32.mrb[0].mxu0
      %v2001 = vpop.f32.mrb[0].mxu0
      %v2002 = vadd.f32 %v1841, %v2001
      %v2003 = vpop.f32.mrb[0].mxu0
      %2004 = vmatprep.mubr.bf16.mxu0 0
      %2005 = vmatmul.mubr.bf16.gmra.mrb[0].mxu0 %v1568
      %v2006 = vpop.f32.mrb[0].mxu0
      %v2007 = vadd.f32 %v1846, %v2006
      %v2008 = vpop.f32.mrb[0].mxu0
      %v2009 = vpop.f32.mrb[0].mxu0
      %v2010 = vadd.f32 %v1849, %v2009
      %v2011 = vpop.f32.mrb[0].mxu0
      %2012 = vmatprep.mubr.bf16.mxu0 0
      %2013 = vmatmul.mubr.bf16.gmra.mrb[0].mxu0 %v1571
      %v2014 = vpop.f32.mrb[0].mxu0
      %v2015 = vadd.f32 %v1854, %v2014
      %v2016 = vpop.f32.mrb[0].mxu0
      %v2017 = vpop.f32.mrb[0].mxu0
      %v2018 = vadd.f32 %v1857, %v2017
      %v2019 = vpop.f32.mrb[0].mxu0
      %2020 = vmatprep.mubr.bf16.mxu0 0
      %2021 = vmatmul.mubr.bf16.gmra.mrb[0].mxu0 %v1574
      %v2022 = vpop.f32.mrb[0].mxu0
      %v2023 = vadd.f32 %v1862, %v2022
      %v2024 = vpop.f32.mrb[0].mxu0
      %v2025 = vpop.f32.mrb[0].mxu0
      %v2026 = vadd.f32 %v1865, %v2025
      %v2027 = vpop.f32.mrb[0].mxu0
      %2028 = vmatprep.mubr.bf16.mxu0 0
      %2029 = vmatmul.mubr.bf16.gmra.mrb[0].mxu0 %v1577
      %v2030 = vpop.f32.mrb[0].mxu0
      %v2031 = vadd.f32 %v1870, %v2030
      %v2032 = vpop.f32.mrb[0].mxu0
      %v2033 = vpop.f32.mrb[0].mxu0
      %v2034 = vadd.f32 %v1873, %v2033
      %v2035 = vpop.f32.mrb[0].mxu0
      %2036 = vmatprep.mubr.bf16.mxu0 0
      %2037 = vmatmul.mubr.bf16.gmra.mrb[0].mxu0 %v1580
      %v2038 = vpop.f32.mrb[0].mxu0
      %v2039 = vadd.f32 %v1878, %v2038
      %v2040 = vpop.f32.mrb[0].mxu0
      %v2041 = vpop.f32.mrb[0].mxu0
      %v2042 = vadd.f32 %v1881, %v2041
      %v2043 = vpop.f32.mrb[0].mxu0
      %2044 = vmatprep.mubr.bf16.mxu0 0
      %2045 = vmatmul.mubr.bf16.gmra.mrb[0].mxu0 %v1583
      %v2046 = vpop.f32.mrb[0].mxu0
      %v2047 = vadd.f32 %v1886, %v2046
      %v2048 = vpop.f32.mrb[0].mxu0
      %v2049 = vpop.f32.mrb[0].mxu0
      %v2050 = vadd.f32 %v1889, %v2049
      %v2051 = vpop.f32.mrb[0].mxu0
      %2052 = vmatprep.mubr.bf16.mxu0 0
      %2053 = vmatmul.mubr.bf16.gmra.mrb[0].mxu0 %v1586
      %v2054 = vpop.f32.mrb[0].mxu0
      %v2055 = vadd.f32 %v1894, %v2054
      %v2056 = vpop.f32.mrb[0].mxu0
      %v2057 = vpop.f32.mrb[0].mxu0
      %v2058 = vadd.f32 %v1897, %v2057
      %v2059 = vpop.f32.mrb[0].mxu0
      %2060 = vmatprep.mubr.bf16.mxu0 0
      %2061 = vmatmul.mubr.bf16.gmra.mrb[0].mxu0 %v1589
      %v2062 = vpop.f32.mrb[0].mxu0
      %v2063 = vadd.f32 %v1902, %v2062
      %v2064 = vpop.f32.mrb[0].mxu0
      %v2065 = vpop.f32.mrb[0].mxu0
      %v2066 = vadd.f32 %v1905, %v2065
      %v2067 = vpop.f32.mrb[0].mxu0
      %2068 = vmatprep.mubr.bf16.mxu0 0
      %2069 = vmatmul.mubr.bf16.gmra.mrb[0].mxu0 %v1592
      %v2070 = vpop.f32.mrb[0].mxu0
      %v2071 = vadd.f32 %v1910, %v2070
      %v2072 = vpop.f32.mrb[0].mxu0
      %v2073 = vpop.f32.mrb[0].mxu0
      %v2074 = vadd.f32 %v1913, %v2073
      %v2075 = vpop.f32.mrb[0].mxu0
      %2076 = vdwg.mxu0
      %2077 = vst.msk [vmem:[%s231] sm:$0xff] %vm1095, %v1951
      %2078 = vst.msk [vmem:[%s231 + $0x8] sm:$0xff] %vm1095, %v1954
      %2079 = vst.msk [vmem:[%s231 + $0x10] sm:$0xff] %vm1095, %v1959
      %2080 = vst.msk [vmem:[%s231 + $0x18] sm:$0xff] %vm1095, %v1962
      %2081 = vst.msk [vmem:[%s231 + $0x20] sm:$0xff] %vm1095, %v1967
      %2082 = vst.msk [vmem:[%s231 + $0x28] sm:$0xff] %vm1095, %v1970
      %2083 = vst.msk [vmem:[%s231 + $0x30] sm:$0xff] %vm1095, %v1975
      %2084 = vst.msk [vmem:[%s231 + $0x38] sm:$0xff] %vm1095, %v1978
      %2085 = vst.msk [vmem:[%s231 + $0x40] sm:$0xff] %vm1095, %v1983
      %2086 = vst.msk [vmem:[%s231 + $0x48] sm:$0xff] %vm1095, %v1986
      %2087 = vst.msk [vmem:[%s231 + $0x50] sm:$0xff] %vm1095, %v1991
      %2088 = vst.msk [vmem:[%s231 + $0x58] sm:$0xff] %vm1095, %v1994
      %2089 = vst.msk [vmem:[%s231 + $0x60] sm:$0xff] %vm1095, %v1999
      %2090 = vst.msk [vmem:[%s231 + $0x68] sm:$0xff] %vm1095, %v2002
      %2091 = vst.msk [vmem:[%s231 + $0x70] sm:$0xff] %vm1095, %v2007
      %2092 = vst.msk [vmem:[%s231 + $0x78] sm:$0xff] %vm1095, %v2010
      %2093 = vst.msk [vmem:[%s231 + $0x80] sm:$0xff] %vm1095, %v2015
      %2094 = vst.msk [vmem:[%s231 + $0x88] sm:$0xff] %vm1095, %v2018
      %2095 = vst.msk [vmem:[%s231 + $0x90] sm:$0xff] %vm1095, %v2023
      %2096 = vst.msk [vmem:[%s231 + $0x98] sm:$0xff] %vm1095, %v2026
      %2097 = vst.msk [vmem:[%s231 + $0xa0] sm:$0xff] %vm1095, %v2031
      %2098 = vst.msk [vmem:[%s231 + $0xa8] sm:$0xff] %vm1095, %v2034
      %2099 = vst.msk [vmem:[%s231 + $0xb0] sm:$0xff] %vm1095, %v2039
      %2100 = vst.msk [vmem:[%s231 + $0xb8] sm:$0xff] %vm1095, %v2042
      %2101 = vst.msk [vmem:[%s231 + $0xc0] sm:$0xff] %vm1095, %v2047
      %2102 = vst.msk [vmem:[%s231 + $0xc8] sm:$0xff] %vm1095, %v2050
      %2103 = vst.msk [vmem:[%s231 + $0xd0] sm:$0xff] %vm1095, %v2055
      %2104 = vst.msk [vmem:[%s231 + $0xd8] sm:$0xff] %vm1095, %v2058
      %2105 = vst.msk [vmem:[%s231 + $0xe0] sm:$0xff] %vm1095, %v2063
      %2106 = vst.msk [vmem:[%s231 + $0xe8] sm:$0xff] %vm1095, %v2066
      %2107 = vst.msk [vmem:[%s231 + $0xf0] sm:$0xff] %vm1095, %v2071
      %2108 = vst.msk [vmem:[%s231 + $0xf8] sm:$0xff] %vm1095, %v2074
      %v2109 = vsel %vm1095, %v1951, 0.0
      %v2110 = vsel %vm1095, %v1954, 0.0
      %v2111 = vadd.f32 %v2109, %v2110
      %v2112 = vsel %vm1095, %v1959, 0.0
      %v2113 = vadd.f32 %v2111, %v2112
      %v2114 = vsel %vm1095, %v1962, 0.0
      %v2115 = vadd.f32 %v2113, %v2114
      %v2116 = vsel %vm1095, %v1967, 0.0
      %v2117 = vadd.f32 %v2115, %v2116
      %v2118 = vsel %vm1095, %v1970, 0.0
      %v2119 = vadd.f32 %v2117, %v2118
      %v2120 = vsel %vm1095, %v1975, 0.0
      %v2121 = vadd.f32 %v2119, %v2120
      %v2122 = vsel %vm1095, %v1978, 0.0
      %v2123 = vadd.f32 %v2121, %v2122
      %v2124 = vsel %vm1095, %v1983, 0.0
      %v2125 = vadd.f32 %v2123, %v2124
      %v2126 = vsel %vm1095, %v1986, 0.0
      %v2127 = vadd.f32 %v2125, %v2126
      %v2128 = vsel %vm1095, %v1991, 0.0
      %v2129 = vadd.f32 %v2127, %v2128
      %v2130 = vsel %vm1095, %v1994, 0.0
      %v2131 = vadd.f32 %v2129, %v2130
      %v2132 = vsel %vm1095, %v1999, 0.0
      %v2133 = vadd.f32 %v2131, %v2132
      %v2134 = vsel %vm1095, %v2002, 0.0
      %v2135 = vadd.f32 %v2133, %v2134
      %v2136 = vsel %vm1095, %v2007, 0.0
      %v2137 = vadd.f32 %v2135, %v2136
      %v2138 = vsel %vm1095, %v2010, 0.0
      %v2139 = vadd.f32 %v2137, %v2138
      %v2140 = vsel %vm1095, %v2015, 0.0
      %v2141 = vadd.f32 %v2139, %v2140
      %v2142 = vsel %vm1095, %v2018, 0.0
      %v2143 = vadd.f32 %v2141, %v2142
      %v2144 = vsel %vm1095, %v2023, 0.0
      %v2145 = vadd.f32 %v2143, %v2144
      %v2146 = vsel %vm1095, %v2026, 0.0
      %v2147 = vadd.f32 %v2145, %v2146
      %v2148 = vsel %vm1095, %v2031, 0.0
      %v2149 = vadd.f32 %v2147, %v2148
      %v2150 = vsel %vm1095, %v2034, 0.0
      %v2151 = vadd.f32 %v2149, %v2150
      %v2152 = vsel %vm1095, %v2039, 0.0
      %v2153 = vadd.f32 %v2151, %v2152
      %v2154 = vsel %vm1095, %v2042, 0.0
      %v2155 = vadd.f32 %v2153, %v2154
      %v2156 = vsel %vm1095, %v2047, 0.0
      %v2157 = vadd.f32 %v2155, %v2156
      %v2158 = vsel %vm1095, %v2050, 0.0
      %v2159 = vadd.f32 %v2157, %v2158
      %v2160 = vsel %vm1095, %v2055, 0.0
      %v2161 = vadd.f32 %v2159, %v2160
      %v2162 = vsel %vm1095, %v2058, 0.0
      %v2163 = vadd.f32 %v2161, %v2162
      %v2164 = vsel %vm1095, %v2063, 0.0
      %v2165 = vadd.f32 %v2163, %v2164
      %v2166 = vsel %vm1095, %v2066, 0.0
      %v2167 = vadd.f32 %v2165, %v2166
      %v2168 = vsel %vm1095, %v2071, 0.0
      %v2169 = vadd.f32 %v2167, %v2168
      %v2170 = vsel %vm1095, %v2074, 0.0
      %v2171 = vadd.f32 %v2169, %v2170
      %v2172 = vrot.slane %v2171, 4
      %v2173 = vadd.f32 %v2171, %v2172
      %v2174 = vrot.slane %v2173, 2
      %v2175 = vadd.f32 %v2173, %v2174
      %v2176 = vrot.slane %v2175, 1
      %v2177 = vadd.f32 %v2175, %v2176
      %v2178 = vmul.f32 %v1951, %v1951
      %v2179 = vmul.f32 %v1954, %v1954
      %v2180 = vmul.f32 %v1959, %v1959
      %v2181 = vmul.f32 %v1962, %v1962
      %v2182 = vmul.f32 %v1967, %v1967
      %v2183 = vmul.f32 %v1970, %v1970
      %v2184 = vmul.f32 %v1975, %v1975
      %v2185 = vmul.f32 %v1978, %v1978
      %v2186 = vmul.f32 %v1983, %v1983
      %v2187 = vmul.f32 %v1986, %v1986
      %v2188 = vmul.f32 %v1991, %v1991
      %v2189 = vmul.f32 %v1994, %v1994
      %v2190 = vmul.f32 %v1999, %v1999
      %v2191 = vmul.f32 %v2002, %v2002
      %v2192 = vmul.f32 %v2007, %v2007
      %v2193 = vmul.f32 %v2010, %v2010
      %v2194 = vmul.f32 %v2015, %v2015
      %v2195 = vmul.f32 %v2018, %v2018
      %v2196 = vmul.f32 %v2023, %v2023
      %v2197 = vmul.f32 %v2026, %v2026
      %v2198 = vmul.f32 %v2031, %v2031
      %v2199 = vmul.f32 %v2034, %v2034
      %v2200 = vmul.f32 %v2039, %v2039
      %v2201 = vmul.f32 %v2042, %v2042
      %v2202 = vmul.f32 %v2047, %v2047
      %v2203 = vmul.f32 %v2050, %v2050
      %v2204 = vmul.f32 %v2055, %v2055
      %v2205 = vmul.f32 %v2058, %v2058
      %v2206 = vmul.f32 %v2063, %v2063
      %v2207 = vmul.f32 %v2066, %v2066
      %v2208 = vmul.f32 %v2071, %v2071
      %v2209 = vmul.f32 %v2074, %v2074
      %v2210 = vsel %vm1095, %v2178, 0.0
      %v2211 = vsel %vm1095, %v2179, 0.0
      %v2212 = vadd.f32 %v2210, %v2211
      %v2213 = vsel %vm1095, %v2180, 0.0
      %v2214 = vadd.f32 %v2212, %v2213
      %v2215 = vsel %vm1095, %v2181, 0.0
      %v2216 = vadd.f32 %v2214, %v2215
      %v2217 = vsel %vm1095, %v2182, 0.0
      %v2218 = vadd.f32 %v2216, %v2217
      %v2219 = vsel %vm1095, %v2183, 0.0
      %v2220 = vadd.f32 %v2218, %v2219
      %v2221 = vsel %vm1095, %v2184, 0.0
      %v2222 = vadd.f32 %v2220, %v2221
      %v2223 = vsel %vm1095, %v2185, 0.0
      %v2224 = vadd.f32 %v2222, %v2223
      %v2225 = vsel %vm1095, %v2186, 0.0
      %v2226 = vadd.f32 %v2224, %v2225
      %v2227 = vsel %vm1095, %v2187, 0.0
      %v2228 = vadd.f32 %v2226, %v2227
      %v2229 = vsel %vm1095, %v2188, 0.0
      %v2230 = vadd.f32 %v2228, %v2229
      %v2231 = vsel %vm1095, %v2189, 0.0
      %v2232 = vadd.f32 %v2230, %v2231
      %v2233 = vsel %vm1095, %v2190, 0.0
      %v2234 = vadd.f32 %v2232, %v2233
      %v2235 = vsel %vm1095, %v2191, 0.0
      %v2236 = vadd.f32 %v2234, %v2235
      %v2237 = vsel %vm1095, %v2192, 0.0
      %v2238 = vadd.f32 %v2236, %v2237
      %v2239 = vsel %vm1095, %v2193, 0.0
      %v2240 = vadd.f32 %v2238, %v2239
      %v2241 = vsel %vm1095, %v2194, 0.0
      %v2242 = vadd.f32 %v2240, %v2241
      %v2243 = vsel %vm1095, %v2195, 0.0
      %v2244 = vadd.f32 %v2242, %v2243
      %v2245 = vsel %vm1095, %v2196, 0.0
      %v2246 = vadd.f32 %v2244, %v2245
      %v2247 = vsel %vm1095, %v2197, 0.0
      %v2248 = vadd.f32 %v2246, %v2247
      %v2249 = vsel %vm1095, %v2198, 0.0
      %v2250 = vadd.f32 %v2248, %v2249
      %v2251 = vsel %vm1095, %v2199, 0.0
      %v2252 = vadd.f32 %v2250, %v2251
      %v2253 = vsel %vm1095, %v2200, 0.0
      %v2254 = vadd.f32 %v2252, %v2253
      %v2255 = vsel %vm1095, %v2201, 0.0
      %v2256 = vadd.f32 %v2254, %v2255
      %v2257 = vsel %vm1095, %v2202, 0.0
      %v2258 = vadd.f32 %v2256, %v2257
      %v2259 = vsel %vm1095, %v2203, 0.0
      %v2260 = vadd.f32 %v2258, %v2259
      %v2261 = vsel %vm1095, %v2204, 0.0
      %v2262 = vadd.f32 %v2260, %v2261
      %v2263 = vsel %vm1095, %v2205, 0.0
      %v2264 = vadd.f32 %v2262, %v2263
      %v2265 = vsel %vm1095, %v2206, 0.0
      %v2266 = vadd.f32 %v2264, %v2265
      %v2267 = vsel %vm1095, %v2207, 0.0
      %v2268 = vadd.f32 %v2266, %v2267
      %v2269 = vsel %vm1095, %v2208, 0.0
      %v2270 = vadd.f32 %v2268, %v2269
      %v2271 = vsel %vm1095, %v2209, 0.0
      %v2272 = vadd.f32 %v2270, %v2271
      %v2273 = vrot.slane %v2272, 4
      %v2274 = vadd.f32 %v2272, %v2273
      %v2275 = vrot.slane %v2274, 2
      %v2276 = vadd.f32 %v2274, %v2275
      %v2277 = vrot.slane %v2276, 1
      %v2278 = vadd.f32 %v2276, %v2277
      %v2279 = vsel %vm411, %v2177, %v2278
      %vm2280 = vcmask 517120
      %2281 = vst.msk [vmem:[%s235] sm:$0x3] %vm2280, %v2279
      %p2282 = scmp.lt.s32.totalorder %s17, 1
      %s2283 = scalar_select %p2282, %s17, 1
      %s2284 = smul.addr %s2283, 32
      %s2285 = smul.addr %s2284, 8
      %s2286 = scalar_lea.vmem %s4, %s2285
      %p2287 = scmp.lt.s32.totalorder %s17, 1
      %s2288 = scalar_select %p2287, %s17, 1
      %s2289 = smul.addr %s2288, 2
      %s2290 = scalar_lea.vmem %s5, %s2289
      // Predicated region
      $region37: #{residual_block.4} parent=35 // pred_check
        %p2291 = pneg %p124
      $region38: #{residual_block.4} parent=35 // pred_check_branch
        %2293 = sbr.rel (%p2291) target = $region40
      $region39: #{residual_block.4} parent=35 // pred_region
        _
      $region40: #{residual_block.4} parent=35 // pred_fallthru
        _
      // Predicated region
      $region41: #{residual_block.4} parent=35 // pred_check
        %p2294 = pneg %p150
      $region42: #{residual_block.4} parent=35 // pred_check_branch
        %2296 = sbr.rel (%p2294) target = $region44
      $region43: #{residual_block.4} parent=35 // pred_region
        _
      $region44: #{residual_block.4} parent=35 // pred_fallthru
        _
    $region36: #{residual_block.4} parent=5 // pred_fallthru
      _
    %p2297 = scmp.le.s32.totalorder 2, %s12
    // Predicated region
    $region45: #{residual_block.4} parent=5 // pred_check
      %p2298 = pneg %p2297
    $region46: #{residual_block.4} parent=5 // pred_check_branch
      %2300 = sbr.rel (%p2298) target = $region48
    $region47: #{residual_block.4} parent=5 // pred_region
      %s2301 = ssub.s32 %s12, 2
      // Predicated region
      $region49: #{residual_block.4} parent=47 // pred_check
        %p2302 = pneg %p130
      $region50: #{residual_block.4} parent=47 // pred_check_branch
        %2304 = sbr.rel (%p2302) target = $region52
      $region51: #{residual_block.4} parent=47 // pred_region
        %p2305 = scmp.lt.s32.totalorder %s18, 1
        %s2306 = scalar_select %p2305, %s18, 1
        %s2307 = smul.addr %s2306, 32
        %s2308 = smul.addr %s2307, 8
        %s2309 = scalar_lea.vmem %s4, %s2308
      $region52: #{residual_block.4} parent=47 // pred_fallthru
        _
      // Predicated region
      $region53: #{residual_block.4} parent=47 // pred_check
        %p2310 = pneg %p156
      $region54: #{residual_block.4} parent=47 // pred_check_branch
        %2312 = sbr.rel (%p2310) target = $region56
      $region55: #{residual_block.4} parent=47 // pred_region
        %p2313 = scmp.lt.s32.totalorder %s18, 1
        %s2314 = scalar_select %p2313, %s18, 1
        %s2315 = smul.addr %s2314, 2
        %s2316 = scalar_lea.vmem %s5, %s2315
      $region56: #{residual_block.4} parent=47 // pred_fallthru
        _
    $region48: #{residual_block.4} parent=5 // pred_fallthru
      _
  $region6: #{residual_block.4} parent=0 // loop_footer
    %s16 = sadd.s32 1, %s12
  $region7: #{residual_block.4} parent=0 // loop_footer_branch
    %11 = sbr.rel target = $region3
  $region8: #{residual_block.4} parent=0 // loop_exit
    _

</llo_original>
